<compile_context>
chip_gen: v7x
topology: tpu7x:2x2x1
jax: 0.10.0
libtpu: 0.0.40
codegen_flags: <defaults>
</compile_context>

<pallas_src>
import numpy as np
import jax
import jax.numpy as jnp
from jax import lax
from jax.experimental import pallas as pl
from jax.experimental.pallas import tpu as pltpu

_CHANNELS = [3, 16, 32, 64, 128, 256]
_TILE = 32                      # 5 stride-2 convs: one 32x32 tile -> 1 output pixel
_LEVELS = 4                     # layer-1 gives a 16x16 grid per tile (4 base-4 digits)
_M1 = (_TILE // 2) ** 2         # 256 layer-1 patches per tile
_DEFAULT_BLOCK_TILES = 128      # tiles processed per grid step (lane-dense for all layers)


def _rev_base4_index(levels):
    """idx[r] = h * 2^levels + w, where r's base-4 digits (finest digit MOST
    significant) are d_k = 2*h_k + w_k.  With this row ordering every 2x2
    regrouping is a contiguous 4-way split."""
    n = 1 << levels
    idx = np.zeros(n * n, dtype=np.int32)
    for r in range(n * n):
        h = 0
        w = 0
        for k in range(levels):
            d = (r >> (2 * (levels - 1 - k))) & 3
            h |= (d >> 1) << k
            w |= (d & 1) << k
        idx[r] = h * n + w
    return idx


_REV_IDX_NP = _rev_base4_index(_LEVELS)          # (256,)


# ------------------------------ Pallas kernel ------------------------------ #
def _conv_block(w_ref, b_ref, x, dst_ref):
    """One Conv2d(k=2,s=2)+ReLU as a single K-packed MXU matmul.

    w_ref: (Cout, 4*Cin)   b_ref: (Cout, 1)   x: (4*Cin, N) value.
    Result (Cout, N) is written into dst_ref (4*Cout, N//4) in the K-packed
    layout the NEXT layer consumes (lane block j -> sublane block j), or
    returned when dst_ref is None (final layer)."""
    t = jnp.maximum(
        jnp.dot(w_ref[...], x, preferred_element_type=jnp.float32) + b_ref[...],
        0.0)
    if dst_ref is None:
        return t
    cout, n = t.shape
    m = n // 4
    for j in range(4):                                   # static 4-way repack
        dst_ref[j * cout:(j + 1) * cout, :] = t[:, j * m:(j + 1) * m]
    return None


def _encoder_kernel(p_ref, w1, b1, w2, b2, w3, b3, w4, b4, w5, b5,
                    o_ref, s1, s2, s3, s4):
    """One grid step = B 32x32 tiles -> B 256-channel output pixels."""
    _conv_block(w1, b1, p_ref[0], s1)        # (16, B*256) -> s1 (64,  B*64)
    _conv_block(w2, b2, s1[...], s2)         # (32, B*64)  -> s2 (128, B*16)
    _conv_block(w3, b3, s2[...], s3)         # (64, B*16)  -> s3 (256, B*4)
    _conv_block(w4, b4, s3[...], s4)         # (128, B*4)  -> s4 (512, B)
    o_ref[0] = _conv_block(w5, b5, s4[...], None)        # (256, B) lane-dense store


# ------------------------------ host wrapper -------------------------------- #
def _layer1_patches_t(x_nchw, block_tiles):
    """(N,3,H,W) -> (G, 12, 256*B): transposed per-group patch matrices.
    Sublanes = (kh,kw,ci) channel axis (12); lanes = (rev-base-4 patch idx,
    tile-within-group), tile least significant so every later 2x2 regroup is
    4 contiguous lane blocks."""
    N, C, H, W = x_nchw.shape
    Ht, Wt = H // _TILE, W // _TILE
    T = N * Ht * Wt

    x = jnp.transpose(x_nchw, (0, 2, 3, 1))                           # NHWC
    x = x.reshape(N, Ht, _TILE, Wt, _TILE, C).transpose(0, 1, 3, 2, 4, 5)
    x = x.reshape(N, Ht, Wt, _TILE // 2, 2, _TILE // 2, 2, C)
    x = x.transpose(0, 1, 2, 3, 5, 4, 6, 7)                           # ho,wo,kh,kw,c
    x = x.reshape(T, _M1, 4 * C)
    x = jnp.take(x, jnp.asarray(_REV_IDX_NP), axis=1)                 # rev-base-4 rows

    B = min(block_tiles, T)
    G = -(-T // B)
    T_pad = G * B
    if T_pad != T:
        x = jnp.pad(x, ((0, T_pad - T), (0, 0), (0, 0)))
    x = x.reshape(G, B, _M1, 4 * C).transpose(0, 3, 2, 1)             # (G,12,256,B)
    return x.reshape(G, 4 * C, _M1 * B), T, B, G


def encoder_forward(params, x_nchw, block_tiles=_DEFAULT_BLOCK_TILES):
    """x_nchw: (N, 3, H, W) float32 with H, W multiples of 32."""
    N, C, H, W = x_nchw.shape
    if C != 3 or H % _TILE or W % _TILE:
        # TODO(synk): PyTorch floors odd spatial sizes at each conv; the fused
        # kernel only supports H, W that are multiples of 32.
        raise ValueError("expected input of shape (N, 3, 32*k, 32*m)")
    Ht, Wt = H // _TILE, W // _TILE

    p, T, B, G = _layer1_patches_t(x_nchw, block_tiles)

    c = _CHANNELS
    kargs = [p]
    in_specs = [pl.BlockSpec((1, 4 * c[0], _M1 * B), lambda g: (g, 0, 0))]
    for (w, b), cin, cout in zip(params, c[:-1], c[1:]):
        # K-packed transposed weights: (Cout, 4*Cin), col = (kh*2+kw)*Cin + ci
        kargs.append(w.reshape(4 * cin, cout).T)
        kargs.append(b.reshape(cout, 1))
        in_specs.append(pl.BlockSpec((cout, 4 * cin), lambda g: (0, 0)))
        in_specs.append(pl.BlockSpec((cout, 1), lambda g: (0, 0)))

    out = pl.pallas_call(
        _encoder_kernel,
        out_shape=jax.ShapeDtypeStruct((G, c[5], B), jnp.float32),
        grid=(G,),
        in_specs=in_specs,
        out_specs=pl.BlockSpec((1, c[5], B), lambda g: (g, 0, 0)),
        scratch_shapes=[
            pltpu.VMEM((4 * c[1], B * _M1 // 4), jnp.float32),    # (64,  B*64)
            pltpu.VMEM((4 * c[2], B * _M1 // 16), jnp.float32),   # (128, B*16)
            pltpu.VMEM((4 * c[3], B * _M1 // 64), jnp.float32),   # (256, B*4)
            pltpu.VMEM((4 * c[4], B), jnp.float32),               # (512, B)
        ],
        compiler_params=pltpu.CompilerParams(
            dimension_semantics=("parallel",),
            vmem_limit_bytes=32 * 1024 * 1024),
    )(*kargs)

    out = jnp.transpose(out, (0, 2, 1)).reshape(G * B, c[5])[:T]   # (T, 256)
    out = out.reshape(N, Ht, Wt, c[5])            # NHWC of the final conv
    out = jnp.transpose(out, (0, 3, 1, 2))        # -> NCHW
    return out.reshape(N, -1)                     # PyTorch Flatten order


# --------------------------- params & reference ----------------------------- #
def init_params(key):
    """Deterministic weights; conv weights stored HWIO (2, 2, Cin, Cout)."""
    params = []
    for i in range(5):
        cin, cout = _CHANNELS[i], _CHANNELS[i + 1]
        key, wk, bk = jax.random.split(key, 3)
        bound = 1.0 / jnp.sqrt(cin * 2 * 2)
        w = jax.random.uniform(wk, (2, 2, cin, cout), jnp.float32, -bound, bound)
        b = jax.random.uniform(bk, (cout,), jnp.float32, -bound, bound)
        params.append((w, b))
    return params


def encoder_forward_ref(params, x_nchw):
    """Pure-JAX reference using lax.conv (correctness check)."""
    x = x_nchw
    for w, b in params:
        w_oihw = jnp.transpose(w, (3, 2, 0, 1))
        x = lax.conv_general_dilated(
            x, w_oihw, window_strides=(2, 2), padding="VALID",
            dimension_numbers=("NCHW", "OIHW", "NCHW"))
        x = jnp.maximum(x + b[None, :, None, None], 0.0)
    return x.reshape(x.shape[0], -1)


# ---------------------------------- main ------------------------------------ #
if __name__ == "__main__":
    key = jax.random.PRNGKey(0)
    pkey, xkey = jax.random.split(key)
    params = init_params(pkey)

    # 5 stride-2 blocks => spatial must be a multiple of 32; use 64x64 -> 8 tiles
    x = jax.random.normal(xkey, (2, 3, 64, 64), jnp.float32)

    fwd = jax.jit(encoder_forward)
    out = jax.block_until_ready(fwd(params, x))
    assert out.shape == (2, 256 * 2 * 2), out.shape

    ref = jax.block_until_ready(encoder_forward_ref(params, x))
    assert jnp.allclose(out, ref, atol=1e-4, rtol=1e-4), float(
        jnp.max(jnp.abs(out - ref)))

    print("KERNEL_OK")
</pallas_src>

<mosaic_0001>
module attributes {stable_mosaic.version = 11 : i64} {
  func.func @_encoder_kernel(%arg0: i32, %arg1: memref<1x12x2048xf32, #tpu.memory_space<vmem>>, %arg2: memref<16x12xf32, #tpu.memory_space<vmem>>, %arg3: memref<16x1xf32, #tpu.memory_space<vmem>>, %arg4: memref<32x64xf32, #tpu.memory_space<vmem>>, %arg5: memref<32x1xf32, #tpu.memory_space<vmem>>, %arg6: memref<64x128xf32, #tpu.memory_space<vmem>>, %arg7: memref<64x1xf32, #tpu.memory_space<vmem>>, %arg8: memref<128x256xf32, #tpu.memory_space<vmem>>, %arg9: memref<128x1xf32, #tpu.memory_space<vmem>>, %arg10: memref<256x512xf32, #tpu.memory_space<vmem>>, %arg11: memref<256x1xf32, #tpu.memory_space<vmem>>, %arg12: memref<1x256x8xf32, #tpu.memory_space<vmem>>, %arg13: memref<64x512xf32, #tpu.memory_space<vmem>>, %arg14: memref<128x128xf32, #tpu.memory_space<vmem>>, %arg15: memref<256x32xf32, #tpu.memory_space<vmem>>, %arg16: memref<512x8xf32, #tpu.memory_space<vmem>>) attributes {dimension_semantics = [#tpu.dimension_semantics<parallel>], iteration_bounds = array<i64: 1>, scalar_prefetch = 0 : i64, scratch_operands = 4 : i64, tpu.core_type = #tpu.core_type<tc>, window_params = [{transform_indices = @transform_0, window_bounds = array<i64: 1, 12, 2048>}, {pipeline_mode = #tpu.pipeline_mode<synchronous>, transform_indices = @transform_1, window_bounds = array<i64: 16, 12>}, {pipeline_mode = #tpu.pipeline_mode<synchronous>, transform_indices = @transform_2, window_bounds = array<i64: 16, 1>}, {pipeline_mode = #tpu.pipeline_mode<synchronous>, transform_indices = @transform_3, window_bounds = array<i64: 32, 64>}, {pipeline_mode = #tpu.pipeline_mode<synchronous>, transform_indices = @transform_4, window_bounds = array<i64: 32, 1>}, {pipeline_mode = #tpu.pipeline_mode<synchronous>, transform_indices = @transform_5, window_bounds = array<i64: 64, 128>}, {pipeline_mode = #tpu.pipeline_mode<synchronous>, transform_indices = @transform_6, window_bounds = array<i64: 64, 1>}, {pipeline_mode = #tpu.pipeline_mode<synchronous>, transform_indices = @transform_7, window_bounds = array<i64: 128, 256>}, {pipeline_mode = #tpu.pipeline_mode<synchronous>, transform_indices = @transform_8, window_bounds = array<i64: 128, 1>}, {pipeline_mode = #tpu.pipeline_mode<synchronous>, transform_indices = @transform_9, window_bounds = array<i64: 256, 512>}, {pipeline_mode = #tpu.pipeline_mode<synchronous>, transform_indices = @transform_10, window_bounds = array<i64: 256, 1>}, {transform_indices = @transform_11, window_bounds = array<i64: 1, 256, 8>}]} {
    %c0 = arith.constant 0 : index
    %c0_0 = arith.constant 0 : index
    %c0_1 = arith.constant 0 : index
    %0 = vector.load %arg1[%c0, %c0_0, %c0_1] : memref<1x12x2048xf32, #tpu.memory_space<vmem>>, vector<1x12x2048xf32>
    %1 = vector.shape_cast %0 : vector<1x12x2048xf32> to vector<12x2048xf32>
    %c0_2 = arith.constant 0 : index
    %c0_3 = arith.constant 0 : index
    %2 = vector.load %arg2[%c0_2, %c0_3] : memref<16x12xf32, #tpu.memory_space<vmem>>, vector<16x12xf32>
    %cst = arith.constant dense<0.000000e+00> : vector<16x2048xf32>
    %3 = tpu.matmul %2, %1, %cst {dimension_numbers = #tpu.dot_dimension_numbers<[1], [0], [0], [1], [0, 0, 1, 1], [], []>} : vector<16x12xf32>, vector<12x2048xf32>, vector<16x2048xf32> -> vector<16x2048xf32>
    %c0_4 = arith.constant 0 : index
    %c0_5 = arith.constant 0 : index
    %4 = vector.load %arg3[%c0_4, %c0_5] : memref<16x1xf32, #tpu.memory_space<vmem>>, vector<16x1xf32>
    %5 = vector.broadcast %4 : vector<16x1xf32> to vector<16x2048xf32>
    %6 = arith.addf %3, %5 : vector<16x2048xf32>
    %cst_6 = arith.constant 0.000000e+00 : f32
    %7 = vector.broadcast %cst_6 : f32 to vector<16x2048xf32>
    %8 = arith.maximumf %6, %7 : vector<16x2048xf32>
    %9 = vector.extract_strided_slice %8 {offsets = [0, 0], sizes = [16, 512], strides = [1, 1]} : vector<16x2048xf32> to vector<16x512xf32>
    %c0_7 = arith.constant 0 : index
    %c0_8 = arith.constant 0 : index
    %10 = vector.load %arg13[%c0_7, %c0_8] : memref<64x512xf32, #tpu.memory_space<vmem>>, vector<16x512xf32>
    tpu.vector_store %arg13[%c0_7, %c0_8], %9 {strides = array<i32>} : memref<64x512xf32, #tpu.memory_space<vmem>>, vector<16x512xf32>,
    %11 = vector.extract_strided_slice %8 {offsets = [0, 512], sizes = [16, 512], strides = [1, 1]} : vector<16x2048xf32> to vector<16x512xf32>
    %c16 = arith.constant 16 : index
    %c0_9 = arith.constant 0 : index
    %12 = vector.load %arg13[%c16, %c0_9] : memref<64x512xf32, #tpu.memory_space<vmem>>, vector<16x512xf32>
    tpu.vector_store %arg13[%c16, %c0_9], %11 {strides = array<i32>} : memref<64x512xf32, #tpu.memory_space<vmem>>, vector<16x512xf32>,
    %13 = vector.extract_strided_slice %8 {offsets = [0, 1024], sizes = [16, 512], strides = [1, 1]} : vector<16x2048xf32> to vector<16x512xf32>
    %c32 = arith.constant 32 : index
    %c0_10 = arith.constant 0 : index
    %14 = vector.load %arg13[%c32, %c0_10] : memref<64x512xf32, #tpu.memory_space<vmem>>, vector<16x512xf32>
    tpu.vector_store %arg13[%c32, %c0_10], %13 {strides = array<i32>} : memref<64x512xf32, #tpu.memory_space<vmem>>, vector<16x512xf32>,
    %15 = vector.extract_strided_slice %8 {offsets = [0, 1536], sizes = [16, 512], strides = [1, 1]} : vector<16x2048xf32> to vector<16x512xf32>
    %c48 = arith.constant 48 : index
    %c0_11 = arith.constant 0 : index
    %16 = vector.load %arg13[%c48, %c0_11] : memref<64x512xf32, #tpu.memory_space<vmem>>, vector<16x512xf32>
    tpu.vector_store %arg13[%c48, %c0_11], %15 {strides = array<i32>} : memref<64x512xf32, #tpu.memory_space<vmem>>, vector<16x512xf32>,
    %c0_12 = arith.constant 0 : index
    %c0_13 = arith.constant 0 : index
    %17 = vector.load %arg13[%c0_12, %c0_13] : memref<64x512xf32, #tpu.memory_space<vmem>>, vector<64x512xf32>
    %c0_14 = arith.constant 0 : index
    %c0_15 = arith.constant 0 : index
    %18 = vector.load %arg4[%c0_14, %c0_15] : memref<32x64xf32, #tpu.memory_space<vmem>>, vector<32x64xf32>
    %cst_16 = arith.constant dense<0.000000e+00> : vector<32x512xf32>
    %19 = tpu.matmul %18, %17, %cst_16 {dimension_numbers = #tpu.dot_dimension_numbers<[1], [0], [0], [1], [0, 0, 1, 1], [], []>} : vector<32x64xf32>, vector<64x512xf32>, vector<32x512xf32> -> vector<32x512xf32>
    %c0_17 = arith.constant 0 : index
    %c0_18 = arith.constant 0 : index
    %20 = vector.load %arg5[%c0_17, %c0_18] : memref<32x1xf32, #tpu.memory_space<vmem>>, vector<32x1xf32>
    %21 = vector.broadcast %20 : vector<32x1xf32> to vector<32x512xf32>
    %22 = arith.addf %19, %21 : vector<32x512xf32>
    %cst_19 = arith.constant 0.000000e+00 : f32
    %23 = vector.broadcast %cst_19 : f32 to vector<32x512xf32>
    %24 = arith.maximumf %22, %23 : vector<32x512xf32>
    %25 = vector.extract_strided_slice %24 {offsets = [0, 0], sizes = [32, 128], strides = [1, 1]} : vector<32x512xf32> to vector<32x128xf32>
    %c0_20 = arith.constant 0 : index
    %c0_21 = arith.constant 0 : index
    %26 = vector.load %arg14[%c0_20, %c0_21] : memref<128x128xf32, #tpu.memory_space<vmem>>, vector<32x128xf32>
    tpu.vector_store %arg14[%c0_20, %c0_21], %25 {strides = array<i32>} : memref<128x128xf32, #tpu.memory_space<vmem>>, vector<32x128xf32>,
    %27 = vector.extract_strided_slice %24 {offsets = [0, 128], sizes = [32, 128], strides = [1, 1]} : vector<32x512xf32> to vector<32x128xf32>
    %c32_22 = arith.constant 32 : index
    %c0_23 = arith.constant 0 : index
    %28 = vector.load %arg14[%c32_22, %c0_23] : memref<128x128xf32, #tpu.memory_space<vmem>>, vector<32x128xf32>
    tpu.vector_store %arg14[%c32_22, %c0_23], %27 {strides = array<i32>} : memref<128x128xf32, #tpu.memory_space<vmem>>, vector<32x128xf32>,
    %29 = vector.extract_strided_slice %24 {offsets = [0, 256], sizes = [32, 128], strides = [1, 1]} : vector<32x512xf32> to vector<32x128xf32>
    %c64 = arith.constant 64 : index
    %c0_24 = arith.constant 0 : index
    %30 = vector.load %arg14[%c64, %c0_24] : memref<128x128xf32, #tpu.memory_space<vmem>>, vector<32x128xf32>
    tpu.vector_store %arg14[%c64, %c0_24], %29 {strides = array<i32>} : memref<128x128xf32, #tpu.memory_space<vmem>>, vector<32x128xf32>,
    %31 = vector.extract_strided_slice %24 {offsets = [0, 384], sizes = [32, 128], strides = [1, 1]} : vector<32x512xf32> to vector<32x128xf32>
    %c96 = arith.constant 96 : index
    %c0_25 = arith.constant 0 : index
    %32 = vector.load %arg14[%c96, %c0_25] : memref<128x128xf32, #tpu.memory_space<vmem>>, vector<32x128xf32>
    tpu.vector_store %arg14[%c96, %c0_25], %31 {strides = array<i32>} : memref<128x128xf32, #tpu.memory_space<vmem>>, vector<32x128xf32>,
    %c0_26 = arith.constant 0 : index
    %c0_27 = arith.constant 0 : index
    %33 = vector.load %arg14[%c0_26, %c0_27] : memref<128x128xf32, #tpu.memory_space<vmem>>, vector<128x128xf32>
    %c0_28 = arith.constant 0 : index
    %c0_29 = arith.constant 0 : index
    %34 = vector.load %arg6[%c0_28, %c0_29] : memref<64x128xf32, #tpu.memory_space<vmem>>, vector<64x128xf32>
    %cst_30 = arith.constant dense<0.000000e+00> : vector<64x128xf32>
    %35 = tpu.matmul %34, %33, %cst_30 {dimension_numbers = #tpu.dot_dimension_numbers<[1], [0], [0], [1], [0, 0, 1, 1], [], []>} : vector<64x128xf32>, vector<128x128xf32>, vector<64x128xf32> -> vector<64x128xf32>
    %c0_31 = arith.constant 0 : index
    %c0_32 = arith.constant 0 : index
    %36 = vector.load %arg7[%c0_31, %c0_32] : memref<64x1xf32, #tpu.memory_space<vmem>>, vector<64x1xf32>
    %37 = vector.broadcast %36 : vector<64x1xf32> to vector<64x128xf32>
    %38 = arith.addf %35, %37 : vector<64x128xf32>
    %cst_33 = arith.constant 0.000000e+00 : f32
    %39 = vector.broadcast %cst_33 : f32 to vector<64x128xf32>
    %40 = arith.maximumf %38, %39 : vector<64x128xf32>
    %41 = vector.extract_strided_slice %40 {offsets = [0, 0], sizes = [64, 32], strides = [1, 1]} : vector<64x128xf32> to vector<64x32xf32>
    %c0_34 = arith.constant 0 : index
    %c0_35 = arith.constant 0 : index
    %42 = vector.load %arg15[%c0_34, %c0_35] : memref<256x32xf32, #tpu.memory_space<vmem>>, vector<64x32xf32>
    tpu.vector_store %arg15[%c0_34, %c0_35], %41 {strides = array<i32>} : memref<256x32xf32, #tpu.memory_space<vmem>>, vector<64x32xf32>,
    %43 = vector.extract_strided_slice %40 {offsets = [0, 32], sizes = [64, 32], strides = [1, 1]} : vector<64x128xf32> to vector<64x32xf32>
    %c64_36 = arith.constant 64 : index
    %c0_37 = arith.constant 0 : index
    %44 = vector.load %arg15[%c64_36, %c0_37] : memref<256x32xf32, #tpu.memory_space<vmem>>, vector<64x32xf32>
    tpu.vector_store %arg15[%c64_36, %c0_37], %43 {strides = array<i32>} : memref<256x32xf32, #tpu.memory_space<vmem>>, vector<64x32xf32>,
    %45 = vector.extract_strided_slice %40 {offsets = [0, 64], sizes = [64, 32], strides = [1, 1]} : vector<64x128xf32> to vector<64x32xf32>
    %c128 = arith.constant 128 : index
    %c0_38 = arith.constant 0 : index
    %46 = vector.load %arg15[%c128, %c0_38] : memref<256x32xf32, #tpu.memory_space<vmem>>, vector<64x32xf32>
    tpu.vector_store %arg15[%c128, %c0_38], %45 {strides = array<i32>} : memref<256x32xf32, #tpu.memory_space<vmem>>, vector<64x32xf32>,
    %47 = vector.extract_strided_slice %40 {offsets = [0, 96], sizes = [64, 32], strides = [1, 1]} : vector<64x128xf32> to vector<64x32xf32>
    %c192 = arith.constant 192 : index
    %c0_39 = arith.constant 0 : index
    %48 = vector.load %arg15[%c192, %c0_39] : memref<256x32xf32, #tpu.memory_space<vmem>>, vector<64x32xf32>
    tpu.vector_store %arg15[%c192, %c0_39], %47 {strides = array<i32>} : memref<256x32xf32, #tpu.memory_space<vmem>>, vector<64x32xf32>,
    %c0_40 = arith.constant 0 : index
    %c0_41 = arith.constant 0 : index
    %49 = vector.load %arg15[%c0_40, %c0_41] : memref<256x32xf32, #tpu.memory_space<vmem>>, vector<256x32xf32>
    %c0_42 = arith.constant 0 : index
    %c0_43 = arith.constant 0 : index
    %50 = vector.load %arg8[%c0_42, %c0_43] : memref<128x256xf32, #tpu.memory_space<vmem>>, vector<128x256xf32>
    %cst_44 = arith.constant dense<0.000000e+00> : vector<128x32xf32>
    %51 = tpu.matmul %50, %49, %cst_44 {dimension_numbers = #tpu.dot_dimension_numbers<[1], [0], [0], [1], [0, 0, 1, 1], [], []>} : vector<128x256xf32>, vector<256x32xf32>, vector<128x32xf32> -> vector<128x32xf32>
    %c0_45 = arith.constant 0 : index
    %c0_46 = arith.constant 0 : index
    %52 = vector.load %arg9[%c0_45, %c0_46] : memref<128x1xf32, #tpu.memory_space<vmem>>, vector<128x1xf32>
    %53 = vector.broadcast %52 : vector<128x1xf32> to vector<128x32xf32>
    %54 = arith.addf %51, %53 : vector<128x32xf32>
    %cst_47 = arith.constant 0.000000e+00 : f32
    %55 = vector.broadcast %cst_47 : f32 to vector<128x32xf32>
    %56 = arith.maximumf %54, %55 : vector<128x32xf32>
    %57 = vector.extract_strided_slice %56 {offsets = [0, 0], sizes = [128, 8], strides = [1, 1]} : vector<128x32xf32> to vector<128x8xf32>
    %c0_48 = arith.constant 0 : index
    %c0_49 = arith.constant 0 : index
    %58 = vector.load %arg16[%c0_48, %c0_49] : memref<512x8xf32, #tpu.memory_space<vmem>>, vector<128x8xf32>
    tpu.vector_store %arg16[%c0_48, %c0_49], %57 {strides = array<i32>} : memref<512x8xf32, #tpu.memory_space<vmem>>, vector<128x8xf32>,
    %59 = vector.extract_strided_slice %56 {offsets = [0, 8], sizes = [128, 8], strides = [1, 1]} : vector<128x32xf32> to vector<128x8xf32>
    %c128_50 = arith.constant 128 : index
    %c0_51 = arith.constant 0 : index
    %60 = vector.load %arg16[%c128_50, %c0_51] : memref<512x8xf32, #tpu.memory_space<vmem>>, vector<128x8xf32>
    tpu.vector_store %arg16[%c128_50, %c0_51], %59 {strides = array<i32>} : memref<512x8xf32, #tpu.memory_space<vmem>>, vector<128x8xf32>,
    %61 = vector.extract_strided_slice %56 {offsets = [0, 16], sizes = [128, 8], strides = [1, 1]} : vector<128x32xf32> to vector<128x8xf32>
    %c256 = arith.constant 256 : index
    %c0_52 = arith.constant 0 : index
    %62 = vector.load %arg16[%c256, %c0_52] : memref<512x8xf32, #tpu.memory_space<vmem>>, vector<128x8xf32>
    tpu.vector_store %arg16[%c256, %c0_52], %61 {strides = array<i32>} : memref<512x8xf32, #tpu.memory_space<vmem>>, vector<128x8xf32>,
    %63 = vector.extract_strided_slice %56 {offsets = [0, 24], sizes = [128, 8], strides = [1, 1]} : vector<128x32xf32> to vector<128x8xf32>
    %c384 = arith.constant 384 : index
    %c0_53 = arith.constant 0 : index
    %64 = vector.load %arg16[%c384, %c0_53] : memref<512x8xf32, #tpu.memory_space<vmem>>, vector<128x8xf32>
    tpu.vector_store %arg16[%c384, %c0_53], %63 {strides = array<i32>} : memref<512x8xf32, #tpu.memory_space<vmem>>, vector<128x8xf32>,
    %c0_54 = arith.constant 0 : index
    %c0_55 = arith.constant 0 : index
    %65 = vector.load %arg16[%c0_54, %c0_55] : memref<512x8xf32, #tpu.memory_space<vmem>>, vector<512x8xf32>
    %c0_56 = arith.constant 0 : index
    %c0_57 = arith.constant 0 : index
    %66 = vector.load %arg10[%c0_56, %c0_57] : memref<256x512xf32, #tpu.memory_space<vmem>>, vector<256x512xf32>
    %cst_58 = arith.constant dense<0.000000e+00> : vector<256x8xf32>
    %67 = tpu.matmul %66, %65, %cst_58 {dimension_numbers = #tpu.dot_dimension_numbers<[1], [0], [0], [1], [0, 0, 1, 1], [], []>} : vector<256x512xf32>, vector<512x8xf32>, vector<256x8xf32> -> vector<256x8xf32>
    %c0_59 = arith.constant 0 : index
    %c0_60 = arith.constant 0 : index
    %68 = vector.load %arg11[%c0_59, %c0_60] : memref<256x1xf32, #tpu.memory_space<vmem>>, vector<256x1xf32>
    %69 = vector.broadcast %68 : vector<256x1xf32> to vector<256x8xf32>
    %70 = arith.addf %67, %69 : vector<256x8xf32>
    %cst_61 = arith.constant 0.000000e+00 : f32
    %71 = vector.broadcast %cst_61 : f32 to vector<256x8xf32>
    %72 = arith.maximumf %70, %71 : vector<256x8xf32>
    %c0_62 = arith.constant 0 : index
    %c0_63 = arith.constant 0 : index
    %c0_64 = arith.constant 0 : index
    %73 = vector.load %arg12[%c0_62, %c0_63, %c0_64] : memref<1x256x8xf32, #tpu.memory_space<vmem>>, vector<1x256x8xf32>
    %74 = vector.shape_cast %73 : vector<1x256x8xf32> to vector<256x8xf32>
    %75 = vector.shape_cast %72 : vector<256x8xf32> to vector<1x256x8xf32>
    tpu.vector_store %arg12[%c0_62, %c0_63, %c0_64], %75 {strides = array<i32>} : memref<1x256x8xf32, #tpu.memory_space<vmem>>, vector<1x256x8xf32>,
    return
  }
  func.func @transform_0(%arg0: i32) -> (i32, i32, i32) {
    %c0_i32 = arith.constant 0 : i32
    %c0_i32_0 = arith.constant 0 : i32
    %c0_i32_1 = arith.constant 0 : i32
    return %arg0, %c0_i32, %c0_i32_0 : i32, i32, i32
  }
  func.func @transform_1(%arg0: i32) -> (i32, i32) {
    %c0_i32 = arith.constant 0 : i32
    %c0_i32_0 = arith.constant 0 : i32
    %c0_i32_1 = arith.constant 0 : i32
    return %c0_i32, %c0_i32_0 : i32, i32
  }
  func.func @transform_2(%arg0: i32) -> (i32, i32) {
    %c0_i32 = arith.constant 0 : i32
    %c0_i32_0 = arith.constant 0 : i32
    %c0_i32_1 = arith.constant 0 : i32
    return %c0_i32, %c0_i32_0 : i32, i32
  }
  func.func @transform_3(%arg0: i32) -> (i32, i32) {
    %c0_i32 = arith.constant 0 : i32
    %c0_i32_0 = arith.constant 0 : i32
    %c0_i32_1 = arith.constant 0 : i32
    return %c0_i32, %c0_i32_0 : i32, i32
  }
  func.func @transform_4(%arg0: i32) -> (i32, i32) {
    %c0_i32 = arith.constant 0 : i32
    %c0_i32_0 = arith.constant 0 : i32
    %c0_i32_1 = arith.constant 0 : i32
    return %c0_i32, %c0_i32_0 : i32, i32
  }
  func.func @transform_5(%arg0: i32) -> (i32, i32) {
    %c0_i32 = arith.constant 0 : i32
    %c0_i32_0 = arith.constant 0 : i32
    %c0_i32_1 = arith.constant 0 : i32
    return %c0_i32, %c0_i32_0 : i32, i32
  }
  func.func @transform_6(%arg0: i32) -> (i32, i32) {
    %c0_i32 = arith.constant 0 : i32
    %c0_i32_0 = arith.constant 0 : i32
    %c0_i32_1 = arith.constant 0 : i32
    return %c0_i32, %c0_i32_0 : i32, i32
  }
  func.func @transform_7(%arg0: i32) -> (i32, i32) {
    %c0_i32 = arith.constant 0 : i32
    %c0_i32_0 = arith.constant 0 : i32
    %c0_i32_1 = arith.constant 0 : i32
    return %c0_i32, %c0_i32_0 : i32, i32
  }
  func.func @transform_8(%arg0: i32) -> (i32, i32) {
    %c0_i32 = arith.constant 0 : i32
    %c0_i32_0 = arith.constant 0 : i32
    %c0_i32_1 = arith.constant 0 : i32
    return %c0_i32, %c0_i32_0 : i32, i32
  }
  func.func @transform_9(%arg0: i32) -> (i32, i32) {
    %c0_i32 = arith.constant 0 : i32
    %c0_i32_0 = arith.constant 0 : i32
    %c0_i32_1 = arith.constant 0 : i32
    return %c0_i32, %c0_i32_0 : i32, i32
  }
  func.func @transform_10(%arg0: i32) -> (i32, i32) {
    %c0_i32 = arith.constant 0 : i32
    %c0_i32_0 = arith.constant 0 : i32
    %c0_i32_1 = arith.constant 0 : i32
    return %c0_i32, %c0_i32_0 : i32, i32
  }
  func.func @transform_11(%arg0: i32) -> (i32, i32, i32) {
    %c0_i32 = arith.constant 0 : i32
    %c0_i32_0 = arith.constant 0 : i32
    %c0_i32_1 = arith.constant 0 : i32
    return %arg0, %c0_i32, %c0_i32_0 : i32, i32, i32
  }
}

</mosaic_0001>

<llo_original>
// kernel: encoder_forward.1
$region0: #{encoder_forward.1}
  #allocation0 [shape = 'u32[]', space=smem, size = 0x4, offset = 0x4, fixed_abs, tag = 'smem constant byte address 0x4 - core index']
  #allocation1 [shape = 'u32[144,128]{1,0:T(1,128)}', space=vmem, size = 0x12000, scoped, tag = 'internal scratch']
  #allocation2 [shape = 'f32[64,512]{1,0:T(8,128)}', space=vmem, size = 0x20000, scoped, tag = 'scratch operand']
  #allocation3 [shape = 'f32[128,128]{1,0:T(8,128)}', space=vmem, size = 0x10000, scoped, tag = 'scratch operand']
  #allocation4 [shape = 'f32[256,32]{1,0:T(8,128)}', space=vmem, size = 0x20000, scoped, tag = 'scratch operand']
  #allocation5 [shape = 'f32[512,8]{1,0:T(8,128)}', space=vmem, size = 0x40000, scoped, tag = 'scratch operand']
  %s0 = inlined_call_operand.vmem [shape: f32[1,12,2048], index: 0, kind: input, shape index: {}]
  %s1 = inlined_call_operand.vmem [shape: f32[16,12], index: 1, kind: input, shape index: {}]
  %s2 = inlined_call_operand.vmem [shape: f32[16,1], index: 2, kind: input, shape index: {}]
  %s3 = inlined_call_operand.vmem [shape: f32[32,64], index: 3, kind: input, shape index: {}]
  %s4 = inlined_call_operand.vmem [shape: f32[32,1], index: 4, kind: input, shape index: {}]
  %s5 = inlined_call_operand.vmem [shape: f32[64,128], index: 5, kind: input, shape index: {}]
  %s6 = inlined_call_operand.vmem [shape: f32[64,1], index: 6, kind: input, shape index: {}]
  %s7 = inlined_call_operand.vmem [shape: f32[128,256], index: 7, kind: input, shape index: {}]
  %s8 = inlined_call_operand.vmem [shape: f32[128,1], index: 8, kind: input, shape index: {}]
  %s9 = inlined_call_operand.vmem [shape: f32[256,512], index: 9, kind: input, shape index: {}]
  %s10 = inlined_call_operand.vmem [shape: f32[256,1], index: 10, kind: input, shape index: {}]
  %s11 = inlined_call_operand.vmem [shape: f32[1,256,8], index: 11, kind: output, shape index: {}]
  %s12 = sld [smem:[#allocation0]]
  $region54: #{encoder_forward.1} parent=0
    _
  %s14 = ssub.s32 1, %s12
  %s15 = scalar_select 0, %s14, %s12
  // Predicated region
  $region2: #{encoder_forward.1} parent=0 // pred_check
    _
  $region3: #{encoder_forward.1} parent=0 // pred_check_branch
    %17 = sbr.rel (0) target = $region5
  $region4: #{encoder_forward.1} parent=0 // pred_region
    _
  $region5: #{encoder_forward.1} parent=0 // pred_fallthru
    _
  // Predicated region
  $region6: #{encoder_forward.1} parent=0 // pred_check
    _
  $region7: #{encoder_forward.1} parent=0 // pred_check_branch
    %19 = sbr.rel (0) target = $region9
  $region8: #{encoder_forward.1} parent=0 // pred_region
    _
  $region9: #{encoder_forward.1} parent=0 // pred_fallthru
    _
  // Predicated region
  $region10: #{encoder_forward.1} parent=0 // pred_check
    _
  $region11: #{encoder_forward.1} parent=0 // pred_check_branch
    %21 = sbr.rel (0) target = $region13
  $region12: #{encoder_forward.1} parent=0 // pred_region
    _
  $region13: #{encoder_forward.1} parent=0 // pred_fallthru
    _
  // Predicated region
  $region14: #{encoder_forward.1} parent=0 // pred_check
    _
  $region15: #{encoder_forward.1} parent=0 // pred_check_branch
    %23 = sbr.rel (0) target = $region17
  $region16: #{encoder_forward.1} parent=0 // pred_region
    _
  $region17: #{encoder_forward.1} parent=0 // pred_fallthru
    _
  // Predicated region
  $region18: #{encoder_forward.1} parent=0 // pred_check
    _
  $region19: #{encoder_forward.1} parent=0 // pred_check_branch
    %25 = sbr.rel (0) target = $region21
  $region20: #{encoder_forward.1} parent=0 // pred_region
    _
  $region21: #{encoder_forward.1} parent=0 // pred_fallthru
    _
  // Predicated region
  $region22: #{encoder_forward.1} parent=0 // pred_check
    _
  $region23: #{encoder_forward.1} parent=0 // pred_check_branch
    %27 = sbr.rel (0) target = $region25
  $region24: #{encoder_forward.1} parent=0 // pred_region
    _
  $region25: #{encoder_forward.1} parent=0 // pred_fallthru
    _
  // Predicated region
  $region26: #{encoder_forward.1} parent=0 // pred_check
    _
  $region27: #{encoder_forward.1} parent=0 // pred_check_branch
    %29 = sbr.rel (0) target = $region29
  $region28: #{encoder_forward.1} parent=0 // pred_region
    _
  $region29: #{encoder_forward.1} parent=0 // pred_fallthru
    _
  // Predicated region
  $region30: #{encoder_forward.1} parent=0 // pred_check
    _
  $region31: #{encoder_forward.1} parent=0 // pred_check_branch
    %31 = sbr.rel (0) target = $region33
  $region32: #{encoder_forward.1} parent=0 // pred_region
    _
  $region33: #{encoder_forward.1} parent=0 // pred_fallthru
    _
  // Predicated region
  $region34: #{encoder_forward.1} parent=0 // pred_check
    _
  $region35: #{encoder_forward.1} parent=0 // pred_check_branch
    %33 = sbr.rel (0) target = $region37
  $region36: #{encoder_forward.1} parent=0 // pred_region
    _
  $region37: #{encoder_forward.1} parent=0 // pred_fallthru
    _
  // Predicated region
  $region38: #{encoder_forward.1} parent=0 // pred_check
    _
  $region39: #{encoder_forward.1} parent=0 // pred_check_branch
    %35 = sbr.rel (0) target = $region41
  $region40: #{encoder_forward.1} parent=0 // pred_region
    _
  $region41: #{encoder_forward.1} parent=0 // pred_fallthru
    _
  // Predicated region
  $region42: #{encoder_forward.1} parent=0 // pred_check
    _
  $region43: #{encoder_forward.1} parent=0 // pred_check_branch
    %37 = sbr.rel (0) target = $region45
  $region44: #{encoder_forward.1} parent=0 // pred_region
    _
  $region45: #{encoder_forward.1} parent=0 // pred_fallthru
    _
  %v38 = vld [vmem:[%s0] sm:$0xff]
  %v39 = vld [vmem:[%s0 + $0x8] sm:$0xff]
  %v40 = vld [vmem:[%s0 + $0x10] sm:$0xff]
  %v41 = vld [vmem:[%s0 + $0x18] sm:$0xff]
  %v42 = vld [vmem:[%s0 + $0x20] sm:$0xff]
  %v43 = vld [vmem:[%s0 + $0x28] sm:$0xff]
  %v44 = vld [vmem:[%s0 + $0x30] sm:$0xff]
  %v45 = vld [vmem:[%s0 + $0x38] sm:$0xff]
  %v46 = vld [vmem:[%s0 + $0x40] sm:$0xff]
  %v47 = vld [vmem:[%s0 + $0x48] sm:$0xff]
  %v48 = vld [vmem:[%s0 + $0x50] sm:$0xff]
  %v49 = vld [vmem:[%s0 + $0x58] sm:$0xff]
  %v50 = vld [vmem:[%s0 + $0x60] sm:$0xff]
  %v51 = vld [vmem:[%s0 + $0x68] sm:$0xff]
  %v52 = vld [vmem:[%s0 + $0x70] sm:$0xff]
  %v53 = vld [vmem:[%s0 + $0x78] sm:$0xff]
  %v54 = vld [vmem:[%s0 + $0x80] sm:$0xf]
  %v55 = vld [vmem:[%s0 + $0x88] sm:$0xf]
  %v56 = vld [vmem:[%s0 + $0x90] sm:$0xf]
  %v57 = vld [vmem:[%s0 + $0x98] sm:$0xf]
  %v58 = vld [vmem:[%s0 + $0xa0] sm:$0xf]
  %v59 = vld [vmem:[%s0 + $0xa8] sm:$0xf]
  %v60 = vld [vmem:[%s0 + $0xb0] sm:$0xf]
  %v61 = vld [vmem:[%s0 + $0xb8] sm:$0xf]
  %v62 = vld [vmem:[%s0 + $0xc0] sm:$0xf]
  %v63 = vld [vmem:[%s0 + $0xc8] sm:$0xf]
  %v64 = vld [vmem:[%s0 + $0xd0] sm:$0xf]
  %v65 = vld [vmem:[%s0 + $0xd8] sm:$0xf]
  %v66 = vld [vmem:[%s0 + $0xe0] sm:$0xf]
  %v67 = vld [vmem:[%s0 + $0xe8] sm:$0xf]
  %v68 = vld [vmem:[%s0 + $0xf0] sm:$0xf]
  %v69 = vld [vmem:[%s0 + $0xf8] sm:$0xf]
  %v70 = vld [vmem:[%s1] sm:$0xff]
  %v71 = vld [vmem:[%s1 + $0x8] sm:$0xff]
  %v72 = vld [vmem:[%s2] sm:$0xff]
  %v73 = vld [vmem:[%s2 + $0x8] sm:$0xff]
  %75 = vset.pattern.permute.xlu0 0
  %76 = vperm.xlu0 %75, %v72
  %v77 = vpop.permute.xlu0 %76
  %80 = vset.pattern.permute.xlu0 0
  %81 = vperm.xlu0 %80, %v73
  %v82 = vpop.permute.xlu0 %81
  %vm84 = vcmask 97280
  %v86 = vsel %vm84, %v70, 0
  %v89 = vsel %vm84, %v71, 0
  %vm91 = vcmask 1043456
  %v93 = vsel %vm91, %v54, 0
  %v96 = vsel %vm91, %v55, 0
  %v99 = vsel %vm91, %v56, 0
  %v102 = vsel %vm91, %v57, 0
  %v105 = vsel %vm91, %v58, 0
  %v108 = vsel %vm91, %v59, 0
  %v111 = vsel %vm91, %v60, 0
  %v114 = vsel %vm91, %v61, 0
  %v117 = vsel %vm91, %v62, 0
  %v120 = vsel %vm91, %v63, 0
  %v123 = vsel %vm91, %v64, 0
  %v126 = vsel %vm91, %v65, 0
  %v129 = vsel %vm91, %v66, 0
  %v132 = vsel %vm91, %v67, 0
  %v135 = vsel %vm91, %v68, 0
  %v138 = vsel %vm91, %v69, 0
  %140 = vmatprep.subr.mxu0 %v39
  %141 = vmatpush1.msra.mxu0 %v38
  %142 = vmatprep.subr.mxu0 %v96
  %143 = vmatpush1.msra.mxu0 %v93
  %144 = vmatprep.subr.mxu0 0.0
  %145 = vmatpush1.msra.mxu0 0.0
  %146 = vmatprep.subr.mxu0 0.0
  %147 = vmatpush1.msra.mxu0 0.0
  %148 = vmatprep.subr.mxu0 0.0
  %149 = vmatpush1.msra.mxu0 0.0
  %150 = vmatprep.subr.mxu0 0.0
  %151 = vmatpush1.msra.mxu0 0.0
  %152 = vmatprep.subr.mxu0 0.0
  %153 = vmatpush1.msra.mxu0 0.0
  %154 = vmatprep.subr.mxu0 0.0
  %155 = vmatpush1.msra.mxu0 0.0
  %156 = vmatprep.subr.mxu0 0.0
  %157 = vmatpush1.msra.mxu0 0.0
  %158 = vmatprep.subr.mxu0 0.0
  %159 = vmatpush1.msra.mxu0 0.0
  %160 = vmatprep.subr.mxu0 0.0
  %161 = vmatpush1.msra.mxu0 0.0
  %162 = vmatprep.subr.mxu0 0.0
  %163 = vmatpush1.msra.mxu0 0.0
  %164 = vmatprep.subr.mxu0 0.0
  %165 = vmatpush1.msra.mxu0 0.0
  %166 = vmatprep.subr.mxu0 0.0
  %167 = vmatpush1.msra.mxu0 0.0
  %168 = vmatprep.subr.mxu0 0.0
  %169 = vmatpush1.msra.mxu0 0.0
  %170 = vmatprep.subr.mxu0 0.0
  %171 = vmatpush1.msra.mxu0 0.0
  %172 = vmatprep.subr.mxu0 0.0
  %173 = vmatpush1.msra.mxu0 0.0
  %174 = vmatprep.subr.mxu0 0.0
  %175 = vmatpush1.msra.mxu0 0.0
  %176 = vmatprep.subr.mxu0 0.0
  %177 = vmatpush1.msra.mxu0 0.0
  %178 = vmatprep.subr.mxu0 0.0
  %179 = vmatpush1.msra.mxu0 0.0
  %180 = vmatprep.subr.mxu0 0.0
  %181 = vmatpush1.msra.mxu0 0.0
  %182 = vmatprep.subr.mxu0 0.0
  %183 = vmatpush1.msra.mxu0 0.0
  %184 = vmatprep.subr.mxu0 0.0
  %185 = vmatpush1.msra.mxu0 0.0
  %186 = vmatprep.subr.mxu0 0.0
  %187 = vmatpush1.msra.mxu0 0.0
  %188 = vmatprep.subr.mxu0 0.0
  %189 = vmatpush1.msra.mxu0 0.0
  %190 = vmatprep.subr.mxu0 0.0
  %191 = vmatpush1.msra.mxu0 0.0
  %192 = vmatprep.subr.mxu0 0.0
  %193 = vmatpush1.msra.mxu0 0.0
  %194 = vmatprep.subr.mxu0 0.0
  %195 = vmatpush1.msra.mxu0 0.0
  %196 = vmatprep.subr.mxu0 0.0
  %197 = vmatpush1.msra.mxu0 0.0
  %198 = vmatprep.subr.mxu0 0.0
  %199 = vmatpush1.msra.mxu0 0.0
  %200 = vmatprep.subr.mxu0 0.0
  %201 = vmatpush1.msra.mxu0 0.0
  %202 = vmatprep.subr.mxu0 0.0
  %203 = vmatpush1.msra.mxu0 0.0
  %204 = vmatprep.mubr.f32.mxu0 0.0
  %205 = vmatmul.mubr.f32.gmra.mrb[0].mxu0 %v86
  %v206 = vpop.f32.mrb[0].mxu0
  %v207 = vadd.f32 %v77, %v206
  %v208 = vpop.f32.mrb[0].mxu0
  %v209 = vadd.f32 %v77, %v208
  %210 = vmatprep.mubr.f32.mxu0 0.0
  %211 = vmatmul.mubr.f32.gmra.mrb[0].mxu0 %v89
  %v212 = vpop.f32.mrb[0].mxu0
  %v213 = vadd.f32 %v82, %v212
  %v214 = vpop.f32.mrb[0].mxu0
  %v215 = vadd.f32 %v82, %v214
  %216 = vdwg.mxu0
  %217 = vmatprep.subr.mxu0 %v41
  %218 = vmatpush1.msra.mxu0 %v40
  %219 = vmatprep.subr.mxu0 %v102
  %220 = vmatpush1.msra.mxu0 %v99
  %221 = vmatprep.subr.mxu0 0.0
  %222 = vmatpush1.msra.mxu0 0.0
  %223 = vmatprep.subr.mxu0 0.0
  %224 = vmatpush1.msra.mxu0 0.0
  %225 = vmatprep.subr.mxu0 0.0
  %226 = vmatpush1.msra.mxu0 0.0
  %227 = vmatprep.subr.mxu0 0.0
  %228 = vmatpush1.msra.mxu0 0.0
  %229 = vmatprep.subr.mxu0 0.0
  %230 = vmatpush1.msra.mxu0 0.0
  %231 = vmatprep.subr.mxu0 0.0
  %232 = vmatpush1.msra.mxu0 0.0
  %233 = vmatprep.subr.mxu0 0.0
  %234 = vmatpush1.msra.mxu0 0.0
  %235 = vmatprep.subr.mxu0 0.0
  %236 = vmatpush1.msra.mxu0 0.0
  %237 = vmatprep.subr.mxu0 0.0
  %238 = vmatpush1.msra.mxu0 0.0
  %239 = vmatprep.subr.mxu0 0.0
  %240 = vmatpush1.msra.mxu0 0.0
  %241 = vmatprep.subr.mxu0 0.0
  %242 = vmatpush1.msra.mxu0 0.0
  %243 = vmatprep.subr.mxu0 0.0
  %244 = vmatpush1.msra.mxu0 0.0
  %245 = vmatprep.subr.mxu0 0.0
  %246 = vmatpush1.msra.mxu0 0.0
  %247 = vmatprep.subr.mxu0 0.0
  %248 = vmatpush1.msra.mxu0 0.0
  %249 = vmatprep.subr.mxu0 0.0
  %250 = vmatpush1.msra.mxu0 0.0
  %251 = vmatprep.subr.mxu0 0.0
  %252 = vmatpush1.msra.mxu0 0.0
  %253 = vmatprep.subr.mxu0 0.0
  %254 = vmatpush1.msra.mxu0 0.0
  %255 = vmatprep.subr.mxu0 0.0
  %256 = vmatpush1.msra.mxu0 0.0
  %257 = vmatprep.subr.mxu0 0.0
  %258 = vmatpush1.msra.mxu0 0.0
  %259 = vmatprep.subr.mxu0 0.0
  %260 = vmatpush1.msra.mxu0 0.0
  %261 = vmatprep.subr.mxu0 0.0
  %262 = vmatpush1.msra.mxu0 0.0
  %263 = vmatprep.subr.mxu0 0.0
  %264 = vmatpush1.msra.mxu0 0.0
  %265 = vmatprep.subr.mxu0 0.0
  %266 = vmatpush1.msra.mxu0 0.0
  %267 = vmatprep.subr.mxu0 0.0
  %268 = vmatpush1.msra.mxu0 0.0
  %269 = vmatprep.subr.mxu0 0.0
  %270 = vmatpush1.msra.mxu0 0.0
  %271 = vmatprep.subr.mxu0 0.0
  %272 = vmatpush1.msra.mxu0 0.0
  %273 = vmatprep.subr.mxu0 0.0
  %274 = vmatpush1.msra.mxu0 0.0
  %275 = vmatprep.subr.mxu0 0.0
  %276 = vmatpush1.msra.mxu0 0.0
  %277 = vmatprep.subr.mxu0 0.0
  %278 = vmatpush1.msra.mxu0 0.0
  %279 = vmatprep.subr.mxu0 0.0
  %280 = vmatpush1.msra.mxu0 0.0
  %281 = vmatprep.mubr.f32.mxu0 0.0
  %282 = vmatmul.mubr.f32.gmra.mrb[0].mxu0 %v86
  %v283 = vpop.f32.mrb[0].mxu0
  %v284 = vadd.f32 %v77, %v283
  %v285 = vpop.f32.mrb[0].mxu0
  %v286 = vadd.f32 %v77, %v285
  %287 = vmatprep.mubr.f32.mxu0 0.0
  %288 = vmatmul.mubr.f32.gmra.mrb[0].mxu0 %v89
  %v289 = vpop.f32.mrb[0].mxu0
  %v290 = vadd.f32 %v82, %v289
  %v291 = vpop.f32.mrb[0].mxu0
  %v292 = vadd.f32 %v82, %v291
  %293 = vdwg.mxu0
  %294 = vmatprep.subr.mxu0 %v43
  %295 = vmatpush1.msra.mxu0 %v42
  %296 = vmatprep.subr.mxu0 %v108
  %297 = vmatpush1.msra.mxu0 %v105
  %298 = vmatprep.subr.mxu0 0.0
  %299 = vmatpush1.msra.mxu0 0.0
  %300 = vmatprep.subr.mxu0 0.0
  %301 = vmatpush1.msra.mxu0 0.0
  %302 = vmatprep.subr.mxu0 0.0
  %303 = vmatpush1.msra.mxu0 0.0
  %304 = vmatprep.subr.mxu0 0.0
  %305 = vmatpush1.msra.mxu0 0.0
  %306 = vmatprep.subr.mxu0 0.0
  %307 = vmatpush1.msra.mxu0 0.0
  %308 = vmatprep.subr.mxu0 0.0
  %309 = vmatpush1.msra.mxu0 0.0
  %310 = vmatprep.subr.mxu0 0.0
  %311 = vmatpush1.msra.mxu0 0.0
  %312 = vmatprep.subr.mxu0 0.0
  %313 = vmatpush1.msra.mxu0 0.0
  %314 = vmatprep.subr.mxu0 0.0
  %315 = vmatpush1.msra.mxu0 0.0
  %316 = vmatprep.subr.mxu0 0.0
  %317 = vmatpush1.msra.mxu0 0.0
  %318 = vmatprep.subr.mxu0 0.0
  %319 = vmatpush1.msra.mxu0 0.0
  %320 = vmatprep.subr.mxu0 0.0
  %321 = vmatpush1.msra.mxu0 0.0
  %322 = vmatprep.subr.mxu0 0.0
  %323 = vmatpush1.msra.mxu0 0.0
  %324 = vmatprep.subr.mxu0 0.0
  %325 = vmatpush1.msra.mxu0 0.0
  %326 = vmatprep.subr.mxu0 0.0
  %327 = vmatpush1.msra.mxu0 0.0
  %328 = vmatprep.subr.mxu0 0.0
  %329 = vmatpush1.msra.mxu0 0.0
  %330 = vmatprep.subr.mxu0 0.0
  %331 = vmatpush1.msra.mxu0 0.0
  %332 = vmatprep.subr.mxu0 0.0
  %333 = vmatpush1.msra.mxu0 0.0
  %334 = vmatprep.subr.mxu0 0.0
  %335 = vmatpush1.msra.mxu0 0.0
  %336 = vmatprep.subr.mxu0 0.0
  %337 = vmatpush1.msra.mxu0 0.0
  %338 = vmatprep.subr.mxu0 0.0
  %339 = vmatpush1.msra.mxu0 0.0
  %340 = vmatprep.subr.mxu0 0.0
  %341 = vmatpush1.msra.mxu0 0.0
  %342 = vmatprep.subr.mxu0 0.0
  %343 = vmatpush1.msra.mxu0 0.0
  %344 = vmatprep.subr.mxu0 0.0
  %345 = vmatpush1.msra.mxu0 0.0
  %346 = vmatprep.subr.mxu0 0.0
  %347 = vmatpush1.msra.mxu0 0.0
  %348 = vmatprep.subr.mxu0 0.0
  %349 = vmatpush1.msra.mxu0 0.0
  %350 = vmatprep.subr.mxu0 0.0
  %351 = vmatpush1.msra.mxu0 0.0
  %352 = vmatprep.subr.mxu0 0.0
  %353 = vmatpush1.msra.mxu0 0.0
  %354 = vmatprep.subr.mxu0 0.0
  %355 = vmatpush1.msra.mxu0 0.0
  %356 = vmatprep.subr.mxu0 0.0
  %357 = vmatpush1.msra.mxu0 0.0
  %358 = vmatprep.mubr.f32.mxu0 0.0
  %359 = vmatmul.mubr.f32.gmra.mrb[0].mxu0 %v86
  %v360 = vpop.f32.mrb[0].mxu0
  %v361 = vadd.f32 %v77, %v360
  %v362 = vpop.f32.mrb[0].mxu0
  %v363 = vadd.f32 %v77, %v362
  %364 = vmatprep.mubr.f32.mxu0 0.0
  %365 = vmatmul.mubr.f32.gmra.mrb[0].mxu0 %v89
  %v366 = vpop.f32.mrb[0].mxu0
  %v367 = vadd.f32 %v82, %v366
  %v368 = vpop.f32.mrb[0].mxu0
  %v369 = vadd.f32 %v82, %v368
  %370 = vdwg.mxu0
  %371 = vmatprep.subr.mxu0 %v45
  %372 = vmatpush1.msra.mxu0 %v44
  %373 = vmatprep.subr.mxu0 %v114
  %374 = vmatpush1.msra.mxu0 %v111
  %375 = vmatprep.subr.mxu0 0.0
  %376 = vmatpush1.msra.mxu0 0.0
  %377 = vmatprep.subr.mxu0 0.0
  %378 = vmatpush1.msra.mxu0 0.0
  %379 = vmatprep.subr.mxu0 0.0
  %380 = vmatpush1.msra.mxu0 0.0
  %381 = vmatprep.subr.mxu0 0.0
  %382 = vmatpush1.msra.mxu0 0.0
  %383 = vmatprep.subr.mxu0 0.0
  %384 = vmatpush1.msra.mxu0 0.0
  %385 = vmatprep.subr.mxu0 0.0
  %386 = vmatpush1.msra.mxu0 0.0
  %387 = vmatprep.subr.mxu0 0.0
  %388 = vmatpush1.msra.mxu0 0.0
  %389 = vmatprep.subr.mxu0 0.0
  %390 = vmatpush1.msra.mxu0 0.0
  %391 = vmatprep.subr.mxu0 0.0
  %392 = vmatpush1.msra.mxu0 0.0
  %393 = vmatprep.subr.mxu0 0.0
  %394 = vmatpush1.msra.mxu0 0.0
  %395 = vmatprep.subr.mxu0 0.0
  %396 = vmatpush1.msra.mxu0 0.0
  %397 = vmatprep.subr.mxu0 0.0
  %398 = vmatpush1.msra.mxu0 0.0
  %399 = vmatprep.subr.mxu0 0.0
  %400 = vmatpush1.msra.mxu0 0.0
  %401 = vmatprep.subr.mxu0 0.0
  %402 = vmatpush1.msra.mxu0 0.0
  %403 = vmatprep.subr.mxu0 0.0
  %404 = vmatpush1.msra.mxu0 0.0
  %405 = vmatprep.subr.mxu0 0.0
  %406 = vmatpush1.msra.mxu0 0.0
  %407 = vmatprep.subr.mxu0 0.0
  %408 = vmatpush1.msra.mxu0 0.0
  %409 = vmatprep.subr.mxu0 0.0
  %410 = vmatpush1.msra.mxu0 0.0
  %411 = vmatprep.subr.mxu0 0.0
  %412 = vmatpush1.msra.mxu0 0.0
  %413 = vmatprep.subr.mxu0 0.0
  %414 = vmatpush1.msra.mxu0 0.0
  %415 = vmatprep.subr.mxu0 0.0
  %416 = vmatpush1.msra.mxu0 0.0
  %417 = vmatprep.subr.mxu0 0.0
  %418 = vmatpush1.msra.mxu0 0.0
  %419 = vmatprep.subr.mxu0 0.0
  %420 = vmatpush1.msra.mxu0 0.0
  %421 = vmatprep.subr.mxu0 0.0
  %422 = vmatpush1.msra.mxu0 0.0
  %423 = vmatprep.subr.mxu0 0.0
  %424 = vmatpush1.msra.mxu0 0.0
  %425 = vmatprep.subr.mxu0 0.0
  %426 = vmatpush1.msra.mxu0 0.0
  %427 = vmatprep.subr.mxu0 0.0
  %428 = vmatpush1.msra.mxu0 0.0
  %429 = vmatprep.subr.mxu0 0.0
  %430 = vmatpush1.msra.mxu0 0.0
  %431 = vmatprep.subr.mxu0 0.0
  %432 = vmatpush1.msra.mxu0 0.0
  %433 = vmatprep.subr.mxu0 0.0
  %434 = vmatpush1.msra.mxu0 0.0
  %435 = vmatprep.mubr.f32.mxu0 0.0
  %436 = vmatmul.mubr.f32.gmra.mrb[0].mxu0 %v86
  %v437 = vpop.f32.mrb[0].mxu0
  %v438 = vadd.f32 %v77, %v437
  %v439 = vpop.f32.mrb[0].mxu0
  %v440 = vadd.f32 %v77, %v439
  %441 = vmatprep.mubr.f32.mxu0 0.0
  %442 = vmatmul.mubr.f32.gmra.mrb[0].mxu0 %v89
  %v443 = vpop.f32.mrb[0].mxu0
  %v444 = vadd.f32 %v82, %v443
  %v445 = vpop.f32.mrb[0].mxu0
  %v446 = vadd.f32 %v82, %v445
  %447 = vdwg.mxu0
  %448 = vmatprep.subr.mxu0 %v47
  %449 = vmatpush1.msra.mxu0 %v46
  %450 = vmatprep.subr.mxu0 %v120
  %451 = vmatpush1.msra.mxu0 %v117
  %452 = vmatprep.subr.mxu0 0.0
  %453 = vmatpush1.msra.mxu0 0.0
  %454 = vmatprep.subr.mxu0 0.0
  %455 = vmatpush1.msra.mxu0 0.0
  %456 = vmatprep.subr.mxu0 0.0
  %457 = vmatpush1.msra.mxu0 0.0
  %458 = vmatprep.subr.mxu0 0.0
  %459 = vmatpush1.msra.mxu0 0.0
  %460 = vmatprep.subr.mxu0 0.0
  %461 = vmatpush1.msra.mxu0 0.0
  %462 = vmatprep.subr.mxu0 0.0
  %463 = vmatpush1.msra.mxu0 0.0
  %464 = vmatprep.subr.mxu0 0.0
  %465 = vmatpush1.msra.mxu0 0.0
  %466 = vmatprep.subr.mxu0 0.0
  %467 = vmatpush1.msra.mxu0 0.0
  %468 = vmatprep.subr.mxu0 0.0
  %469 = vmatpush1.msra.mxu0 0.0
  %470 = vmatprep.subr.mxu0 0.0
  %471 = vmatpush1.msra.mxu0 0.0
  %472 = vmatprep.subr.mxu0 0.0
  %473 = vmatpush1.msra.mxu0 0.0
  %474 = vmatprep.subr.mxu0 0.0
  %475 = vmatpush1.msra.mxu0 0.0
  %476 = vmatprep.subr.mxu0 0.0
  %477 = vmatpush1.msra.mxu0 0.0
  %478 = vmatprep.subr.mxu0 0.0
  %479 = vmatpush1.msra.mxu0 0.0
  %480 = vmatprep.subr.mxu0 0.0
  %481 = vmatpush1.msra.mxu0 0.0
  %482 = vmatprep.subr.mxu0 0.0
  %483 = vmatpush1.msra.mxu0 0.0
  %484 = vmatprep.subr.mxu0 0.0
  %485 = vmatpush1.msra.mxu0 0.0
  %486 = vmatprep.subr.mxu0 0.0
  %487 = vmatpush1.msra.mxu0 0.0
  %488 = vmatprep.subr.mxu0 0.0
  %489 = vmatpush1.msra.mxu0 0.0
  %490 = vmatprep.subr.mxu0 0.0
  %491 = vmatpush1.msra.mxu0 0.0
  %492 = vmatprep.subr.mxu0 0.0
  %493 = vmatpush1.msra.mxu0 0.0
  %494 = vmatprep.subr.mxu0 0.0
  %495 = vmatpush1.msra.mxu0 0.0
  %496 = vmatprep.subr.mxu0 0.0
  %497 = vmatpush1.msra.mxu0 0.0
  %498 = vmatprep.subr.mxu0 0.0
  %499 = vmatpush1.msra.mxu0 0.0
  %500 = vmatprep.subr.mxu0 0.0
  %501 = vmatpush1.msra.mxu0 0.0
  %502 = vmatprep.subr.mxu0 0.0
  %503 = vmatpush1.msra.mxu0 0.0
  %504 = vmatprep.subr.mxu0 0.0
  %505 = vmatpush1.msra.mxu0 0.0
  %506 = vmatprep.subr.mxu0 0.0
  %507 = vmatpush1.msra.mxu0 0.0
  %508 = vmatprep.subr.mxu0 0.0
  %509 = vmatpush1.msra.mxu0 0.0
  %510 = vmatprep.subr.mxu0 0.0
  %511 = vmatpush1.msra.mxu0 0.0
  %512 = vmatprep.mubr.f32.mxu0 0.0
  %513 = vmatmul.mubr.f32.gmra.mrb[0].mxu0 %v86
  %v514 = vpop.f32.mrb[0].mxu0
  %v515 = vadd.f32 %v77, %v514
  %v516 = vpop.f32.mrb[0].mxu0
  %v517 = vadd.f32 %v77, %v516
  %518 = vmatprep.mubr.f32.mxu0 0.0
  %519 = vmatmul.mubr.f32.gmra.mrb[0].mxu0 %v89
  %v520 = vpop.f32.mrb[0].mxu0
  %v521 = vadd.f32 %v82, %v520
  %v522 = vpop.f32.mrb[0].mxu0
  %v523 = vadd.f32 %v82, %v522
  %524 = vdwg.mxu0
  %525 = vmatprep.subr.mxu0 %v49
  %526 = vmatpush1.msra.mxu0 %v48
  %527 = vmatprep.subr.mxu0 %v126
  %528 = vmatpush1.msra.mxu0 %v123
  %529 = vmatprep.subr.mxu0 0.0
  %530 = vmatpush1.msra.mxu0 0.0
  %531 = vmatprep.subr.mxu0 0.0
  %532 = vmatpush1.msra.mxu0 0.0
  %533 = vmatprep.subr.mxu0 0.0
  %534 = vmatpush1.msra.mxu0 0.0
  %535 = vmatprep.subr.mxu0 0.0
  %536 = vmatpush1.msra.mxu0 0.0
  %537 = vmatprep.subr.mxu0 0.0
  %538 = vmatpush1.msra.mxu0 0.0
  %539 = vmatprep.subr.mxu0 0.0
  %540 = vmatpush1.msra.mxu0 0.0
  %541 = vmatprep.subr.mxu0 0.0
  %542 = vmatpush1.msra.mxu0 0.0
  %543 = vmatprep.subr.mxu0 0.0
  %544 = vmatpush1.msra.mxu0 0.0
  %545 = vmatprep.subr.mxu0 0.0
  %546 = vmatpush1.msra.mxu0 0.0
  %547 = vmatprep.subr.mxu0 0.0
  %548 = vmatpush1.msra.mxu0 0.0
  %549 = vmatprep.subr.mxu0 0.0
  %550 = vmatpush1.msra.mxu0 0.0
  %551 = vmatprep.subr.mxu0 0.0
  %552 = vmatpush1.msra.mxu0 0.0
  %553 = vmatprep.subr.mxu0 0.0
  %554 = vmatpush1.msra.mxu0 0.0
  %555 = vmatprep.subr.mxu0 0.0
  %556 = vmatpush1.msra.mxu0 0.0
  %557 = vmatprep.subr.mxu0 0.0
  %558 = vmatpush1.msra.mxu0 0.0
  %559 = vmatprep.subr.mxu0 0.0
  %560 = vmatpush1.msra.mxu0 0.0
  %561 = vmatprep.subr.mxu0 0.0
  %562 = vmatpush1.msra.mxu0 0.0
  %563 = vmatprep.subr.mxu0 0.0
  %564 = vmatpush1.msra.mxu0 0.0
  %565 = vmatprep.subr.mxu0 0.0
  %566 = vmatpush1.msra.mxu0 0.0
  %567 = vmatprep.subr.mxu0 0.0
  %568 = vmatpush1.msra.mxu0 0.0
  %569 = vmatprep.subr.mxu0 0.0
  %570 = vmatpush1.msra.mxu0 0.0
  %571 = vmatprep.subr.mxu0 0.0
  %572 = vmatpush1.msra.mxu0 0.0
  %573 = vmatprep.subr.mxu0 0.0
  %574 = vmatpush1.msra.mxu0 0.0
  %575 = vmatprep.subr.mxu0 0.0
  %576 = vmatpush1.msra.mxu0 0.0
  %577 = vmatprep.subr.mxu0 0.0
  %578 = vmatpush1.msra.mxu0 0.0
  %579 = vmatprep.subr.mxu0 0.0
  %580 = vmatpush1.msra.mxu0 0.0
  %581 = vmatprep.subr.mxu0 0.0
  %582 = vmatpush1.msra.mxu0 0.0
  %583 = vmatprep.subr.mxu0 0.0
  %584 = vmatpush1.msra.mxu0 0.0
  %585 = vmatprep.subr.mxu0 0.0
  %586 = vmatpush1.msra.mxu0 0.0
  %587 = vmatprep.subr.mxu0 0.0
  %588 = vmatpush1.msra.mxu0 0.0
  %589 = vmatprep.mubr.f32.mxu0 0.0
  %590 = vmatmul.mubr.f32.gmra.mrb[0].mxu0 %v86
  %v591 = vpop.f32.mrb[0].mxu0
  %v592 = vadd.f32 %v77, %v591
  %v593 = vpop.f32.mrb[0].mxu0
  %v594 = vadd.f32 %v77, %v593
  %595 = vmatprep.mubr.f32.mxu0 0.0
  %596 = vmatmul.mubr.f32.gmra.mrb[0].mxu0 %v89
  %v597 = vpop.f32.mrb[0].mxu0
  %v598 = vadd.f32 %v82, %v597
  %v599 = vpop.f32.mrb[0].mxu0
  %v600 = vadd.f32 %v82, %v599
  %601 = vdwg.mxu0
  %602 = vmatprep.subr.mxu0 %v51
  %603 = vmatpush1.msra.mxu0 %v50
  %604 = vmatprep.subr.mxu0 %v132
  %605 = vmatpush1.msra.mxu0 %v129
  %606 = vmatprep.subr.mxu0 0.0
  %607 = vmatpush1.msra.mxu0 0.0
  %608 = vmatprep.subr.mxu0 0.0
  %609 = vmatpush1.msra.mxu0 0.0
  %610 = vmatprep.subr.mxu0 0.0
  %611 = vmatpush1.msra.mxu0 0.0
  %612 = vmatprep.subr.mxu0 0.0
  %613 = vmatpush1.msra.mxu0 0.0
  %614 = vmatprep.subr.mxu0 0.0
  %615 = vmatpush1.msra.mxu0 0.0
  %616 = vmatprep.subr.mxu0 0.0
  %617 = vmatpush1.msra.mxu0 0.0
  %618 = vmatprep.subr.mxu0 0.0
  %619 = vmatpush1.msra.mxu0 0.0
  %620 = vmatprep.subr.mxu0 0.0
  %621 = vmatpush1.msra.mxu0 0.0
  %622 = vmatprep.subr.mxu0 0.0
  %623 = vmatpush1.msra.mxu0 0.0
  %624 = vmatprep.subr.mxu0 0.0
  %625 = vmatpush1.msra.mxu0 0.0
  %626 = vmatprep.subr.mxu0 0.0
  %627 = vmatpush1.msra.mxu0 0.0
  %628 = vmatprep.subr.mxu0 0.0
  %629 = vmatpush1.msra.mxu0 0.0
  %630 = vmatprep.subr.mxu0 0.0
  %631 = vmatpush1.msra.mxu0 0.0
  %632 = vmatprep.subr.mxu0 0.0
  %633 = vmatpush1.msra.mxu0 0.0
  %634 = vmatprep.subr.mxu0 0.0
  %635 = vmatpush1.msra.mxu0 0.0
  %636 = vmatprep.subr.mxu0 0.0
  %637 = vmatpush1.msra.mxu0 0.0
  %638 = vmatprep.subr.mxu0 0.0
  %639 = vmatpush1.msra.mxu0 0.0
  %640 = vmatprep.subr.mxu0 0.0
  %641 = vmatpush1.msra.mxu0 0.0
  %642 = vmatprep.subr.mxu0 0.0
  %643 = vmatpush1.msra.mxu0 0.0
  %644 = vmatprep.subr.mxu0 0.0
  %645 = vmatpush1.msra.mxu0 0.0
  %646 = vmatprep.subr.mxu0 0.0
  %647 = vmatpush1.msra.mxu0 0.0
  %648 = vmatprep.subr.mxu0 0.0
  %649 = vmatpush1.msra.mxu0 0.0
  %650 = vmatprep.subr.mxu0 0.0
  %651 = vmatpush1.msra.mxu0 0.0
  %652 = vmatprep.subr.mxu0 0.0
  %653 = vmatpush1.msra.mxu0 0.0
  %654 = vmatprep.subr.mxu0 0.0
  %655 = vmatpush1.msra.mxu0 0.0
  %656 = vmatprep.subr.mxu0 0.0
  %657 = vmatpush1.msra.mxu0 0.0
  %658 = vmatprep.subr.mxu0 0.0
  %659 = vmatpush1.msra.mxu0 0.0
  %660 = vmatprep.subr.mxu0 0.0
  %661 = vmatpush1.msra.mxu0 0.0
  %662 = vmatprep.subr.mxu0 0.0
  %663 = vmatpush1.msra.mxu0 0.0
  %664 = vmatprep.subr.mxu0 0.0
  %665 = vmatpush1.msra.mxu0 0.0
  %666 = vmatprep.mubr.f32.mxu0 0.0
  %667 = vmatmul.mubr.f32.gmra.mrb[0].mxu0 %v86
  %v668 = vpop.f32.mrb[0].mxu0
  %v669 = vadd.f32 %v77, %v668
  %v670 = vpop.f32.mrb[0].mxu0
  %v671 = vadd.f32 %v77, %v670
  %672 = vmatprep.mubr.f32.mxu0 0.0
  %673 = vmatmul.mubr.f32.gmra.mrb[0].mxu0 %v89
  %v674 = vpop.f32.mrb[0].mxu0
  %v675 = vadd.f32 %v82, %v674
  %v676 = vpop.f32.mrb[0].mxu0
  %v677 = vadd.f32 %v82, %v676
  %678 = vdwg.mxu0
  %679 = vmatprep.subr.mxu0 %v53
  %680 = vmatpush1.msra.mxu0 %v52
  %681 = vmatprep.subr.mxu0 %v138
  %682 = vmatpush1.msra.mxu0 %v135
  %683 = vmatprep.subr.mxu0 0.0
  %684 = vmatpush1.msra.mxu0 0.0
  %685 = vmatprep.subr.mxu0 0.0
  %686 = vmatpush1.msra.mxu0 0.0
  %687 = vmatprep.subr.mxu0 0.0
  %688 = vmatpush1.msra.mxu0 0.0
  %689 = vmatprep.subr.mxu0 0.0
  %690 = vmatpush1.msra.mxu0 0.0
  %691 = vmatprep.subr.mxu0 0.0
  %692 = vmatpush1.msra.mxu0 0.0
  %693 = vmatprep.subr.mxu0 0.0
  %694 = vmatpush1.msra.mxu0 0.0
  %695 = vmatprep.subr.mxu0 0.0
  %696 = vmatpush1.msra.mxu0 0.0
  %697 = vmatprep.subr.mxu0 0.0
  %698 = vmatpush1.msra.mxu0 0.0
  %699 = vmatprep.subr.mxu0 0.0
  %700 = vmatpush1.msra.mxu0 0.0
  %701 = vmatprep.subr.mxu0 0.0
  %702 = vmatpush1.msra.mxu0 0.0
  %703 = vmatprep.subr.mxu0 0.0
  %704 = vmatpush1.msra.mxu0 0.0
  %705 = vmatprep.subr.mxu0 0.0
  %706 = vmatpush1.msra.mxu0 0.0
  %707 = vmatprep.subr.mxu0 0.0
  %708 = vmatpush1.msra.mxu0 0.0
  %709 = vmatprep.subr.mxu0 0.0
  %710 = vmatpush1.msra.mxu0 0.0
  %711 = vmatprep.subr.mxu0 0.0
  %712 = vmatpush1.msra.mxu0 0.0
  %713 = vmatprep.subr.mxu0 0.0
  %714 = vmatpush1.msra.mxu0 0.0
  %715 = vmatprep.subr.mxu0 0.0
  %716 = vmatpush1.msra.mxu0 0.0
  %717 = vmatprep.subr.mxu0 0.0
  %718 = vmatpush1.msra.mxu0 0.0
  %719 = vmatprep.subr.mxu0 0.0
  %720 = vmatpush1.msra.mxu0 0.0
  %721 = vmatprep.subr.mxu0 0.0
  %722 = vmatpush1.msra.mxu0 0.0
  %723 = vmatprep.subr.mxu0 0.0
  %724 = vmatpush1.msra.mxu0 0.0
  %725 = vmatprep.subr.mxu0 0.0
  %726 = vmatpush1.msra.mxu0 0.0
  %727 = vmatprep.subr.mxu0 0.0
  %728 = vmatpush1.msra.mxu0 0.0
  %729 = vmatprep.subr.mxu0 0.0
  %730 = vmatpush1.msra.mxu0 0.0
  %731 = vmatprep.subr.mxu0 0.0
  %732 = vmatpush1.msra.mxu0 0.0
  %733 = vmatprep.subr.mxu0 0.0
  %734 = vmatpush1.msra.mxu0 0.0
  %735 = vmatprep.subr.mxu0 0.0
  %736 = vmatpush1.msra.mxu0 0.0
  %737 = vmatprep.subr.mxu0 0.0
  %738 = vmatpush1.msra.mxu0 0.0
  %739 = vmatprep.subr.mxu0 0.0
  %740 = vmatpush1.msra.mxu0 0.0
  %741 = vmatprep.subr.mxu0 0.0
  %742 = vmatpush1.msra.mxu0 0.0
  %743 = vmatprep.mubr.f32.mxu0 0.0
  %744 = vmatmul.mubr.f32.gmra.mrb[0].mxu0 %v86
  %v745 = vpop.f32.mrb[0].mxu0
  %v746 = vadd.f32 %v77, %v745
  %v747 = vpop.f32.mrb[0].mxu0
  %v748 = vadd.f32 %v77, %v747
  %749 = vmatprep.mubr.f32.mxu0 0.0
  %750 = vmatmul.mubr.f32.gmra.mrb[0].mxu0 %v89
  %v751 = vpop.f32.mrb[0].mxu0
  %v752 = vadd.f32 %v82, %v751
  %v753 = vpop.f32.mrb[0].mxu0
  %v754 = vadd.f32 %v82, %v753
  %755 = vdwg.mxu0
  %v756 = vmax.f32 %v207, 0.0
  %v757 = vmax.f32 %v209, 0.0
  %v758 = vmax.f32 %v284, 0.0
  %v759 = vmax.f32 %v286, 0.0
  %v760 = vmax.f32 %v361, 0.0
  %v761 = vmax.f32 %v363, 0.0
  %v762 = vmax.f32 %v438, 0.0
  %v763 = vmax.f32 %v440, 0.0
  %v764 = vmax.f32 %v515, 0.0
  %v765 = vmax.f32 %v517, 0.0
  %v766 = vmax.f32 %v592, 0.0
  %v767 = vmax.f32 %v594, 0.0
  %v768 = vmax.f32 %v669, 0.0
  %v769 = vmax.f32 %v671, 0.0
  %v770 = vmax.f32 %v746, 0.0
  %v771 = vmax.f32 %v748, 0.0
  %v772 = vmax.f32 %v213, 0.0
  %v773 = vmax.f32 %v215, 0.0
  %v774 = vmax.f32 %v290, 0.0
  %v775 = vmax.f32 %v292, 0.0
  %v776 = vmax.f32 %v367, 0.0
  %v777 = vmax.f32 %v369, 0.0
  %v778 = vmax.f32 %v444, 0.0
  %v779 = vmax.f32 %v446, 0.0
  %v780 = vmax.f32 %v521, 0.0
  %v781 = vmax.f32 %v523, 0.0
  %v782 = vmax.f32 %v598, 0.0
  %v783 = vmax.f32 %v600, 0.0
  %v784 = vmax.f32 %v675, 0.0
  %v785 = vmax.f32 %v677, 0.0
  %v786 = vmax.f32 %v752, 0.0
  %v787 = vmax.f32 %v754, 0.0
  %788 = vst [vmem:[#allocation2] sm:$0xff] %v756
  %789 = vst [vmem:[#allocation2 + $0x8] sm:$0xff] %v757
  %790 = vst [vmem:[#allocation2 + $0x10] sm:$0xff] %v758
  %791 = vst [vmem:[#allocation2 + $0x18] sm:$0xff] %v759
  %792 = vst [vmem:[#allocation2 + $0x20] sm:$0xff] %v772
  %793 = vst [vmem:[#allocation2 + $0x28] sm:$0xff] %v773
  %794 = vst [vmem:[#allocation2 + $0x30] sm:$0xff] %v774
  %795 = vst [vmem:[#allocation2 + $0x38] sm:$0xff] %v775
  %796 = vst [vmem:[#allocation2 + $0x40] sm:$0xff] %v760
  %797 = vst [vmem:[#allocation2 + $0x48] sm:$0xff] %v761
  %798 = vst [vmem:[#allocation2 + $0x50] sm:$0xff] %v762
  %799 = vst [vmem:[#allocation2 + $0x58] sm:$0xff] %v763
  %800 = vst [vmem:[#allocation2 + $0x60] sm:$0xff] %v776
  %801 = vst [vmem:[#allocation2 + $0x68] sm:$0xff] %v777
  %802 = vst [vmem:[#allocation2 + $0x70] sm:$0xff] %v778
  %803 = vst [vmem:[#allocation2 + $0x78] sm:$0xff] %v779
  %804 = vst [vmem:[#allocation2 + $0x80] sm:$0xff] %v764
  %805 = vst [vmem:[#allocation2 + $0x88] sm:$0xff] %v765
  %806 = vst [vmem:[#allocation2 + $0x90] sm:$0xff] %v766
  %807 = vst [vmem:[#allocation2 + $0x98] sm:$0xff] %v767
  %808 = vst [vmem:[#allocation2 + $0xa0] sm:$0xff] %v780
  %809 = vst [vmem:[#allocation2 + $0xa8] sm:$0xff] %v781
  %810 = vst [vmem:[#allocation2 + $0xb0] sm:$0xff] %v782
  %811 = vst [vmem:[#allocation2 + $0xb8] sm:$0xff] %v783
  %812 = vst [vmem:[#allocation2 + $0xc0] sm:$0xff] %v768
  %813 = vst [vmem:[#allocation2 + $0xc8] sm:$0xff] %v769
  %814 = vst [vmem:[#allocation2 + $0xd0] sm:$0xff] %v770
  %815 = vst [vmem:[#allocation2 + $0xd8] sm:$0xff] %v771
  %816 = vst [vmem:[#allocation2 + $0xe0] sm:$0xff] %v784
  %817 = vst [vmem:[#allocation2 + $0xe8] sm:$0xff] %v785
  %818 = vst [vmem:[#allocation2 + $0xf0] sm:$0xff] %v786
  %819 = vst [vmem:[#allocation2 + $0xf8] sm:$0xff] %v787
  %v820 = vld [vmem:[#allocation2] sm:$0xff]
  %v821 = vld [vmem:[#allocation2 + $0x8] sm:$0xff]
  %v822 = vld [vmem:[#allocation2 + $0x10] sm:$0xff]
  %v823 = vld [vmem:[#allocation2 + $0x18] sm:$0xff]
  %v824 = vld [vmem:[#allocation2 + $0x20] sm:$0xff]
  %v825 = vld [vmem:[#allocation2 + $0x28] sm:$0xff]
  %v826 = vld [vmem:[#allocation2 + $0x30] sm:$0xff]
  %v827 = vld [vmem:[#allocation2 + $0x38] sm:$0xff]
  %v828 = vld [vmem:[#allocation2 + $0x40] sm:$0xff]
  %v829 = vld [vmem:[#allocation2 + $0x48] sm:$0xff]
  %v830 = vld [vmem:[#allocation2 + $0x50] sm:$0xff]
  %v831 = vld [vmem:[#allocation2 + $0x58] sm:$0xff]
  %v832 = vld [vmem:[#allocation2 + $0x60] sm:$0xff]
  %v833 = vld [vmem:[#allocation2 + $0x68] sm:$0xff]
  %v834 = vld [vmem:[#allocation2 + $0x70] sm:$0xff]
  %v835 = vld [vmem:[#allocation2 + $0x78] sm:$0xff]
  %v836 = vld [vmem:[#allocation2 + $0x80] sm:$0xff]
  %v837 = vld [vmem:[#allocation2 + $0x88] sm:$0xff]
  %v838 = vld [vmem:[#allocation2 + $0x90] sm:$0xff]
  %v839 = vld [vmem:[#allocation2 + $0x98] sm:$0xff]
  %v840 = vld [vmem:[#allocation2 + $0xa0] sm:$0xff]
  %v841 = vld [vmem:[#allocation2 + $0xa8] sm:$0xff]
  %v842 = vld [vmem:[#allocation2 + $0xb0] sm:$0xff]
  %v843 = vld [vmem:[#allocation2 + $0xb8] sm:$0xff]
  %v844 = vld [vmem:[#allocation2 + $0xc0] sm:$0xff]
  %v845 = vld [vmem:[#allocation2 + $0xc8] sm:$0xff]
  %v846 = vld [vmem:[#allocation2 + $0xd0] sm:$0xff]
  %v847 = vld [vmem:[#allocation2 + $0xd8] sm:$0xff]
  %v848 = vld [vmem:[#allocation2 + $0xe0] sm:$0xff]
  %v849 = vld [vmem:[#allocation2 + $0xe8] sm:$0xff]
  %v850 = vld [vmem:[#allocation2 + $0xf0] sm:$0xff]
  %v851 = vld [vmem:[#allocation2 + $0xf8] sm:$0xff]
  %v852 = vld [vmem:[%s3] sm:$0xff]
  %v853 = vld [vmem:[%s3 + $0x8] sm:$0xff]
  %v854 = vld [vmem:[%s3 + $0x10] sm:$0xff]
  %v855 = vld [vmem:[%s3 + $0x18] sm:$0xff]
  %v856 = vld [vmem:[%s4] sm:$0xff]
  %v857 = vld [vmem:[%s4 + $0x8] sm:$0xff]
  %v858 = vld [vmem:[%s4 + $0x10] sm:$0xff]
  %v859 = vld [vmem:[%s4 + $0x18] sm:$0xff]
  %861 = vset.pattern.permute.xlu0 0
  %862 = vperm.xlu0 %861, %v856
  %v863 = vpop.permute.xlu0 %862
  %866 = vset.pattern.permute.xlu0 0
  %867 = vperm.xlu0 %866, %v857
  %v868 = vpop.permute.xlu0 %867
  %871 = vset.pattern.permute.xlu0 0
  %872 = vperm.xlu0 %871, %v858
  %v873 = vpop.permute.xlu0 %872
  %876 = vset.pattern.permute.xlu0 0
  %877 = vperm.xlu0 %876, %v859
  %v878 = vpop.permute.xlu0 %877
  %vm880 = vcmask 523264
  %v882 = vsel %vm880, %v852, 0
  %v885 = vsel %vm880, %v853, 0
  %v888 = vsel %vm880, %v854, 0
  %v891 = vsel %vm880, %v855, 0
  %893 = vmatprep.subr.mxu0 %v821
  %894 = vmatpush1.msra.mxu0 %v820
  %895 = vmatprep.subr.mxu0 %v825
  %896 = vmatpush1.msra.mxu0 %v824
  %897 = vmatprep.subr.mxu0 %v829
  %898 = vmatpush1.msra.mxu0 %v828
  %899 = vmatprep.subr.mxu0 %v833
  %900 = vmatpush1.msra.mxu0 %v832
  %901 = vmatprep.subr.mxu0 %v837
  %902 = vmatpush1.msra.mxu0 %v836
  %903 = vmatprep.subr.mxu0 %v841
  %904 = vmatpush1.msra.mxu0 %v840
  %905 = vmatprep.subr.mxu0 %v845
  %906 = vmatpush1.msra.mxu0 %v844
  %907 = vmatprep.subr.mxu0 %v849
  %908 = vmatpush1.msra.mxu0 %v848
  %909 = vmatprep.subr.mxu0 0.0
  %910 = vmatpush1.msra.mxu0 0.0
  %911 = vmatprep.subr.mxu0 0.0
  %912 = vmatpush1.msra.mxu0 0.0
  %913 = vmatprep.subr.mxu0 0.0
  %914 = vmatpush1.msra.mxu0 0.0
  %915 = vmatprep.subr.mxu0 0.0
  %916 = vmatpush1.msra.mxu0 0.0
  %917 = vmatprep.subr.mxu0 0.0
  %918 = vmatpush1.msra.mxu0 0.0
  %919 = vmatprep.subr.mxu0 0.0
  %920 = vmatpush1.msra.mxu0 0.0
  %921 = vmatprep.subr.mxu0 0.0
  %922 = vmatpush1.msra.mxu0 0.0
  %923 = vmatprep.subr.mxu0 0.0
  %924 = vmatpush1.msra.mxu0 0.0
  %925 = vmatprep.subr.mxu0 0.0
  %926 = vmatpush1.msra.mxu0 0.0
  %927 = vmatprep.subr.mxu0 0.0
  %928 = vmatpush1.msra.mxu0 0.0
  %929 = vmatprep.subr.mxu0 0.0
  %930 = vmatpush1.msra.mxu0 0.0
  %931 = vmatprep.subr.mxu0 0.0
  %932 = vmatpush1.msra.mxu0 0.0
  %933 = vmatprep.subr.mxu0 0.0
  %934 = vmatpush1.msra.mxu0 0.0
  %935 = vmatprep.subr.mxu0 0.0
  %936 = vmatpush1.msra.mxu0 0.0
  %937 = vmatprep.subr.mxu0 0.0
  %938 = vmatpush1.msra.mxu0 0.0
  %939 = vmatprep.subr.mxu0 0.0
  %940 = vmatpush1.msra.mxu0 0.0
  %941 = vmatprep.subr.mxu0 0.0
  %942 = vmatpush1.msra.mxu0 0.0
  %943 = vmatprep.subr.mxu0 0.0
  %944 = vmatpush1.msra.mxu0 0.0
  %945 = vmatprep.subr.mxu0 0.0
  %946 = vmatpush1.msra.mxu0 0.0
  %947 = vmatprep.subr.mxu0 0.0
  %948 = vmatpush1.msra.mxu0 0.0
  %949 = vmatprep.subr.mxu0 0.0
  %950 = vmatpush1.msra.mxu0 0.0
  %951 = vmatprep.subr.mxu0 0.0
  %952 = vmatpush1.msra.mxu0 0.0
  %953 = vmatprep.subr.mxu0 0.0
  %954 = vmatpush1.msra.mxu0 0.0
  %955 = vmatprep.subr.mxu0 0.0
  %956 = vmatpush1.msra.mxu0 0.0
  %957 = vmatprep.mubr.f32.mxu0 0.0
  %958 = vmatmul.mubr.f32.gmra.mrb[0].mxu0 %v882
  %v959 = vpop.f32.mrb[0].mxu0
  %v960 = vadd.f32 %v863, %v959
  %v961 = vpop.f32.mrb[0].mxu0
  %v962 = vadd.f32 %v863, %v961
  %963 = vmatprep.mubr.f32.mxu0 0.0
  %964 = vmatmul.mubr.f32.gmra.mrb[0].mxu0 %v885
  %v965 = vpop.f32.mrb[0].mxu0
  %v966 = vadd.f32 %v868, %v965
  %v967 = vpop.f32.mrb[0].mxu0
  %v968 = vadd.f32 %v868, %v967
  %969 = vmatprep.mubr.f32.mxu0 0.0
  %970 = vmatmul.mubr.f32.gmra.mrb[0].mxu0 %v888
  %v971 = vpop.f32.mrb[0].mxu0
  %v972 = vadd.f32 %v873, %v971
  %v973 = vpop.f32.mrb[0].mxu0
  %v974 = vadd.f32 %v873, %v973
  %975 = vmatprep.mubr.f32.mxu0 0.0
  %976 = vmatmul.mubr.f32.gmra.mrb[0].mxu0 %v891
  %v977 = vpop.f32.mrb[0].mxu0
  %v978 = vadd.f32 %v878, %v977
  %v979 = vpop.f32.mrb[0].mxu0
  %v980 = vadd.f32 %v878, %v979
  %981 = vdwg.mxu0
  %982 = vmatprep.subr.mxu0 %v823
  %983 = vmatpush1.msra.mxu0 %v822
  %984 = vmatprep.subr.mxu0 %v827
  %985 = vmatpush1.msra.mxu0 %v826
  %986 = vmatprep.subr.mxu0 %v831
  %987 = vmatpush1.msra.mxu0 %v830
  %988 = vmatprep.subr.mxu0 %v835
  %989 = vmatpush1.msra.mxu0 %v834
  %990 = vmatprep.subr.mxu0 %v839
  %991 = vmatpush1.msra.mxu0 %v838
  %992 = vmatprep.subr.mxu0 %v843
  %993 = vmatpush1.msra.mxu0 %v842
  %994 = vmatprep.subr.mxu0 %v847
  %995 = vmatpush1.msra.mxu0 %v846
  %996 = vmatprep.subr.mxu0 %v851
  %997 = vmatpush1.msra.mxu0 %v850
  %998 = vmatprep.subr.mxu0 0.0
  %999 = vmatpush1.msra.mxu0 0.0
  %1000 = vmatprep.subr.mxu0 0.0
  %1001 = vmatpush1.msra.mxu0 0.0
  %1002 = vmatprep.subr.mxu0 0.0
  %1003 = vmatpush1.msra.mxu0 0.0
  %1004 = vmatprep.subr.mxu0 0.0
  %1005 = vmatpush1.msra.mxu0 0.0
  %1006 = vmatprep.subr.mxu0 0.0
  %1007 = vmatpush1.msra.mxu0 0.0
  %1008 = vmatprep.subr.mxu0 0.0
  %1009 = vmatpush1.msra.mxu0 0.0
  %1010 = vmatprep.subr.mxu0 0.0
  %1011 = vmatpush1.msra.mxu0 0.0
  %1012 = vmatprep.subr.mxu0 0.0
  %1013 = vmatpush1.msra.mxu0 0.0
  %1014 = vmatprep.subr.mxu0 0.0
  %1015 = vmatpush1.msra.mxu0 0.0
  %1016 = vmatprep.subr.mxu0 0.0
  %1017 = vmatpush1.msra.mxu0 0.0
  %1018 = vmatprep.subr.mxu0 0.0
  %1019 = vmatpush1.msra.mxu0 0.0
  %1020 = vmatprep.subr.mxu0 0.0
  %1021 = vmatpush1.msra.mxu0 0.0
  %1022 = vmatprep.subr.mxu0 0.0
  %1023 = vmatpush1.msra.mxu0 0.0
  %1024 = vmatprep.subr.mxu0 0.0
  %1025 = vmatpush1.msra.mxu0 0.0
  %1026 = vmatprep.subr.mxu0 0.0
  %1027 = vmatpush1.msra.mxu0 0.0
  %1028 = vmatprep.subr.mxu0 0.0
  %1029 = vmatpush1.msra.mxu0 0.0
  %1030 = vmatprep.subr.mxu0 0.0
  %1031 = vmatpush1.msra.mxu0 0.0
  %1032 = vmatprep.subr.mxu0 0.0
  %1033 = vmatpush1.msra.mxu0 0.0
  %1034 = vmatprep.subr.mxu0 0.0
  %1035 = vmatpush1.msra.mxu0 0.0
  %1036 = vmatprep.subr.mxu0 0.0
  %1037 = vmatpush1.msra.mxu0 0.0
  %1038 = vmatprep.subr.mxu0 0.0
  %1039 = vmatpush1.msra.mxu0 0.0
  %1040 = vmatprep.subr.mxu0 0.0
  %1041 = vmatpush1.msra.mxu0 0.0
  %1042 = vmatprep.subr.mxu0 0.0
  %1043 = vmatpush1.msra.mxu0 0.0
  %1044 = vmatprep.subr.mxu0 0.0
  %1045 = vmatpush1.msra.mxu0 0.0
  %1046 = vmatprep.mubr.f32.mxu0 0.0
  %1047 = vmatmul.mubr.f32.gmra.mrb[0].mxu0 %v882
  %v1048 = vpop.f32.mrb[0].mxu0
  %v1049 = vadd.f32 %v863, %v1048
  %v1050 = vpop.f32.mrb[0].mxu0
  %v1051 = vadd.f32 %v863, %v1050
  %1052 = vmatprep.mubr.f32.mxu0 0.0
  %1053 = vmatmul.mubr.f32.gmra.mrb[0].mxu0 %v885
  %v1054 = vpop.f32.mrb[0].mxu0
  %v1055 = vadd.f32 %v868, %v1054
  %v1056 = vpop.f32.mrb[0].mxu0
  %v1057 = vadd.f32 %v868, %v1056
  %1058 = vmatprep.mubr.f32.mxu0 0.0
  %1059 = vmatmul.mubr.f32.gmra.mrb[0].mxu0 %v888
  %v1060 = vpop.f32.mrb[0].mxu0
  %v1061 = vadd.f32 %v873, %v1060
  %v1062 = vpop.f32.mrb[0].mxu0
  %v1063 = vadd.f32 %v873, %v1062
  %1064 = vmatprep.mubr.f32.mxu0 0.0
  %1065 = vmatmul.mubr.f32.gmra.mrb[0].mxu0 %v891
  %v1066 = vpop.f32.mrb[0].mxu0
  %v1067 = vadd.f32 %v878, %v1066
  %v1068 = vpop.f32.mrb[0].mxu0
  %v1069 = vadd.f32 %v878, %v1068
  %1070 = vdwg.mxu0
  %v1071 = vmax.f32 %v960, 0.0
  %v1072 = vmax.f32 %v962, 0.0
  %v1073 = vmax.f32 %v1049, 0.0
  %v1074 = vmax.f32 %v1051, 0.0
  %v1075 = vmax.f32 %v966, 0.0
  %v1076 = vmax.f32 %v968, 0.0
  %v1077 = vmax.f32 %v1055, 0.0
  %v1078 = vmax.f32 %v1057, 0.0
  %v1079 = vmax.f32 %v972, 0.0
  %v1080 = vmax.f32 %v974, 0.0
  %v1081 = vmax.f32 %v1061, 0.0
  %v1082 = vmax.f32 %v1063, 0.0
  %v1083 = vmax.f32 %v978, 0.0
  %v1084 = vmax.f32 %v980, 0.0
  %v1085 = vmax.f32 %v1067, 0.0
  %v1086 = vmax.f32 %v1069, 0.0
  %1087 = vst [vmem:[#allocation3] sm:$0xff] %v1071
  %1088 = vst [vmem:[#allocation3 + $0x8] sm:$0xff] %v1075
  %1089 = vst [vmem:[#allocation3 + $0x10] sm:$0xff] %v1079
  %1090 = vst [vmem:[#allocation3 + $0x18] sm:$0xff] %v1083
  %1091 = vst [vmem:[#allocation3 + $0x20] sm:$0xff] %v1072
  %1092 = vst [vmem:[#allocation3 + $0x28] sm:$0xff] %v1076
  %1093 = vst [vmem:[#allocation3 + $0x30] sm:$0xff] %v1080
  %1094 = vst [vmem:[#allocation3 + $0x38] sm:$0xff] %v1084
  %1095 = vst [vmem:[#allocation3 + $0x40] sm:$0xff] %v1073
  %1096 = vst [vmem:[#allocation3 + $0x48] sm:$0xff] %v1077
  %1097 = vst [vmem:[#allocation3 + $0x50] sm:$0xff] %v1081
  %1098 = vst [vmem:[#allocation3 + $0x58] sm:$0xff] %v1085
  %1099 = vst [vmem:[#allocation3 + $0x60] sm:$0xff] %v1074
  %1100 = vst [vmem:[#allocation3 + $0x68] sm:$0xff] %v1078
  %1101 = vst [vmem:[#allocation3 + $0x70] sm:$0xff] %v1082
  %1102 = vst [vmem:[#allocation3 + $0x78] sm:$0xff] %v1086
  %v1103 = vld [vmem:[#allocation3] sm:$0xff]
  %v1104 = vld [vmem:[#allocation3 + $0x8] sm:$0xff]
  %v1105 = vld [vmem:[#allocation3 + $0x10] sm:$0xff]
  %v1106 = vld [vmem:[#allocation3 + $0x18] sm:$0xff]
  %v1107 = vld [vmem:[#allocation3 + $0x20] sm:$0xff]
  %v1108 = vld [vmem:[#allocation3 + $0x28] sm:$0xff]
  %v1109 = vld [vmem:[#allocation3 + $0x30] sm:$0xff]
  %v1110 = vld [vmem:[#allocation3 + $0x38] sm:$0xff]
  %v1111 = vld [vmem:[#allocation3 + $0x40] sm:$0xff]
  %v1112 = vld [vmem:[#allocation3 + $0x48] sm:$0xff]
  %v1113 = vld [vmem:[#allocation3 + $0x50] sm:$0xff]
  %v1114 = vld [vmem:[#allocation3 + $0x58] sm:$0xff]
  %v1115 = vld [vmem:[#allocation3 + $0x60] sm:$0xff]
  %v1116 = vld [vmem:[#allocation3 + $0x68] sm:$0xff]
  %v1117 = vld [vmem:[#allocation3 + $0x70] sm:$0xff]
  %v1118 = vld [vmem:[#allocation3 + $0x78] sm:$0xff]
  %v1119 = vld [vmem:[%s5] sm:$0xff]
  %v1120 = vld [vmem:[%s5 + $0x8] sm:$0xff]
  %v1121 = vld [vmem:[%s5 + $0x10] sm:$0xff]
  %v1122 = vld [vmem:[%s5 + $0x18] sm:$0xff]
  %v1123 = vld [vmem:[%s5 + $0x20] sm:$0xff]
  %v1124 = vld [vmem:[%s5 + $0x28] sm:$0xff]
  %v1125 = vld [vmem:[%s5 + $0x30] sm:$0xff]
  %v1126 = vld [vmem:[%s5 + $0x38] sm:$0xff]
  %v1127 = vld [vmem:[%s6] sm:$0xff]
  %v1128 = vld [vmem:[%s6 + $0x8] sm:$0xff]
  %v1129 = vld [vmem:[%s6 + $0x10] sm:$0xff]
  %v1130 = vld [vmem:[%s6 + $0x18] sm:$0xff]
  %v1131 = vld [vmem:[%s6 + $0x20] sm:$0xff]
  %v1132 = vld [vmem:[%s6 + $0x28] sm:$0xff]
  %v1133 = vld [vmem:[%s6 + $0x30] sm:$0xff]
  %v1134 = vld [vmem:[%s6 + $0x38] sm:$0xff]
  %1136 = vset.pattern.permute.xlu0 0
  %1137 = vperm.xlu0 %1136, %v1127
  %v1138 = vpop.permute.xlu0 %1137
  %1141 = vset.pattern.permute.xlu0 0
  %1142 = vperm.xlu0 %1141, %v1128
  %v1143 = vpop.permute.xlu0 %1142
  %1146 = vset.pattern.permute.xlu0 0
  %1147 = vperm.xlu0 %1146, %v1129
  %v1148 = vpop.permute.xlu0 %1147
  %1151 = vset.pattern.permute.xlu0 0
  %1152 = vperm.xlu0 %1151, %v1130
  %v1153 = vpop.permute.xlu0 %1152
  %1156 = vset.pattern.permute.xlu0 0
  %1157 = vperm.xlu0 %1156, %v1131
  %v1158 = vpop.permute.xlu0 %1157
  %1161 = vset.pattern.permute.xlu0 0
  %1162 = vperm.xlu0 %1161, %v1132
  %v1163 = vpop.permute.xlu0 %1162
  %1166 = vset.pattern.permute.xlu0 0
  %1167 = vperm.xlu0 %1166, %v1133
  %v1168 = vpop.permute.xlu0 %1167
  %1171 = vset.pattern.permute.xlu0 0
  %1172 = vperm.xlu0 %1171, %v1134
  %v1173 = vpop.permute.xlu0 %1172
  %1175 = vmatprep.subr.mxu0 0.0
  %1176 = vmatpush1.msra.mxu0 %v1103
  %1177 = vmatprep.subr.mxu0 0.0
  %1178 = vmatpush1.msra.mxu0 %v1104
  %1179 = vmatprep.subr.mxu0 0.0
  %1180 = vmatpush1.msra.mxu0 %v1105
  %1181 = vmatprep.subr.mxu0 0.0
  %1182 = vmatpush1.msra.mxu0 %v1106
  %1183 = vmatprep.subr.mxu0 0.0
  %1184 = vmatpush1.msra.mxu0 %v1107
  %1185 = vmatprep.subr.mxu0 0.0
  %1186 = vmatpush1.msra.mxu0 %v1108
  %1187 = vmatprep.subr.mxu0 0.0
  %1188 = vmatpush1.msra.mxu0 %v1109
  %1189 = vmatprep.subr.mxu0 0.0
  %1190 = vmatpush1.msra.mxu0 %v1110
  %1191 = vmatprep.subr.mxu0 0.0
  %1192 = vmatpush1.msra.mxu0 %v1111
  %1193 = vmatprep.subr.mxu0 0.0
  %1194 = vmatpush1.msra.mxu0 %v1112
  %1195 = vmatprep.subr.mxu0 0.0
  %1196 = vmatpush1.msra.mxu0 %v1113
  %1197 = vmatprep.subr.mxu0 0.0
  %1198 = vmatpush1.msra.mxu0 %v1114
  %1199 = vmatprep.subr.mxu0 0.0
  %1200 = vmatpush1.msra.mxu0 %v1115
  %1201 = vmatprep.subr.mxu0 0.0
  %1202 = vmatpush1.msra.mxu0 %v1116
  %1203 = vmatprep.subr.mxu0 0.0
  %1204 = vmatpush1.msra.mxu0 %v1117
  %1205 = vmatprep.subr.mxu0 0.0
  %1206 = vmatpush1.msra.mxu0 %v1118
  %1207 = vmatprep.subr.mxu0 0.0
  %1208 = vmatpush1.msra.mxu0 0.0
  %1209 = vmatprep.subr.mxu0 0.0
  %1210 = vmatpush1.msra.mxu0 0.0
  %1211 = vmatprep.subr.mxu0 0.0
  %1212 = vmatpush1.msra.mxu0 0.0
  %1213 = vmatprep.subr.mxu0 0.0
  %1214 = vmatpush1.msra.mxu0 0.0
  %1215 = vmatprep.subr.mxu0 0.0
  %1216 = vmatpush1.msra.mxu0 0.0
  %1217 = vmatprep.subr.mxu0 0.0
  %1218 = vmatpush1.msra.mxu0 0.0
  %1219 = vmatprep.subr.mxu0 0.0
  %1220 = vmatpush1.msra.mxu0 0.0
  %1221 = vmatprep.subr.mxu0 0.0
  %1222 = vmatpush1.msra.mxu0 0.0
  %1223 = vmatprep.subr.mxu0 0.0
  %1224 = vmatpush1.msra.mxu0 0.0
  %1225 = vmatprep.subr.mxu0 0.0
  %1226 = vmatpush1.msra.mxu0 0.0
  %1227 = vmatprep.subr.mxu0 0.0
  %1228 = vmatpush1.msra.mxu0 0.0
  %1229 = vmatprep.subr.mxu0 0.0
  %1230 = vmatpush1.msra.mxu0 0.0
  %1231 = vmatprep.subr.mxu0 0.0
  %1232 = vmatpush1.msra.mxu0 0.0
  %1233 = vmatprep.subr.mxu0 0.0
  %1234 = vmatpush1.msra.mxu0 0.0
  %1235 = vmatprep.subr.mxu0 0.0
  %1236 = vmatpush1.msra.mxu0 0.0
  %1237 = vmatprep.subr.mxu0 0.0
  %1238 = vmatpush1.msra.mxu0 0.0
  %1239 = vmatprep.mubr.f32.mxu0 0.0
  %1240 = vmatmul.mubr.f32.gmra.mrb[0].mxu0 %v1119
  %v1241 = vpop.f32.mrb[0].mxu0
  %v1242 = vadd.f32 %v1138, %v1241
  %v1243 = vpop.f32.mrb[0].mxu0
  %1244 = vmatprep.mubr.f32.mxu0 0.0
  %1245 = vmatmul.mubr.f32.gmra.mrb[0].mxu0 %v1120
  %v1246 = vpop.f32.mrb[0].mxu0
  %v1247 = vadd.f32 %v1143, %v1246
  %v1248 = vpop.f32.mrb[0].mxu0
  %1249 = vmatprep.mubr.f32.mxu0 0.0
  %1250 = vmatmul.mubr.f32.gmra.mrb[0].mxu0 %v1121
  %v1251 = vpop.f32.mrb[0].mxu0
  %v1252 = vadd.f32 %v1148, %v1251
  %v1253 = vpop.f32.mrb[0].mxu0
  %1254 = vmatprep.mubr.f32.mxu0 0.0
  %1255 = vmatmul.mubr.f32.gmra.mrb[0].mxu0 %v1122
  %v1256 = vpop.f32.mrb[0].mxu0
  %v1257 = vadd.f32 %v1153, %v1256
  %v1258 = vpop.f32.mrb[0].mxu0
  %1259 = vmatprep.mubr.f32.mxu0 0.0
  %1260 = vmatmul.mubr.f32.gmra.mrb[0].mxu0 %v1123
  %v1261 = vpop.f32.mrb[0].mxu0
  %v1262 = vadd.f32 %v1158, %v1261
  %v1263 = vpop.f32.mrb[0].mxu0
  %1264 = vmatprep.mubr.f32.mxu0 0.0
  %1265 = vmatmul.mubr.f32.gmra.mrb[0].mxu0 %v1124
  %v1266 = vpop.f32.mrb[0].mxu0
  %v1267 = vadd.f32 %v1163, %v1266
  %v1268 = vpop.f32.mrb[0].mxu0
  %1269 = vmatprep.mubr.f32.mxu0 0.0
  %1270 = vmatmul.mubr.f32.gmra.mrb[0].mxu0 %v1125
  %v1271 = vpop.f32.mrb[0].mxu0
  %v1272 = vadd.f32 %v1168, %v1271
  %v1273 = vpop.f32.mrb[0].mxu0
  %1274 = vmatprep.mubr.f32.mxu0 0.0
  %1275 = vmatmul.mubr.f32.gmra.mrb[0].mxu0 %v1126
  %v1276 = vpop.f32.mrb[0].mxu0
  %v1277 = vadd.f32 %v1173, %v1276
  %v1278 = vpop.f32.mrb[0].mxu0
  %1279 = vdwg.mxu0
  %v1280 = vmax.f32 %v1242, 0.0
  %v1281 = vmax.f32 %v1247, 0.0
  %v1282 = vmax.f32 %v1252, 0.0
  %v1283 = vmax.f32 %v1257, 0.0
  %v1284 = vmax.f32 %v1262, 0.0
  %v1285 = vmax.f32 %v1267, 0.0
  %v1286 = vmax.f32 %v1272, 0.0
  %v1287 = vmax.f32 %v1277, 0.0
  %vm1288 = vcmask 261120
  %1289 = vst.msk [vmem:[#allocation4] sm:$0xff] %vm1288, %v1280
  %1290 = vst.msk [vmem:[#allocation4 + $0x8] sm:$0xff] %vm1288, %v1281
  %1291 = vst.msk [vmem:[#allocation4 + $0x10] sm:$0xff] %vm1288, %v1282
  %1292 = vst.msk [vmem:[#allocation4 + $0x18] sm:$0xff] %vm1288, %v1283
  %1293 = vst.msk [vmem:[#allocation4 + $0x20] sm:$0xff] %vm1288, %v1284
  %1294 = vst.msk [vmem:[#allocation4 + $0x28] sm:$0xff] %vm1288, %v1285
  %1295 = vst.msk [vmem:[#allocation4 + $0x30] sm:$0xff] %vm1288, %v1286
  %1296 = vst.msk [vmem:[#allocation4 + $0x38] sm:$0xff] %vm1288, %v1287
  %1305 = vrot.lane.b32.xlu0 %v1280, 96
  %v1306 = vpop.permute.xlu0 %1305
  %1307 = vrot.lane.b32.xlu0 %v1281, 96
  %v1308 = vpop.permute.xlu0 %1307
  %1309 = vrot.lane.b32.xlu0 %v1282, 96
  %v1310 = vpop.permute.xlu0 %1309
  %1311 = vrot.lane.b32.xlu0 %v1283, 96
  %v1312 = vpop.permute.xlu0 %1311
  %1313 = vrot.lane.b32.xlu0 %v1284, 96
  %v1314 = vpop.permute.xlu0 %1313
  %1315 = vrot.lane.b32.xlu0 %v1285, 96
  %v1316 = vpop.permute.xlu0 %1315
  %1317 = vrot.lane.b32.xlu0 %v1286, 96
  %v1318 = vpop.permute.xlu0 %1317
  %1319 = vrot.lane.b32.xlu0 %v1287, 96
  %v1320 = vpop.permute.xlu0 %1319
  %1329 = vst.msk [vmem:[#allocation4 + $0x40] sm:$0xff] %vm1288, %v1306
  %1330 = vst.msk [vmem:[#allocation4 + $0x48] sm:$0xff] %vm1288, %v1308
  %1331 = vst.msk [vmem:[#allocation4 + $0x50] sm:$0xff] %vm1288, %v1310
  %1332 = vst.msk [vmem:[#allocation4 + $0x58] sm:$0xff] %vm1288, %v1312
  %1333 = vst.msk [vmem:[#allocation4 + $0x60] sm:$0xff] %vm1288, %v1314
  %1334 = vst.msk [vmem:[#allocation4 + $0x68] sm:$0xff] %vm1288, %v1316
  %1335 = vst.msk [vmem:[#allocation4 + $0x70] sm:$0xff] %vm1288, %v1318
  %1336 = vst.msk [vmem:[#allocation4 + $0x78] sm:$0xff] %vm1288, %v1320
  %1337 = vrot.lane.b32.xlu0 %v1280, 64
  %v1338 = vpop.permute.xlu0 %1337
  %1339 = vrot.lane.b32.xlu0 %v1281, 64
  %v1340 = vpop.permute.xlu0 %1339
  %1341 = vrot.lane.b32.xlu0 %v1282, 64
  %v1342 = vpop.permute.xlu0 %1341
  %1343 = vrot.lane.b32.xlu0 %v1283, 64
  %v1344 = vpop.permute.xlu0 %1343
  %1345 = vrot.lane.b32.xlu0 %v1284, 64
  %v1346 = vpop.permute.xlu0 %1345
  %1347 = vrot.lane.b32.xlu0 %v1285, 64
  %v1348 = vpop.permute.xlu0 %1347
  %1349 = vrot.lane.b32.xlu0 %v1286, 64
  %v1350 = vpop.permute.xlu0 %1349
  %1351 = vrot.lane.b32.xlu0 %v1287, 64
  %v1352 = vpop.permute.xlu0 %1351
  %1361 = vst.msk [vmem:[#allocation4 + $0x80] sm:$0xff] %vm1288, %v1338
  %1362 = vst.msk [vmem:[#allocation4 + $0x88] sm:$0xff] %vm1288, %v1340
  %1363 = vst.msk [vmem:[#allocation4 + $0x90] sm:$0xff] %vm1288, %v1342
  %1364 = vst.msk [vmem:[#allocation4 + $0x98] sm:$0xff] %vm1288, %v1344
  %1365 = vst.msk [vmem:[#allocation4 + $0xa0] sm:$0xff] %vm1288, %v1346
  %1366 = vst.msk [vmem:[#allocation4 + $0xa8] sm:$0xff] %vm1288, %v1348
  %1367 = vst.msk [vmem:[#allocation4 + $0xb0] sm:$0xff] %vm1288, %v1350
  %1368 = vst.msk [vmem:[#allocation4 + $0xb8] sm:$0xff] %vm1288, %v1352
  %1369 = vrot.lane.b32.xlu0 %v1280, 32
  %v1370 = vpop.permute.xlu0 %1369
  %1371 = vrot.lane.b32.xlu0 %v1281, 32
  %v1372 = vpop.permute.xlu0 %1371
  %1373 = vrot.lane.b32.xlu0 %v1282, 32
  %v1374 = vpop.permute.xlu0 %1373
  %1375 = vrot.lane.b32.xlu0 %v1283, 32
  %v1376 = vpop.permute.xlu0 %1375
  %1377 = vrot.lane.b32.xlu0 %v1284, 32
  %v1378 = vpop.permute.xlu0 %1377
  %1379 = vrot.lane.b32.xlu0 %v1285, 32
  %v1380 = vpop.permute.xlu0 %1379
  %1381 = vrot.lane.b32.xlu0 %v1286, 32
  %v1382 = vpop.permute.xlu0 %1381
  %1383 = vrot.lane.b32.xlu0 %v1287, 32
  %v1384 = vpop.permute.xlu0 %1383
  %1393 = vst.msk [vmem:[#allocation4 + $0xc0] sm:$0xff] %vm1288, %v1370
  %1394 = vst.msk [vmem:[#allocation4 + $0xc8] sm:$0xff] %vm1288, %v1372
  %1395 = vst.msk [vmem:[#allocation4 + $0xd0] sm:$0xff] %vm1288, %v1374
  %1396 = vst.msk [vmem:[#allocation4 + $0xd8] sm:$0xff] %vm1288, %v1376
  %1397 = vst.msk [vmem:[#allocation4 + $0xe0] sm:$0xff] %vm1288, %v1378
  %1398 = vst.msk [vmem:[#allocation4 + $0xe8] sm:$0xff] %vm1288, %v1380
  %1399 = vst.msk [vmem:[#allocation4 + $0xf0] sm:$0xff] %vm1288, %v1382
  %1400 = vst.msk [vmem:[#allocation4 + $0xf8] sm:$0xff] %vm1288, %v1384
  %v1401 = vld [vmem:[#allocation4] sm:$0xff]
  %v1402 = vld [vmem:[#allocation4 + $0x8] sm:$0xff]
  %v1403 = vld [vmem:[#allocation4 + $0x10] sm:$0xff]
  %v1404 = vld [vmem:[#allocation4 + $0x18] sm:$0xff]
  %v1405 = vld [vmem:[#allocation4 + $0x20] sm:$0xff]
  %v1406 = vld [vmem:[#allocation4 + $0x28] sm:$0xff]
  %v1407 = vld [vmem:[#allocation4 + $0x30] sm:$0xff]
  %v1408 = vld [vmem:[#allocation4 + $0x38] sm:$0xff]
  %v1409 = vld [vmem:[#allocation4 + $0x40] sm:$0xff]
  %v1410 = vld [vmem:[#allocation4 + $0x48] sm:$0xff]
  %v1411 = vld [vmem:[#allocation4 + $0x50] sm:$0xff]
  %v1412 = vld [vmem:[#allocation4 + $0x58] sm:$0xff]
  %v1413 = vld [vmem:[#allocation4 + $0x60] sm:$0xff]
  %v1414 = vld [vmem:[#allocation4 + $0x68] sm:$0xff]
  %v1415 = vld [vmem:[#allocation4 + $0x70] sm:$0xff]
  %v1416 = vld [vmem:[#allocation4 + $0x78] sm:$0xff]
  %v1417 = vld [vmem:[#allocation4 + $0x80] sm:$0xff]
  %v1418 = vld [vmem:[#allocation4 + $0x88] sm:$0xff]
  %v1419 = vld [vmem:[#allocation4 + $0x90] sm:$0xff]
  %v1420 = vld [vmem:[#allocation4 + $0x98] sm:$0xff]
  %v1421 = vld [vmem:[#allocation4 + $0xa0] sm:$0xff]
  %v1422 = vld [vmem:[#allocation4 + $0xa8] sm:$0xff]
  %v1423 = vld [vmem:[#allocation4 + $0xb0] sm:$0xff]
  %v1424 = vld [vmem:[#allocation4 + $0xb8] sm:$0xff]
  %v1425 = vld [vmem:[#allocation4 + $0xc0] sm:$0xff]
  %v1426 = vld [vmem:[#allocation4 + $0xc8] sm:$0xff]
  %v1427 = vld [vmem:[#allocation4 + $0xd0] sm:$0xff]
  %v1428 = vld [vmem:[#allocation4 + $0xd8] sm:$0xff]
  %v1429 = vld [vmem:[#allocation4 + $0xe0] sm:$0xff]
  %v1430 = vld [vmem:[#allocation4 + $0xe8] sm:$0xff]
  %v1431 = vld [vmem:[#allocation4 + $0xf0] sm:$0xff]
  %v1432 = vld [vmem:[#allocation4 + $0xf8] sm:$0xff]
  %v1433 = vld [vmem:[%s7] sm:$0xff]
  %v1434 = vld [vmem:[%s7 + $0x8] sm:$0xff]
  %v1435 = vld [vmem:[%s7 + $0x10] sm:$0xff]
  %v1436 = vld [vmem:[%s7 + $0x18] sm:$0xff]
  %v1437 = vld [vmem:[%s7 + $0x20] sm:$0xff]
  %v1438 = vld [vmem:[%s7 + $0x28] sm:$0xff]
  %v1439 = vld [vmem:[%s7 + $0x30] sm:$0xff]
  %v1440 = vld [vmem:[%s7 + $0x38] sm:$0xff]
  %v1441 = vld [vmem:[%s7 + $0x40] sm:$0xff]
  %v1442 = vld [vmem:[%s7 + $0x48] sm:$0xff]
  %v1443 = vld [vmem:[%s7 + $0x50] sm:$0xff]
  %v1444 = vld [vmem:[%s7 + $0x58] sm:$0xff]
  %v1445 = vld [vmem:[%s7 + $0x60] sm:$0xff]
  %v1446 = vld [vmem:[%s7 + $0x68] sm:$0xff]
  %v1447 = vld [vmem:[%s7 + $0x70] sm:$0xff]
  %v1448 = vld [vmem:[%s7 + $0x78] sm:$0xff]
  %v1449 = vld [vmem:[%s7 + $0x80] sm:$0xff]
  %v1450 = vld [vmem:[%s7 + $0x88] sm:$0xff]
  %v1451 = vld [vmem:[%s7 + $0x90] sm:$0xff]
  %v1452 = vld [vmem:[%s7 + $0x98] sm:$0xff]
  %v1453 = vld [vmem:[%s7 + $0xa0] sm:$0xff]
  %v1454 = vld [vmem:[%s7 + $0xa8] sm:$0xff]
  %v1455 = vld [vmem:[%s7 + $0xb0] sm:$0xff]
  %v1456 = vld [vmem:[%s7 + $0xb8] sm:$0xff]
  %v1457 = vld [vmem:[%s7 + $0xc0] sm:$0xff]
  %v1458 = vld [vmem:[%s7 + $0xc8] sm:$0xff]
  %v1459 = vld [vmem:[%s7 + $0xd0] sm:$0xff]
  %v1460 = vld [vmem:[%s7 + $0xd8] sm:$0xff]
  %v1461 = vld [vmem:[%s7 + $0xe0] sm:$0xff]
  %v1462 = vld [vmem:[%s7 + $0xe8] sm:$0xff]
  %v1463 = vld [vmem:[%s7 + $0xf0] sm:$0xff]
  %v1464 = vld [vmem:[%s7 + $0xf8] sm:$0xff]
  %v1465 = vld [vmem:[%s8] sm:$0xff]
  %v1466 = vld [vmem:[%s8 + $0x8] sm:$0xff]
  %v1467 = vld [vmem:[%s8 + $0x10] sm:$0xff]
  %v1468 = vld [vmem:[%s8 + $0x18] sm:$0xff]
  %v1469 = vld [vmem:[%s8 + $0x20] sm:$0xff]
  %v1470 = vld [vmem:[%s8 + $0x28] sm:$0xff]
  %v1471 = vld [vmem:[%s8 + $0x30] sm:$0xff]
  %v1472 = vld [vmem:[%s8 + $0x38] sm:$0xff]
  %v1473 = vld [vmem:[%s8 + $0x40] sm:$0xff]
  %v1474 = vld [vmem:[%s8 + $0x48] sm:$0xff]
  %v1475 = vld [vmem:[%s8 + $0x50] sm:$0xff]
  %v1476 = vld [vmem:[%s8 + $0x58] sm:$0xff]
  %v1477 = vld [vmem:[%s8 + $0x60] sm:$0xff]
  %v1478 = vld [vmem:[%s8 + $0x68] sm:$0xff]
  %v1479 = vld [vmem:[%s8 + $0x70] sm:$0xff]
  %v1480 = vld [vmem:[%s8 + $0x78] sm:$0xff]
  %1482 = vset.pattern.permute.xlu0 0
  %1483 = vperm.xlu0 %1482, %v1465
  %v1484 = vpop.permute.xlu0 %1483
  %1487 = vset.pattern.permute.xlu0 0
  %1488 = vperm.xlu0 %1487, %v1466
  %v1489 = vpop.permute.xlu0 %1488
  %1492 = vset.pattern.permute.xlu0 0
  %1493 = vperm.xlu0 %1492, %v1467
  %v1494 = vpop.permute.xlu0 %1493
  %1497 = vset.pattern.permute.xlu0 0
  %1498 = vperm.xlu0 %1497, %v1468
  %v1499 = vpop.permute.xlu0 %1498
  %1502 = vset.pattern.permute.xlu0 0
  %1503 = vperm.xlu0 %1502, %v1469
  %v1504 = vpop.permute.xlu0 %1503
  %1507 = vset.pattern.permute.xlu0 0
  %1508 = vperm.xlu0 %1507, %v1470
  %v1509 = vpop.permute.xlu0 %1508
  %1512 = vset.pattern.permute.xlu0 0
  %1513 = vperm.xlu0 %1512, %v1471
  %v1514 = vpop.permute.xlu0 %1513
  %1517 = vset.pattern.permute.xlu0 0
  %1518 = vperm.xlu0 %1517, %v1472
  %v1519 = vpop.permute.xlu0 %1518
  %1522 = vset.pattern.permute.xlu0 0
  %1523 = vperm.xlu0 %1522, %v1473
  %v1524 = vpop.permute.xlu0 %1523
  %1527 = vset.pattern.permute.xlu0 0
  %1528 = vperm.xlu0 %1527, %v1474
  %v1529 = vpop.permute.xlu0 %1528
  %1532 = vset.pattern.permute.xlu0 0
  %1533 = vperm.xlu0 %1532, %v1475
  %v1534 = vpop.permute.xlu0 %1533
  %1537 = vset.pattern.permute.xlu0 0
  %1538 = vperm.xlu0 %1537, %v1476
  %v1539 = vpop.permute.xlu0 %1538
  %1542 = vset.pattern.permute.xlu0 0
  %1543 = vperm.xlu0 %1542, %v1477
  %v1544 = vpop.permute.xlu0 %1543
  %1547 = vset.pattern.permute.xlu0 0
  %1548 = vperm.xlu0 %1547, %v1478
  %v1549 = vpop.permute.xlu0 %1548
  %1552 = vset.pattern.permute.xlu0 0
  %1553 = vperm.xlu0 %1552, %v1479
  %v1554 = vpop.permute.xlu0 %1553
  %1557 = vset.pattern.permute.xlu0 0
  %1558 = vperm.xlu0 %1557, %v1480
  %v1559 = vpop.permute.xlu0 %1558
  %1561 = vmatprep.subr.mxu0 0.0
  %1562 = vmatpush1.msra.mxu0 %v1401
  %1563 = vmatprep.subr.mxu0 0.0
  %1564 = vmatpush1.msra.mxu0 %v1402
  %1565 = vmatprep.subr.mxu0 0.0
  %1566 = vmatpush1.msra.mxu0 %v1403
  %1567 = vmatprep.subr.mxu0 0.0
  %1568 = vmatpush1.msra.mxu0 %v1404
  %1569 = vmatprep.subr.mxu0 0.0
  %1570 = vmatpush1.msra.mxu0 %v1405
  %1571 = vmatprep.subr.mxu0 0.0
  %1572 = vmatpush1.msra.mxu0 %v1406
  %1573 = vmatprep.subr.mxu0 0.0
  %1574 = vmatpush1.msra.mxu0 %v1407
  %1575 = vmatprep.subr.mxu0 0.0
  %1576 = vmatpush1.msra.mxu0 %v1408
  %1577 = vmatprep.subr.mxu0 0.0
  %1578 = vmatpush1.msra.mxu0 %v1409
  %1579 = vmatprep.subr.mxu0 0.0
  %1580 = vmatpush1.msra.mxu0 %v1410
  %1581 = vmatprep.subr.mxu0 0.0
  %1582 = vmatpush1.msra.mxu0 %v1411
  %1583 = vmatprep.subr.mxu0 0.0
  %1584 = vmatpush1.msra.mxu0 %v1412
  %1585 = vmatprep.subr.mxu0 0.0
  %1586 = vmatpush1.msra.mxu0 %v1413
  %1587 = vmatprep.subr.mxu0 0.0
  %1588 = vmatpush1.msra.mxu0 %v1414
  %1589 = vmatprep.subr.mxu0 0.0
  %1590 = vmatpush1.msra.mxu0 %v1415
  %1591 = vmatprep.subr.mxu0 0.0
  %1592 = vmatpush1.msra.mxu0 %v1416
  %1593 = vmatprep.subr.mxu0 0.0
  %1594 = vmatpush1.msra.mxu0 %v1417
  %1595 = vmatprep.subr.mxu0 0.0
  %1596 = vmatpush1.msra.mxu0 %v1418
  %1597 = vmatprep.subr.mxu0 0.0
  %1598 = vmatpush1.msra.mxu0 %v1419
  %1599 = vmatprep.subr.mxu0 0.0
  %1600 = vmatpush1.msra.mxu0 %v1420
  %1601 = vmatprep.subr.mxu0 0.0
  %1602 = vmatpush1.msra.mxu0 %v1421
  %1603 = vmatprep.subr.mxu0 0.0
  %1604 = vmatpush1.msra.mxu0 %v1422
  %1605 = vmatprep.subr.mxu0 0.0
  %1606 = vmatpush1.msra.mxu0 %v1423
  %1607 = vmatprep.subr.mxu0 0.0
  %1608 = vmatpush1.msra.mxu0 %v1424
  %1609 = vmatprep.subr.mxu0 0.0
  %1610 = vmatpush1.msra.mxu0 %v1425
  %1611 = vmatprep.subr.mxu0 0.0
  %1612 = vmatpush1.msra.mxu0 %v1426
  %1613 = vmatprep.subr.mxu0 0.0
  %1614 = vmatpush1.msra.mxu0 %v1427
  %1615 = vmatprep.subr.mxu0 0.0
  %1616 = vmatpush1.msra.mxu0 %v1428
  %1617 = vmatprep.subr.mxu0 0.0
  %1618 = vmatpush1.msra.mxu0 %v1429
  %1619 = vmatprep.subr.mxu0 0.0
  %1620 = vmatpush1.msra.mxu0 %v1430
  %1621 = vmatprep.subr.mxu0 0.0
  %1622 = vmatpush1.msra.mxu0 %v1431
  %1623 = vmatprep.subr.mxu0 0.0
  %1624 = vmatpush1.msra.mxu0 %v1432
  %1625 = vmatprep.mubr.f32.mxu0 %v1434
  %1626 = vmatmul.mubr.f32.gmra.mrb[0].mxu0 %v1433
  %v1627 = vpop.f32.mrb[0].mxu0
  %v1628 = vadd.f32 %v1484, %v1627
  %v1629 = vpop.f32.mrb[0].mxu0
  %1630 = vmatprep.mubr.f32.mxu0 %v1436
  %1631 = vmatmul.mubr.f32.gmra.mrb[0].mxu0 %v1435
  %v1632 = vpop.f32.mrb[0].mxu0
  %v1633 = vadd.f32 %v1489, %v1632
  %v1634 = vpop.f32.mrb[0].mxu0
  %1635 = vmatprep.mubr.f32.mxu0 %v1438
  %1636 = vmatmul.mubr.f32.gmra.mrb[0].mxu0 %v1437
  %v1637 = vpop.f32.mrb[0].mxu0
  %v1638 = vadd.f32 %v1494, %v1637
  %v1639 = vpop.f32.mrb[0].mxu0
  %1640 = vmatprep.mubr.f32.mxu0 %v1440
  %1641 = vmatmul.mubr.f32.gmra.mrb[0].mxu0 %v1439
  %v1642 = vpop.f32.mrb[0].mxu0
  %v1643 = vadd.f32 %v1499, %v1642
  %v1644 = vpop.f32.mrb[0].mxu0
  %1645 = vmatprep.mubr.f32.mxu0 %v1442
  %1646 = vmatmul.mubr.f32.gmra.mrb[0].mxu0 %v1441
  %v1647 = vpop.f32.mrb[0].mxu0
  %v1648 = vadd.f32 %v1504, %v1647
  %v1649 = vpop.f32.mrb[0].mxu0
  %1650 = vmatprep.mubr.f32.mxu0 %v1444
  %1651 = vmatmul.mubr.f32.gmra.mrb[0].mxu0 %v1443
  %v1652 = vpop.f32.mrb[0].mxu0
  %v1653 = vadd.f32 %v1509, %v1652
  %v1654 = vpop.f32.mrb[0].mxu0
  %1655 = vmatprep.mubr.f32.mxu0 %v1446
  %1656 = vmatmul.mubr.f32.gmra.mrb[0].mxu0 %v1445
  %v1657 = vpop.f32.mrb[0].mxu0
  %v1658 = vadd.f32 %v1514, %v1657
  %v1659 = vpop.f32.mrb[0].mxu0
  %1660 = vmatprep.mubr.f32.mxu0 %v1448
  %1661 = vmatmul.mubr.f32.gmra.mrb[0].mxu0 %v1447
  %v1662 = vpop.f32.mrb[0].mxu0
  %v1663 = vadd.f32 %v1519, %v1662
  %v1664 = vpop.f32.mrb[0].mxu0
  %1665 = vmatprep.mubr.f32.mxu0 %v1450
  %1666 = vmatmul.mubr.f32.gmra.mrb[0].mxu0 %v1449
  %v1667 = vpop.f32.mrb[0].mxu0
  %v1668 = vadd.f32 %v1524, %v1667
  %v1669 = vpop.f32.mrb[0].mxu0
  %1670 = vmatprep.mubr.f32.mxu0 %v1452
  %1671 = vmatmul.mubr.f32.gmra.mrb[0].mxu0 %v1451
  %v1672 = vpop.f32.mrb[0].mxu0
  %v1673 = vadd.f32 %v1529, %v1672
  %v1674 = vpop.f32.mrb[0].mxu0
  %1675 = vmatprep.mubr.f32.mxu0 %v1454
  %1676 = vmatmul.mubr.f32.gmra.mrb[0].mxu0 %v1453
  %v1677 = vpop.f32.mrb[0].mxu0
  %v1678 = vadd.f32 %v1534, %v1677
  %v1679 = vpop.f32.mrb[0].mxu0
  %1680 = vmatprep.mubr.f32.mxu0 %v1456
  %1681 = vmatmul.mubr.f32.gmra.mrb[0].mxu0 %v1455
  %v1682 = vpop.f32.mrb[0].mxu0
  %v1683 = vadd.f32 %v1539, %v1682
  %v1684 = vpop.f32.mrb[0].mxu0
  %1685 = vmatprep.mubr.f32.mxu0 %v1458
  %1686 = vmatmul.mubr.f32.gmra.mrb[0].mxu0 %v1457
  %v1687 = vpop.f32.mrb[0].mxu0
  %v1688 = vadd.f32 %v1544, %v1687
  %v1689 = vpop.f32.mrb[0].mxu0
  %1690 = vmatprep.mubr.f32.mxu0 %v1460
  %1691 = vmatmul.mubr.f32.gmra.mrb[0].mxu0 %v1459
  %v1692 = vpop.f32.mrb[0].mxu0
  %v1693 = vadd.f32 %v1549, %v1692
  %v1694 = vpop.f32.mrb[0].mxu0
  %1695 = vmatprep.mubr.f32.mxu0 %v1462
  %1696 = vmatmul.mubr.f32.gmra.mrb[0].mxu0 %v1461
  %v1697 = vpop.f32.mrb[0].mxu0
  %v1698 = vadd.f32 %v1554, %v1697
  %v1699 = vpop.f32.mrb[0].mxu0
  %1700 = vmatprep.mubr.f32.mxu0 %v1464
  %1701 = vmatmul.mubr.f32.gmra.mrb[0].mxu0 %v1463
  %v1702 = vpop.f32.mrb[0].mxu0
  %v1703 = vadd.f32 %v1559, %v1702
  %v1704 = vpop.f32.mrb[0].mxu0
  %1705 = vdwg.mxu0
  %v1706 = vmax.f32 %v1628, 0.0
  %v1707 = vmax.f32 %v1633, 0.0
  %v1708 = vmax.f32 %v1638, 0.0
  %v1709 = vmax.f32 %v1643, 0.0
  %v1710 = vmax.f32 %v1648, 0.0
  %v1711 = vmax.f32 %v1653, 0.0
  %v1712 = vmax.f32 %v1658, 0.0
  %v1713 = vmax.f32 %v1663, 0.0
  %v1714 = vmax.f32 %v1668, 0.0
  %v1715 = vmax.f32 %v1673, 0.0
  %v1716 = vmax.f32 %v1678, 0.0
  %v1717 = vmax.f32 %v1683, 0.0
  %v1718 = vmax.f32 %v1688, 0.0
  %v1719 = vmax.f32 %v1693, 0.0
  %v1720 = vmax.f32 %v1698, 0.0
  %v1721 = vmax.f32 %v1703, 0.0
  %vm1722 = vcmask 64512
  %1723 = vst.msk [vmem:[#allocation5] sm:$0xff] %vm1722, %v1706
  %1724 = vst.msk [vmem:[#allocation5 + $0x8] sm:$0xff] %vm1722, %v1707
  %1725 = vst.msk [vmem:[#allocation5 + $0x10] sm:$0xff] %vm1722, %v1708
  %1726 = vst.msk [vmem:[#allocation5 + $0x18] sm:$0xff] %vm1722, %v1709
  %1727 = vst.msk [vmem:[#allocation5 + $0x20] sm:$0xff] %vm1722, %v1710
  %1728 = vst.msk [vmem:[#allocation5 + $0x28] sm:$0xff] %vm1722, %v1711
  %1729 = vst.msk [vmem:[#allocation5 + $0x30] sm:$0xff] %vm1722, %v1712
  %1730 = vst.msk [vmem:[#allocation5 + $0x38] sm:$0xff] %vm1722, %v1713
  %1731 = vst.msk [vmem:[#allocation5 + $0x40] sm:$0xff] %vm1722, %v1714
  %1732 = vst.msk [vmem:[#allocation5 + $0x48] sm:$0xff] %vm1722, %v1715
  %1733 = vst.msk [vmem:[#allocation5 + $0x50] sm:$0xff] %vm1722, %v1716
  %1734 = vst.msk [vmem:[#allocation5 + $0x58] sm:$0xff] %vm1722, %v1717
  %1735 = vst.msk [vmem:[#allocation5 + $0x60] sm:$0xff] %vm1722, %v1718
  %1736 = vst.msk [vmem:[#allocation5 + $0x68] sm:$0xff] %vm1722, %v1719
  %1737 = vst.msk [vmem:[#allocation5 + $0x70] sm:$0xff] %vm1722, %v1720
  %1738 = vst.msk [vmem:[#allocation5 + $0x78] sm:$0xff] %vm1722, %v1721
  %1755 = vrot.lane.b32.xlu0 %v1706, 120
  %v1756 = vpop.permute.xlu0 %1755
  %1757 = vrot.lane.b32.xlu0 %v1707, 120
  %v1758 = vpop.permute.xlu0 %1757
  %1759 = vrot.lane.b32.xlu0 %v1708, 120
  %v1760 = vpop.permute.xlu0 %1759
  %1761 = vrot.lane.b32.xlu0 %v1709, 120
  %v1762 = vpop.permute.xlu0 %1761
  %1763 = vrot.lane.b32.xlu0 %v1710, 120
  %v1764 = vpop.permute.xlu0 %1763
  %1765 = vrot.lane.b32.xlu0 %v1711, 120
  %v1766 = vpop.permute.xlu0 %1765
  %1767 = vrot.lane.b32.xlu0 %v1712, 120
  %v1768 = vpop.permute.xlu0 %1767
  %1769 = vrot.lane.b32.xlu0 %v1713, 120
  %v1770 = vpop.permute.xlu0 %1769
  %1771 = vrot.lane.b32.xlu0 %v1714, 120
  %v1772 = vpop.permute.xlu0 %1771
  %1773 = vrot.lane.b32.xlu0 %v1715, 120
  %v1774 = vpop.permute.xlu0 %1773
  %1775 = vrot.lane.b32.xlu0 %v1716, 120
  %v1776 = vpop.permute.xlu0 %1775
  %1777 = vrot.lane.b32.xlu0 %v1717, 120
  %v1778 = vpop.permute.xlu0 %1777
  %1779 = vrot.lane.b32.xlu0 %v1718, 120
  %v1780 = vpop.permute.xlu0 %1779
  %1781 = vrot.lane.b32.xlu0 %v1719, 120
  %v1782 = vpop.permute.xlu0 %1781
  %1783 = vrot.lane.b32.xlu0 %v1720, 120
  %v1784 = vpop.permute.xlu0 %1783
  %1785 = vrot.lane.b32.xlu0 %v1721, 120
  %v1786 = vpop.permute.xlu0 %1785
  %1803 = vst.msk [vmem:[#allocation5 + $0x80] sm:$0xff] %vm1722, %v1756
  %1804 = vst.msk [vmem:[#allocation5 + $0x88] sm:$0xff] %vm1722, %v1758
  %1805 = vst.msk [vmem:[#allocation5 + $0x90] sm:$0xff] %vm1722, %v1760
  %1806 = vst.msk [vmem:[#allocation5 + $0x98] sm:$0xff] %vm1722, %v1762
  %1807 = vst.msk [vmem:[#allocation5 + $0xa0] sm:$0xff] %vm1722, %v1764
  %1808 = vst.msk [vmem:[#allocation5 + $0xa8] sm:$0xff] %vm1722, %v1766
  %1809 = vst.msk [vmem:[#allocation5 + $0xb0] sm:$0xff] %vm1722, %v1768
  %1810 = vst.msk [vmem:[#allocation5 + $0xb8] sm:$0xff] %vm1722, %v1770
  %1811 = vst.msk [vmem:[#allocation5 + $0xc0] sm:$0xff] %vm1722, %v1772
  %1812 = vst.msk [vmem:[#allocation5 + $0xc8] sm:$0xff] %vm1722, %v1774
  %1813 = vst.msk [vmem:[#allocation5 + $0xd0] sm:$0xff] %vm1722, %v1776
  %1814 = vst.msk [vmem:[#allocation5 + $0xd8] sm:$0xff] %vm1722, %v1778
  %1815 = vst.msk [vmem:[#allocation5 + $0xe0] sm:$0xff] %vm1722, %v1780
  %1816 = vst.msk [vmem:[#allocation5 + $0xe8] sm:$0xff] %vm1722, %v1782
  %1817 = vst.msk [vmem:[#allocation5 + $0xf0] sm:$0xff] %vm1722, %v1784
  %1818 = vst.msk [vmem:[#allocation5 + $0xf8] sm:$0xff] %vm1722, %v1786
  %1819 = vrot.lane.b32.xlu0 %v1706, 112
  %v1820 = vpop.permute.xlu0 %1819
  %1821 = vrot.lane.b32.xlu0 %v1707, 112
  %v1822 = vpop.permute.xlu0 %1821
  %1823 = vrot.lane.b32.xlu0 %v1708, 112
  %v1824 = vpop.permute.xlu0 %1823
  %1825 = vrot.lane.b32.xlu0 %v1709, 112
  %v1826 = vpop.permute.xlu0 %1825
  %1827 = vrot.lane.b32.xlu0 %v1710, 112
  %v1828 = vpop.permute.xlu0 %1827
  %1829 = vrot.lane.b32.xlu0 %v1711, 112
  %v1830 = vpop.permute.xlu0 %1829
  %1831 = vrot.lane.b32.xlu0 %v1712, 112
  %v1832 = vpop.permute.xlu0 %1831
  %1833 = vrot.lane.b32.xlu0 %v1713, 112
  %v1834 = vpop.permute.xlu0 %1833
  %1835 = vrot.lane.b32.xlu0 %v1714, 112
  %v1836 = vpop.permute.xlu0 %1835
  %1837 = vrot.lane.b32.xlu0 %v1715, 112
  %v1838 = vpop.permute.xlu0 %1837
  %1839 = vrot.lane.b32.xlu0 %v1716, 112
  %v1840 = vpop.permute.xlu0 %1839
  %1841 = vrot.lane.b32.xlu0 %v1717, 112
  %v1842 = vpop.permute.xlu0 %1841
  %1843 = vrot.lane.b32.xlu0 %v1718, 112
  %v1844 = vpop.permute.xlu0 %1843
  %1845 = vrot.lane.b32.xlu0 %v1719, 112
  %v1846 = vpop.permute.xlu0 %1845
  %1847 = vrot.lane.b32.xlu0 %v1720, 112
  %v1848 = vpop.permute.xlu0 %1847
  %1849 = vrot.lane.b32.xlu0 %v1721, 112
  %v1850 = vpop.permute.xlu0 %1849
  %1867 = vst.msk [vmem:[#allocation5 + $0x100] sm:$0xff] %vm1722, %v1820
  %1868 = vst.msk [vmem:[#allocation5 + $0x108] sm:$0xff] %vm1722, %v1822
  %1869 = vst.msk [vmem:[#allocation5 + $0x110] sm:$0xff] %vm1722, %v1824
  %1870 = vst.msk [vmem:[#allocation5 + $0x118] sm:$0xff] %vm1722, %v1826
  %1871 = vst.msk [vmem:[#allocation5 + $0x120] sm:$0xff] %vm1722, %v1828
  %1872 = vst.msk [vmem:[#allocation5 + $0x128] sm:$0xff] %vm1722, %v1830
  %1873 = vst.msk [vmem:[#allocation5 + $0x130] sm:$0xff] %vm1722, %v1832
  %1874 = vst.msk [vmem:[#allocation5 + $0x138] sm:$0xff] %vm1722, %v1834
  %1875 = vst.msk [vmem:[#allocation5 + $0x140] sm:$0xff] %vm1722, %v1836
  %1876 = vst.msk [vmem:[#allocation5 + $0x148] sm:$0xff] %vm1722, %v1838
  %1877 = vst.msk [vmem:[#allocation5 + $0x150] sm:$0xff] %vm1722, %v1840
  %1878 = vst.msk [vmem:[#allocation5 + $0x158] sm:$0xff] %vm1722, %v1842
  %1879 = vst.msk [vmem:[#allocation5 + $0x160] sm:$0xff] %vm1722, %v1844
  %1880 = vst.msk [vmem:[#allocation5 + $0x168] sm:$0xff] %vm1722, %v1846
  %1881 = vst.msk [vmem:[#allocation5 + $0x170] sm:$0xff] %vm1722, %v1848
  %1882 = vst.msk [vmem:[#allocation5 + $0x178] sm:$0xff] %vm1722, %v1850
  %1883 = vrot.lane.b32.xlu0 %v1706, 104
  %v1884 = vpop.permute.xlu0 %1883
  %1885 = vrot.lane.b32.xlu0 %v1707, 104
  %v1886 = vpop.permute.xlu0 %1885
  %1887 = vrot.lane.b32.xlu0 %v1708, 104
  %v1888 = vpop.permute.xlu0 %1887
  %1889 = vrot.lane.b32.xlu0 %v1709, 104
  %v1890 = vpop.permute.xlu0 %1889
  %1891 = vrot.lane.b32.xlu0 %v1710, 104
  %v1892 = vpop.permute.xlu0 %1891
  %1893 = vrot.lane.b32.xlu0 %v1711, 104
  %v1894 = vpop.permute.xlu0 %1893
  %1895 = vrot.lane.b32.xlu0 %v1712, 104
  %v1896 = vpop.permute.xlu0 %1895
  %1897 = vrot.lane.b32.xlu0 %v1713, 104
  %v1898 = vpop.permute.xlu0 %1897
  %1899 = vrot.lane.b32.xlu0 %v1714, 104
  %v1900 = vpop.permute.xlu0 %1899
  %1901 = vrot.lane.b32.xlu0 %v1715, 104
  %v1902 = vpop.permute.xlu0 %1901
  %1903 = vrot.lane.b32.xlu0 %v1716, 104
  %v1904 = vpop.permute.xlu0 %1903
  %1905 = vrot.lane.b32.xlu0 %v1717, 104
  %v1906 = vpop.permute.xlu0 %1905
  %1907 = vrot.lane.b32.xlu0 %v1718, 104
  %v1908 = vpop.permute.xlu0 %1907
  %1909 = vrot.lane.b32.xlu0 %v1719, 104
  %v1910 = vpop.permute.xlu0 %1909
  %1911 = vrot.lane.b32.xlu0 %v1720, 104
  %v1912 = vpop.permute.xlu0 %1911
  %1913 = vrot.lane.b32.xlu0 %v1721, 104
  %v1914 = vpop.permute.xlu0 %1913
  %1931 = vst.msk [vmem:[#allocation5 + $0x180] sm:$0xff] %vm1722, %v1884
  %1932 = vst.msk [vmem:[#allocation5 + $0x188] sm:$0xff] %vm1722, %v1886
  %1933 = vst.msk [vmem:[#allocation5 + $0x190] sm:$0xff] %vm1722, %v1888
  %1934 = vst.msk [vmem:[#allocation5 + $0x198] sm:$0xff] %vm1722, %v1890
  %1935 = vst.msk [vmem:[#allocation5 + $0x1a0] sm:$0xff] %vm1722, %v1892
  %1936 = vst.msk [vmem:[#allocation5 + $0x1a8] sm:$0xff] %vm1722, %v1894
  %1937 = vst.msk [vmem:[#allocation5 + $0x1b0] sm:$0xff] %vm1722, %v1896
  %1938 = vst.msk [vmem:[#allocation5 + $0x1b8] sm:$0xff] %vm1722, %v1898
  %1939 = vst.msk [vmem:[#allocation5 + $0x1c0] sm:$0xff] %vm1722, %v1900
  %1940 = vst.msk [vmem:[#allocation5 + $0x1c8] sm:$0xff] %vm1722, %v1902
  %1941 = vst.msk [vmem:[#allocation5 + $0x1d0] sm:$0xff] %vm1722, %v1904
  %1942 = vst.msk [vmem:[#allocation5 + $0x1d8] sm:$0xff] %vm1722, %v1906
  %1943 = vst.msk [vmem:[#allocation5 + $0x1e0] sm:$0xff] %vm1722, %v1908
  %1944 = vst.msk [vmem:[#allocation5 + $0x1e8] sm:$0xff] %vm1722, %v1910
  %1945 = vst.msk [vmem:[#allocation5 + $0x1f0] sm:$0xff] %vm1722, %v1912
  %1946 = vst.msk [vmem:[#allocation5 + $0x1f8] sm:$0xff] %vm1722, %v1914
  %v1947 = vld [vmem:[#allocation5] sm:$0xff]
  %v1948 = vld [vmem:[#allocation5 + $0x8] sm:$0xff]
  %v1949 = vld [vmem:[#allocation5 + $0x10] sm:$0xff]
  %v1950 = vld [vmem:[#allocation5 + $0x18] sm:$0xff]
  %v1951 = vld [vmem:[#allocation5 + $0x20] sm:$0xff]
  %v1952 = vld [vmem:[#allocation5 + $0x28] sm:$0xff]
  %v1953 = vld [vmem:[#allocation5 + $0x30] sm:$0xff]
  %v1954 = vld [vmem:[#allocation5 + $0x38] sm:$0xff]
  %v1955 = vld [vmem:[#allocation5 + $0x40] sm:$0xff]
  %v1956 = vld [vmem:[#allocation5 + $0x48] sm:$0xff]
  %v1957 = vld [vmem:[#allocation5 + $0x50] sm:$0xff]
  %v1958 = vld [vmem:[#allocation5 + $0x58] sm:$0xff]
  %v1959 = vld [vmem:[#allocation5 + $0x60] sm:$0xff]
  %v1960 = vld [vmem:[#allocation5 + $0x68] sm:$0xff]
  %v1961 = vld [vmem:[#allocation5 + $0x70] sm:$0xff]
  %v1962 = vld [vmem:[#allocation5 + $0x78] sm:$0xff]
  %v1963 = vld [vmem:[#allocation5 + $0x80] sm:$0xff]
  %v1964 = vld [vmem:[#allocation5 + $0x88] sm:$0xff]
  %v1965 = vld [vmem:[#allocation5 + $0x90] sm:$0xff]
  %v1966 = vld [vmem:[#allocation5 + $0x98] sm:$0xff]
  %v1967 = vld [vmem:[#allocation5 + $0xa0] sm:$0xff]
  %v1968 = vld [vmem:[#allocation5 + $0xa8] sm:$0xff]
  %v1969 = vld [vmem:[#allocation5 + $0xb0] sm:$0xff]
  %v1970 = vld [vmem:[#allocation5 + $0xb8] sm:$0xff]
  %v1971 = vld [vmem:[#allocation5 + $0xc0] sm:$0xff]
  %v1972 = vld [vmem:[#allocation5 + $0xc8] sm:$0xff]
  %v1973 = vld [vmem:[#allocation5 + $0xd0] sm:$0xff]
  %v1974 = vld [vmem:[#allocation5 + $0xd8] sm:$0xff]
  %v1975 = vld [vmem:[#allocation5 + $0xe0] sm:$0xff]
  %v1976 = vld [vmem:[#allocation5 + $0xe8] sm:$0xff]
  %v1977 = vld [vmem:[#allocation5 + $0xf0] sm:$0xff]
  %v1978 = vld [vmem:[#allocation5 + $0xf8] sm:$0xff]
  %v1979 = vld [vmem:[#allocation5 + $0x100] sm:$0xff]
  %v1980 = vld [vmem:[#allocation5 + $0x108] sm:$0xff]
  %v1981 = vld [vmem:[#allocation5 + $0x110] sm:$0xff]
  %v1982 = vld [vmem:[#allocation5 + $0x118] sm:$0xff]
  %v1983 = vld [vmem:[#allocation5 + $0x120] sm:$0xff]
  %v1984 = vld [vmem:[#allocation5 + $0x128] sm:$0xff]
  %v1985 = vld [vmem:[#allocation5 + $0x130] sm:$0xff]
  %v1986 = vld [vmem:[#allocation5 + $0x138] sm:$0xff]
  %v1987 = vld [vmem:[#allocation5 + $0x140] sm:$0xff]
  %v1988 = vld [vmem:[#allocation5 + $0x148] sm:$0xff]
  %v1989 = vld [vmem:[#allocation5 + $0x150] sm:$0xff]
  %v1990 = vld [vmem:[#allocation5 + $0x158] sm:$0xff]
  %v1991 = vld [vmem:[#allocation5 + $0x160] sm:$0xff]
  %v1992 = vld [vmem:[#allocation5 + $0x168] sm:$0xff]
  %v1993 = vld [vmem:[#allocation5 + $0x170] sm:$0xff]
  %v1994 = vld [vmem:[#allocation5 + $0x178] sm:$0xff]
  %v1995 = vld [vmem:[#allocation5 + $0x180] sm:$0xff]
  %v1996 = vld [vmem:[#allocation5 + $0x188] sm:$0xff]
  %v1997 = vld [vmem:[#allocation5 + $0x190] sm:$0xff]
  %v1998 = vld [vmem:[#allocation5 + $0x198] sm:$0xff]
  %v1999 = vld [vmem:[#allocation5 + $0x1a0] sm:$0xff]
  %v2000 = vld [vmem:[#allocation5 + $0x1a8] sm:$0xff]
  %v2001 = vld [vmem:[#allocation5 + $0x1b0] sm:$0xff]
  %v2002 = vld [vmem:[#allocation5 + $0x1b8] sm:$0xff]
  %v2003 = vld [vmem:[#allocation5 + $0x1c0] sm:$0xff]
  %v2004 = vld [vmem:[#allocation5 + $0x1c8] sm:$0xff]
  %v2005 = vld [vmem:[#allocation5 + $0x1d0] sm:$0xff]
  %v2006 = vld [vmem:[#allocation5 + $0x1d8] sm:$0xff]
  %v2007 = vld [vmem:[#allocation5 + $0x1e0] sm:$0xff]
  %v2008 = vld [vmem:[#allocation5 + $0x1e8] sm:$0xff]
  %v2009 = vld [vmem:[#allocation5 + $0x1f0] sm:$0xff]
  %v2010 = vld [vmem:[#allocation5 + $0x1f8] sm:$0xff]
  %v2011 = vld [vmem:[%s9] sm:$0xff]
  %v2012 = vld [vmem:[%s9 + $0x8] sm:$0xff]
  %v2013 = vld [vmem:[%s9 + $0x10] sm:$0xff]
  %v2014 = vld [vmem:[%s9 + $0x18] sm:$0xff]
  %v2015 = vld [vmem:[%s9 + $0x20] sm:$0xff]
  %v2016 = vld [vmem:[%s9 + $0x28] sm:$0xff]
  %v2017 = vld [vmem:[%s9 + $0x30] sm:$0xff]
  %v2018 = vld [vmem:[%s9 + $0x38] sm:$0xff]
  %v2019 = vld [vmem:[%s9 + $0x40] sm:$0xff]
  %v2020 = vld [vmem:[%s9 + $0x48] sm:$0xff]
  %v2021 = vld [vmem:[%s9 + $0x50] sm:$0xff]
  %v2022 = vld [vmem:[%s9 + $0x58] sm:$0xff]
  %v2023 = vld [vmem:[%s9 + $0x60] sm:$0xff]
  %v2024 = vld [vmem:[%s9 + $0x68] sm:$0xff]
  %v2025 = vld [vmem:[%s9 + $0x70] sm:$0xff]
  %v2026 = vld [vmem:[%s9 + $0x78] sm:$0xff]
  %v2027 = vld [vmem:[%s9 + $0x80] sm:$0xff]
  %v2028 = vld [vmem:[%s9 + $0x88] sm:$0xff]
  %v2029 = vld [vmem:[%s9 + $0x90] sm:$0xff]
  %v2030 = vld [vmem:[%s9 + $0x98] sm:$0xff]
  %v2031 = vld [vmem:[%s9 + $0xa0] sm:$0xff]
  %v2032 = vld [vmem:[%s9 + $0xa8] sm:$0xff]
  %v2033 = vld [vmem:[%s9 + $0xb0] sm:$0xff]
  %v2034 = vld [vmem:[%s9 + $0xb8] sm:$0xff]
  %v2035 = vld [vmem:[%s9 + $0xc0] sm:$0xff]
  %v2036 = vld [vmem:[%s9 + $0xc8] sm:$0xff]
  %v2037 = vld [vmem:[%s9 + $0xd0] sm:$0xff]
  %v2038 = vld [vmem:[%s9 + $0xd8] sm:$0xff]
  %v2039 = vld [vmem:[%s9 + $0xe0] sm:$0xff]
  %v2040 = vld [vmem:[%s9 + $0xe8] sm:$0xff]
  %v2041 = vld [vmem:[%s9 + $0xf0] sm:$0xff]
  %v2042 = vld [vmem:[%s9 + $0xf8] sm:$0xff]
  %v2043 = vld [vmem:[%s9 + $0x100] sm:$0xff]
  %v2044 = vld [vmem:[%s9 + $0x108] sm:$0xff]
  %v2045 = vld [vmem:[%s9 + $0x110] sm:$0xff]
  %v2046 = vld [vmem:[%s9 + $0x118] sm:$0xff]
  %v2047 = vld [vmem:[%s9 + $0x120] sm:$0xff]
  %v2048 = vld [vmem:[%s9 + $0x128] sm:$0xff]
  %v2049 = vld [vmem:[%s9 + $0x130] sm:$0xff]
  %v2050 = vld [vmem:[%s9 + $0x138] sm:$0xff]
  %v2051 = vld [vmem:[%s9 + $0x140] sm:$0xff]
  %v2052 = vld [vmem:[%s9 + $0x148] sm:$0xff]
  %v2053 = vld [vmem:[%s9 + $0x150] sm:$0xff]
  %v2054 = vld [vmem:[%s9 + $0x158] sm:$0xff]
  %v2055 = vld [vmem:[%s9 + $0x160] sm:$0xff]
  %v2056 = vld [vmem:[%s9 + $0x168] sm:$0xff]
  %v2057 = vld [vmem:[%s9 + $0x170] sm:$0xff]
  %v2058 = vld [vmem:[%s9 + $0x178] sm:$0xff]
  %v2059 = vld [vmem:[%s9 + $0x180] sm:$0xff]
  %v2060 = vld [vmem:[%s9 + $0x188] sm:$0xff]
  %v2061 = vld [vmem:[%s9 + $0x190] sm:$0xff]
  %v2062 = vld [vmem:[%s9 + $0x198] sm:$0xff]
  %v2063 = vld [vmem:[%s9 + $0x1a0] sm:$0xff]
  %v2064 = vld [vmem:[%s9 + $0x1a8] sm:$0xff]
  %v2065 = vld [vmem:[%s9 + $0x1b0] sm:$0xff]
  %v2066 = vld [vmem:[%s9 + $0x1b8] sm:$0xff]
  %v2067 = vld [vmem:[%s9 + $0x1c0] sm:$0xff]
  %v2068 = vld [vmem:[%s9 + $0x1c8] sm:$0xff]
  %v2069 = vld [vmem:[%s9 + $0x1d0] sm:$0xff]
  %v2070 = vld [vmem:[%s9 + $0x1d8] sm:$0xff]
  %v2071 = vld [vmem:[%s9 + $0x1e0] sm:$0xff]
  %v2072 = vld [vmem:[%s9 + $0x1e8] sm:$0xff]
  %v2073 = vld [vmem:[%s9 + $0x1f0] sm:$0xff]
  %v2074 = vld [vmem:[%s9 + $0x1f8] sm:$0xff]
  %v2075 = vld [vmem:[%s9 + $0x200] sm:$0xff]
  %v2076 = vld [vmem:[%s9 + $0x208] sm:$0xff]
  %v2077 = vld [vmem:[%s9 + $0x210] sm:$0xff]
  %v2078 = vld [vmem:[%s9 + $0x218] sm:$0xff]
  %v2079 = vld [vmem:[%s9 + $0x220] sm:$0xff]
  %v2080 = vld [vmem:[%s9 + $0x228] sm:$0xff]
  %v2081 = vld [vmem:[%s9 + $0x230] sm:$0xff]
  %v2082 = vld [vmem:[%s9 + $0x238] sm:$0xff]
  %v2083 = vld [vmem:[%s9 + $0x240] sm:$0xff]
  %v2084 = vld [vmem:[%s9 + $0x248] sm:$0xff]
  %v2085 = vld [vmem:[%s9 + $0x250] sm:$0xff]
  %v2086 = vld [vmem:[%s9 + $0x258] sm:$0xff]
  %v2087 = vld [vmem:[%s9 + $0x260] sm:$0xff]
  %v2088 = vld [vmem:[%s9 + $0x268] sm:$0xff]
  %v2089 = vld [vmem:[%s9 + $0x270] sm:$0xff]
  %v2090 = vld [vmem:[%s9 + $0x278] sm:$0xff]
  %v2091 = vld [vmem:[%s9 + $0x280] sm:$0xff]
  %v2092 = vld [vmem:[%s9 + $0x288] sm:$0xff]
  %v2093 = vld [vmem:[%s9 + $0x290] sm:$0xff]
  %v2094 = vld [vmem:[%s9 + $0x298] sm:$0xff]
  %v2095 = vld [vmem:[%s9 + $0x2a0] sm:$0xff]
  %v2096 = vld [vmem:[%s9 + $0x2a8] sm:$0xff]
  %v2097 = vld [vmem:[%s9 + $0x2b0] sm:$0xff]
  %v2098 = vld [vmem:[%s9 + $0x2b8] sm:$0xff]
  %v2099 = vld [vmem:[%s9 + $0x2c0] sm:$0xff]
  %v2100 = vld [vmem:[%s9 + $0x2c8] sm:$0xff]
  %v2101 = vld [vmem:[%s9 + $0x2d0] sm:$0xff]
  %v2102 = vld [vmem:[%s9 + $0x2d8] sm:$0xff]
  %v2103 = vld [vmem:[%s9 + $0x2e0] sm:$0xff]
  %v2104 = vld [vmem:[%s9 + $0x2e8] sm:$0xff]
  %v2105 = vld [vmem:[%s9 + $0x2f0] sm:$0xff]
  %v2106 = vld [vmem:[%s9 + $0x2f8] sm:$0xff]
  %v2107 = vld [vmem:[%s9 + $0x300] sm:$0xff]
  %v2108 = vld [vmem:[%s9 + $0x308] sm:$0xff]
  %v2109 = vld [vmem:[%s9 + $0x310] sm:$0xff]
  %v2110 = vld [vmem:[%s9 + $0x318] sm:$0xff]
  %v2111 = vld [vmem:[%s9 + $0x320] sm:$0xff]
  %v2112 = vld [vmem:[%s9 + $0x328] sm:$0xff]
  %v2113 = vld [vmem:[%s9 + $0x330] sm:$0xff]
  %v2114 = vld [vmem:[%s9 + $0x338] sm:$0xff]
  %v2115 = vld [vmem:[%s9 + $0x340] sm:$0xff]
  %v2116 = vld [vmem:[%s9 + $0x348] sm:$0xff]
  %v2117 = vld [vmem:[%s9 + $0x350] sm:$0xff]
  %v2118 = vld [vmem:[%s9 + $0x358] sm:$0xff]
  %v2119 = vld [vmem:[%s9 + $0x360] sm:$0xff]
  %v2120 = vld [vmem:[%s9 + $0x368] sm:$0xff]
  %v2121 = vld [vmem:[%s9 + $0x370] sm:$0xff]
  %v2122 = vld [vmem:[%s9 + $0x378] sm:$0xff]
  %v2123 = vld [vmem:[%s9 + $0x380] sm:$0xff]
  %v2124 = vld [vmem:[%s9 + $0x388] sm:$0xff]
  %v2125 = vld [vmem:[%s9 + $0x390] sm:$0xff]
  %v2126 = vld [vmem:[%s9 + $0x398] sm:$0xff]
  %v2127 = vld [vmem:[%s9 + $0x3a0] sm:$0xff]
  %v2128 = vld [vmem:[%s9 + $0x3a8] sm:$0xff]
  %v2129 = vld [vmem:[%s9 + $0x3b0] sm:$0xff]
  %v2130 = vld [vmem:[%s9 + $0x3b8] sm:$0xff]
  %v2131 = vld [vmem:[%s9 + $0x3c0] sm:$0xff]
  %v2132 = vld [vmem:[%s9 + $0x3c8] sm:$0xff]
  %v2133 = vld [vmem:[%s9 + $0x3d0] sm:$0xff]
  %v2134 = vld [vmem:[%s9 + $0x3d8] sm:$0xff]
  %v2135 = vld [vmem:[%s9 + $0x3e0] sm:$0xff]
  %v2136 = vld [vmem:[%s9 + $0x3e8] sm:$0xff]
  %v2137 = vld [vmem:[%s9 + $0x3f0] sm:$0xff]
  %v2138 = vld [vmem:[%s9 + $0x3f8] sm:$0xff]
  %v2139 = vld [vmem:[%s10] sm:$0xff]
  %v2140 = vld [vmem:[%s10 + $0x8] sm:$0xff]
  %v2141 = vld [vmem:[%s10 + $0x10] sm:$0xff]
  %v2142 = vld [vmem:[%s10 + $0x18] sm:$0xff]
  %v2143 = vld [vmem:[%s10 + $0x20] sm:$0xff]
  %v2144 = vld [vmem:[%s10 + $0x28] sm:$0xff]
  %v2145 = vld [vmem:[%s10 + $0x30] sm:$0xff]
  %v2146 = vld [vmem:[%s10 + $0x38] sm:$0xff]
  %v2147 = vld [vmem:[%s10 + $0x40] sm:$0xff]
  %v2148 = vld [vmem:[%s10 + $0x48] sm:$0xff]
  %v2149 = vld [vmem:[%s10 + $0x50] sm:$0xff]
  %v2150 = vld [vmem:[%s10 + $0x58] sm:$0xff]
  %v2151 = vld [vmem:[%s10 + $0x60] sm:$0xff]
  %v2152 = vld [vmem:[%s10 + $0x68] sm:$0xff]
  %v2153 = vld [vmem:[%s10 + $0x70] sm:$0xff]
  %v2154 = vld [vmem:[%s10 + $0x78] sm:$0xff]
  %v2155 = vld [vmem:[%s10 + $0x80] sm:$0xff]
  %v2156 = vld [vmem:[%s10 + $0x88] sm:$0xff]
  %v2157 = vld [vmem:[%s10 + $0x90] sm:$0xff]
  %v2158 = vld [vmem:[%s10 + $0x98] sm:$0xff]
  %v2159 = vld [vmem:[%s10 + $0xa0] sm:$0xff]
  %v2160 = vld [vmem:[%s10 + $0xa8] sm:$0xff]
  %v2161 = vld [vmem:[%s10 + $0xb0] sm:$0xff]
  %v2162 = vld [vmem:[%s10 + $0xb8] sm:$0xff]
  %v2163 = vld [vmem:[%s10 + $0xc0] sm:$0xff]
  %v2164 = vld [vmem:[%s10 + $0xc8] sm:$0xff]
  %v2165 = vld [vmem:[%s10 + $0xd0] sm:$0xff]
  %v2166 = vld [vmem:[%s10 + $0xd8] sm:$0xff]
  %v2167 = vld [vmem:[%s10 + $0xe0] sm:$0xff]
  %v2168 = vld [vmem:[%s10 + $0xe8] sm:$0xff]
  %v2169 = vld [vmem:[%s10 + $0xf0] sm:$0xff]
  %v2170 = vld [vmem:[%s10 + $0xf8] sm:$0xff]
  %2172 = vset.pattern.permute.xlu0 0
  %2173 = vperm.xlu0 %2172, %v2139
  %v2174 = vpop.permute.xlu0 %2173
  %2177 = vset.pattern.permute.xlu0 0
  %2178 = vperm.xlu0 %2177, %v2140
  %v2179 = vpop.permute.xlu0 %2178
  %2182 = vset.pattern.permute.xlu0 0
  %2183 = vperm.xlu0 %2182, %v2141
  %v2184 = vpop.permute.xlu0 %2183
  %2187 = vset.pattern.permute.xlu0 0
  %2188 = vperm.xlu0 %2187, %v2142
  %v2189 = vpop.permute.xlu0 %2188
  %2192 = vset.pattern.permute.xlu0 0
  %2193 = vperm.xlu0 %2192, %v2143
  %v2194 = vpop.permute.xlu0 %2193
  %2197 = vset.pattern.permute.xlu0 0
  %2198 = vperm.xlu0 %2197, %v2144
  %v2199 = vpop.permute.xlu0 %2198
  %2202 = vset.pattern.permute.xlu0 0
  %2203 = vperm.xlu0 %2202, %v2145
  %v2204 = vpop.permute.xlu0 %2203
  %2207 = vset.pattern.permute.xlu0 0
  %2208 = vperm.xlu0 %2207, %v2146
  %v2209 = vpop.permute.xlu0 %2208
  %2212 = vset.pattern.permute.xlu0 0
  %2213 = vperm.xlu0 %2212, %v2147
  %v2214 = vpop.permute.xlu0 %2213
  %2217 = vset.pattern.permute.xlu0 0
  %2218 = vperm.xlu0 %2217, %v2148
  %v2219 = vpop.permute.xlu0 %2218
  %2222 = vset.pattern.permute.xlu0 0
  %2223 = vperm.xlu0 %2222, %v2149
  %v2224 = vpop.permute.xlu0 %2223
  %2227 = vset.pattern.permute.xlu0 0
  %2228 = vperm.xlu0 %2227, %v2150
  %v2229 = vpop.permute.xlu0 %2228
  %2232 = vset.pattern.permute.xlu0 0
  %2233 = vperm.xlu0 %2232, %v2151
  %v2234 = vpop.permute.xlu0 %2233
  %2237 = vset.pattern.permute.xlu0 0
  %2238 = vperm.xlu0 %2237, %v2152
  %v2239 = vpop.permute.xlu0 %2238
  %2242 = vset.pattern.permute.xlu0 0
  %2243 = vperm.xlu0 %2242, %v2153
  %v2244 = vpop.permute.xlu0 %2243
  %2247 = vset.pattern.permute.xlu0 0
  %2248 = vperm.xlu0 %2247, %v2154
  %v2249 = vpop.permute.xlu0 %2248
  %2252 = vset.pattern.permute.xlu0 0
  %2253 = vperm.xlu0 %2252, %v2155
  %v2254 = vpop.permute.xlu0 %2253
  %2257 = vset.pattern.permute.xlu0 0
  %2258 = vperm.xlu0 %2257, %v2156
  %v2259 = vpop.permute.xlu0 %2258
  %2262 = vset.pattern.permute.xlu0 0
  %2263 = vperm.xlu0 %2262, %v2157
  %v2264 = vpop.permute.xlu0 %2263
  %2267 = vset.pattern.permute.xlu0 0
  %2268 = vperm.xlu0 %2267, %v2158
  %v2269 = vpop.permute.xlu0 %2268
  %2272 = vset.pattern.permute.xlu0 0
  %2273 = vperm.xlu0 %2272, %v2159
  %v2274 = vpop.permute.xlu0 %2273
  %2277 = vset.pattern.permute.xlu0 0
  %2278 = vperm.xlu0 %2277, %v2160
  %v2279 = vpop.permute.xlu0 %2278
  %2282 = vset.pattern.permute.xlu0 0
  %2283 = vperm.xlu0 %2282, %v2161
  %v2284 = vpop.permute.xlu0 %2283
  %2287 = vset.pattern.permute.xlu0 0
  %2288 = vperm.xlu0 %2287, %v2162
  %v2289 = vpop.permute.xlu0 %2288
  %2292 = vset.pattern.permute.xlu0 0
  %2293 = vperm.xlu0 %2292, %v2163
  %v2294 = vpop.permute.xlu0 %2293
  %2297 = vset.pattern.permute.xlu0 0
  %2298 = vperm.xlu0 %2297, %v2164
  %v2299 = vpop.permute.xlu0 %2298
  %2302 = vset.pattern.permute.xlu0 0
  %2303 = vperm.xlu0 %2302, %v2165
  %v2304 = vpop.permute.xlu0 %2303
  %2307 = vset.pattern.permute.xlu0 0
  %2308 = vperm.xlu0 %2307, %v2166
  %v2309 = vpop.permute.xlu0 %2308
  %2312 = vset.pattern.permute.xlu0 0
  %2313 = vperm.xlu0 %2312, %v2167
  %v2314 = vpop.permute.xlu0 %2313
  %2317 = vset.pattern.permute.xlu0 0
  %2318 = vperm.xlu0 %2317, %v2168
  %v2319 = vpop.permute.xlu0 %2318
  %2322 = vset.pattern.permute.xlu0 0
  %2323 = vperm.xlu0 %2322, %v2169
  %v2324 = vpop.permute.xlu0 %2323
  %2327 = vset.pattern.permute.xlu0 0
  %2328 = vperm.xlu0 %2327, %v2170
  %v2329 = vpop.permute.xlu0 %2328
  %2331 = vmatprep.subr.mxu0 0.0
  %2332 = vmatpush1.msra.mxu0 %v1947
  %2333 = vmatprep.subr.mxu0 0.0
  %2334 = vmatpush1.msra.mxu0 %v1948
  %2335 = vmatprep.subr.mxu0 0.0
  %2336 = vmatpush1.msra.mxu0 %v1949
  %2337 = vmatprep.subr.mxu0 0.0
  %2338 = vmatpush1.msra.mxu0 %v1950
  %2339 = vmatprep.subr.mxu0 0.0
  %2340 = vmatpush1.msra.mxu0 %v1951
  %2341 = vmatprep.subr.mxu0 0.0
  %2342 = vmatpush1.msra.mxu0 %v1952
  %2343 = vmatprep.subr.mxu0 0.0
  %2344 = vmatpush1.msra.mxu0 %v1953
  %2345 = vmatprep.subr.mxu0 0.0
  %2346 = vmatpush1.msra.mxu0 %v1954
  %2347 = vmatprep.subr.mxu0 0.0
  %2348 = vmatpush1.msra.mxu0 %v1955
  %2349 = vmatprep.subr.mxu0 0.0
  %2350 = vmatpush1.msra.mxu0 %v1956
  %2351 = vmatprep.subr.mxu0 0.0
  %2352 = vmatpush1.msra.mxu0 %v1957
  %2353 = vmatprep.subr.mxu0 0.0
  %2354 = vmatpush1.msra.mxu0 %v1958
  %2355 = vmatprep.subr.mxu0 0.0
  %2356 = vmatpush1.msra.mxu0 %v1959
  %2357 = vmatprep.subr.mxu0 0.0
  %2358 = vmatpush1.msra.mxu0 %v1960
  %2359 = vmatprep.subr.mxu0 0.0
  %2360 = vmatpush1.msra.mxu0 %v1961
  %2361 = vmatprep.subr.mxu0 0.0
  %2362 = vmatpush1.msra.mxu0 %v1962
  %2363 = vmatprep.subr.mxu0 0.0
  %2364 = vmatpush1.msra.mxu0 %v1963
  %2365 = vmatprep.subr.mxu0 0.0
  %2366 = vmatpush1.msra.mxu0 %v1964
  %2367 = vmatprep.subr.mxu0 0.0
  %2368 = vmatpush1.msra.mxu0 %v1965
  %2369 = vmatprep.subr.mxu0 0.0
  %2370 = vmatpush1.msra.mxu0 %v1966
  %2371 = vmatprep.subr.mxu0 0.0
  %2372 = vmatpush1.msra.mxu0 %v1967
  %2373 = vmatprep.subr.mxu0 0.0
  %2374 = vmatpush1.msra.mxu0 %v1968
  %2375 = vmatprep.subr.mxu0 0.0
  %2376 = vmatpush1.msra.mxu0 %v1969
  %2377 = vmatprep.subr.mxu0 0.0
  %2378 = vmatpush1.msra.mxu0 %v1970
  %2379 = vmatprep.subr.mxu0 0.0
  %2380 = vmatpush1.msra.mxu0 %v1971
  %2381 = vmatprep.subr.mxu0 0.0
  %2382 = vmatpush1.msra.mxu0 %v1972
  %2383 = vmatprep.subr.mxu0 0.0
  %2384 = vmatpush1.msra.mxu0 %v1973
  %2385 = vmatprep.subr.mxu0 0.0
  %2386 = vmatpush1.msra.mxu0 %v1974
  %2387 = vmatprep.subr.mxu0 0.0
  %2388 = vmatpush1.msra.mxu0 %v1975
  %2389 = vmatprep.subr.mxu0 0.0
  %2390 = vmatpush1.msra.mxu0 %v1976
  %2391 = vmatprep.subr.mxu0 0.0
  %2392 = vmatpush1.msra.mxu0 %v1977
  %2393 = vmatprep.subr.mxu0 0.0
  %2394 = vmatpush1.msra.mxu0 %v1978
  %2395 = vmatprep.mubr.f32.mxu0 %v2012
  %2396 = vmatmul.mubr.f32.gmra.mrb[0].mxu0 %v2011
  %v2397 = vpop.f32.mrb[0].mxu0
  %v2398 = vadd.f32 %v2174, %v2397
  %v2399 = vpop.f32.mrb[0].mxu0
  %2400 = vmatprep.mubr.f32.mxu0 %v2016
  %2401 = vmatmul.mubr.f32.gmra.mrb[0].mxu0 %v2015
  %v2402 = vpop.f32.mrb[0].mxu0
  %v2403 = vadd.f32 %v2179, %v2402
  %v2404 = vpop.f32.mrb[0].mxu0
  %2405 = vmatprep.mubr.f32.mxu0 %v2020
  %2406 = vmatmul.mubr.f32.gmra.mrb[0].mxu0 %v2019
  %v2407 = vpop.f32.mrb[0].mxu0
  %v2408 = vadd.f32 %v2184, %v2407
  %v2409 = vpop.f32.mrb[0].mxu0
  %2410 = vmatprep.mubr.f32.mxu0 %v2024
  %2411 = vmatmul.mubr.f32.gmra.mrb[0].mxu0 %v2023
  %v2412 = vpop.f32.mrb[0].mxu0
  %v2413 = vadd.f32 %v2189, %v2412
  %v2414 = vpop.f32.mrb[0].mxu0
  %2415 = vmatprep.mubr.f32.mxu0 %v2028
  %2416 = vmatmul.mubr.f32.gmra.mrb[0].mxu0 %v2027
  %v2417 = vpop.f32.mrb[0].mxu0
  %v2418 = vadd.f32 %v2194, %v2417
  %v2419 = vpop.f32.mrb[0].mxu0
  %2420 = vmatprep.mubr.f32.mxu0 %v2032
  %2421 = vmatmul.mubr.f32.gmra.mrb[0].mxu0 %v2031
  %v2422 = vpop.f32.mrb[0].mxu0
  %v2423 = vadd.f32 %v2199, %v2422
  %v2424 = vpop.f32.mrb[0].mxu0
  %2425 = vmatprep.mubr.f32.mxu0 %v2036
  %2426 = vmatmul.mubr.f32.gmra.mrb[0].mxu0 %v2035
  %v2427 = vpop.f32.mrb[0].mxu0
  %v2428 = vadd.f32 %v2204, %v2427
  %v2429 = vpop.f32.mrb[0].mxu0
  %2430 = vmatprep.mubr.f32.mxu0 %v2040
  %2431 = vmatmul.mubr.f32.gmra.mrb[0].mxu0 %v2039
  %v2432 = vpop.f32.mrb[0].mxu0
  %v2433 = vadd.f32 %v2209, %v2432
  %v2434 = vpop.f32.mrb[0].mxu0
  %2435 = vmatprep.mubr.f32.mxu0 %v2044
  %2436 = vmatmul.mubr.f32.gmra.mrb[0].mxu0 %v2043
  %v2437 = vpop.f32.mrb[0].mxu0
  %v2438 = vadd.f32 %v2214, %v2437
  %v2439 = vpop.f32.mrb[0].mxu0
  %2440 = vmatprep.mubr.f32.mxu0 %v2048
  %2441 = vmatmul.mubr.f32.gmra.mrb[0].mxu0 %v2047
  %v2442 = vpop.f32.mrb[0].mxu0
  %v2443 = vadd.f32 %v2219, %v2442
  %v2444 = vpop.f32.mrb[0].mxu0
  %2445 = vmatprep.mubr.f32.mxu0 %v2052
  %2446 = vmatmul.mubr.f32.gmra.mrb[0].mxu0 %v2051
  %v2447 = vpop.f32.mrb[0].mxu0
  %v2448 = vadd.f32 %v2224, %v2447
  %v2449 = vpop.f32.mrb[0].mxu0
  %2450 = vmatprep.mubr.f32.mxu0 %v2056
  %2451 = vmatmul.mubr.f32.gmra.mrb[0].mxu0 %v2055
  %v2452 = vpop.f32.mrb[0].mxu0
  %v2453 = vadd.f32 %v2229, %v2452
  %v2454 = vpop.f32.mrb[0].mxu0
  %2455 = vmatprep.mubr.f32.mxu0 %v2060
  %2456 = vmatmul.mubr.f32.gmra.mrb[0].mxu0 %v2059
  %v2457 = vpop.f32.mrb[0].mxu0
  %v2458 = vadd.f32 %v2234, %v2457
  %v2459 = vpop.f32.mrb[0].mxu0
  %2460 = vmatprep.mubr.f32.mxu0 %v2064
  %2461 = vmatmul.mubr.f32.gmra.mrb[0].mxu0 %v2063
  %v2462 = vpop.f32.mrb[0].mxu0
  %v2463 = vadd.f32 %v2239, %v2462
  %v2464 = vpop.f32.mrb[0].mxu0
  %2465 = vmatprep.mubr.f32.mxu0 %v2068
  %2466 = vmatmul.mubr.f32.gmra.mrb[0].mxu0 %v2067
  %v2467 = vpop.f32.mrb[0].mxu0
  %v2468 = vadd.f32 %v2244, %v2467
  %v2469 = vpop.f32.mrb[0].mxu0
  %2470 = vmatprep.mubr.f32.mxu0 %v2072
  %2471 = vmatmul.mubr.f32.gmra.mrb[0].mxu0 %v2071
  %v2472 = vpop.f32.mrb[0].mxu0
  %v2473 = vadd.f32 %v2249, %v2472
  %v2474 = vpop.f32.mrb[0].mxu0
  %2475 = vmatprep.mubr.f32.mxu0 %v2076
  %2476 = vmatmul.mubr.f32.gmra.mrb[0].mxu0 %v2075
  %v2477 = vpop.f32.mrb[0].mxu0
  %v2478 = vadd.f32 %v2254, %v2477
  %v2479 = vpop.f32.mrb[0].mxu0
  %2480 = vmatprep.mubr.f32.mxu0 %v2080
  %2481 = vmatmul.mubr.f32.gmra.mrb[0].mxu0 %v2079
  %v2482 = vpop.f32.mrb[0].mxu0
  %v2483 = vadd.f32 %v2259, %v2482
  %v2484 = vpop.f32.mrb[0].mxu0
  %2485 = vmatprep.mubr.f32.mxu0 %v2084
  %2486 = vmatmul.mubr.f32.gmra.mrb[0].mxu0 %v2083
  %v2487 = vpop.f32.mrb[0].mxu0
  %v2488 = vadd.f32 %v2264, %v2487
  %v2489 = vpop.f32.mrb[0].mxu0
  %2490 = vmatprep.mubr.f32.mxu0 %v2088
  %2491 = vmatmul.mubr.f32.gmra.mrb[0].mxu0 %v2087
  %v2492 = vpop.f32.mrb[0].mxu0
  %v2493 = vadd.f32 %v2269, %v2492
  %v2494 = vpop.f32.mrb[0].mxu0
  %2495 = vmatprep.mubr.f32.mxu0 %v2092
  %2496 = vmatmul.mubr.f32.gmra.mrb[0].mxu0 %v2091
  %v2497 = vpop.f32.mrb[0].mxu0
  %v2498 = vadd.f32 %v2274, %v2497
  %v2499 = vpop.f32.mrb[0].mxu0
  %2500 = vmatprep.mubr.f32.mxu0 %v2096
  %2501 = vmatmul.mubr.f32.gmra.mrb[0].mxu0 %v2095
  %v2502 = vpop.f32.mrb[0].mxu0
  %v2503 = vadd.f32 %v2279, %v2502
  %v2504 = vpop.f32.mrb[0].mxu0
  %2505 = vmatprep.mubr.f32.mxu0 %v2100
  %2506 = vmatmul.mubr.f32.gmra.mrb[0].mxu0 %v2099
  %v2507 = vpop.f32.mrb[0].mxu0
  %v2508 = vadd.f32 %v2284, %v2507
  %v2509 = vpop.f32.mrb[0].mxu0
  %2510 = vmatprep.mubr.f32.mxu0 %v2104
  %2511 = vmatmul.mubr.f32.gmra.mrb[0].mxu0 %v2103
  %v2512 = vpop.f32.mrb[0].mxu0
  %v2513 = vadd.f32 %v2289, %v2512
  %v2514 = vpop.f32.mrb[0].mxu0
  %2515 = vmatprep.mubr.f32.mxu0 %v2108
  %2516 = vmatmul.mubr.f32.gmra.mrb[0].mxu0 %v2107
  %v2517 = vpop.f32.mrb[0].mxu0
  %v2518 = vadd.f32 %v2294, %v2517
  %v2519 = vpop.f32.mrb[0].mxu0
  %2520 = vmatprep.mubr.f32.mxu0 %v2112
  %2521 = vmatmul.mubr.f32.gmra.mrb[0].mxu0 %v2111
  %v2522 = vpop.f32.mrb[0].mxu0
  %v2523 = vadd.f32 %v2299, %v2522
  %v2524 = vpop.f32.mrb[0].mxu0
  %2525 = vmatprep.mubr.f32.mxu0 %v2116
  %2526 = vmatmul.mubr.f32.gmra.mrb[0].mxu0 %v2115
  %v2527 = vpop.f32.mrb[0].mxu0
  %v2528 = vadd.f32 %v2304, %v2527
  %v2529 = vpop.f32.mrb[0].mxu0
  %2530 = vmatprep.mubr.f32.mxu0 %v2120
  %2531 = vmatmul.mubr.f32.gmra.mrb[0].mxu0 %v2119
  %v2532 = vpop.f32.mrb[0].mxu0
  %v2533 = vadd.f32 %v2309, %v2532
  %v2534 = vpop.f32.mrb[0].mxu0
  %2535 = vmatprep.mubr.f32.mxu0 %v2124
  %2536 = vmatmul.mubr.f32.gmra.mrb[0].mxu0 %v2123
  %v2537 = vpop.f32.mrb[0].mxu0
  %v2538 = vadd.f32 %v2314, %v2537
  %v2539 = vpop.f32.mrb[0].mxu0
  %2540 = vmatprep.mubr.f32.mxu0 %v2128
  %2541 = vmatmul.mubr.f32.gmra.mrb[0].mxu0 %v2127
  %v2542 = vpop.f32.mrb[0].mxu0
  %v2543 = vadd.f32 %v2319, %v2542
  %v2544 = vpop.f32.mrb[0].mxu0
  %2545 = vmatprep.mubr.f32.mxu0 %v2132
  %2546 = vmatmul.mubr.f32.gmra.mrb[0].mxu0 %v2131
  %v2547 = vpop.f32.mrb[0].mxu0
  %v2548 = vadd.f32 %v2324, %v2547
  %v2549 = vpop.f32.mrb[0].mxu0
  %2550 = vmatprep.mubr.f32.mxu0 %v2136
  %2551 = vmatmul.mubr.f32.gmra.mrb[0].mxu0 %v2135
  %v2552 = vpop.f32.mrb[0].mxu0
  %v2553 = vadd.f32 %v2329, %v2552
  %v2554 = vpop.f32.mrb[0].mxu0
  %2555 = vdwg.mxu0
  %2556 = vmatprep.subr.mxu0 0.0
  %2557 = vmatpush1.msra.mxu0 %v1979
  %2558 = vmatprep.subr.mxu0 0.0
  %2559 = vmatpush1.msra.mxu0 %v1980
  %2560 = vmatprep.subr.mxu0 0.0
  %2561 = vmatpush1.msra.mxu0 %v1981
  %2562 = vmatprep.subr.mxu0 0.0
  %2563 = vmatpush1.msra.mxu0 %v1982
  %2564 = vmatprep.subr.mxu0 0.0
  %2565 = vmatpush1.msra.mxu0 %v1983
  %2566 = vmatprep.subr.mxu0 0.0
  %2567 = vmatpush1.msra.mxu0 %v1984
  %2568 = vmatprep.subr.mxu0 0.0
  %2569 = vmatpush1.msra.mxu0 %v1985
  %2570 = vmatprep.subr.mxu0 0.0
  %2571 = vmatpush1.msra.mxu0 %v1986
  %2572 = vmatprep.subr.mxu0 0.0
  %2573 = vmatpush1.msra.mxu0 %v1987
  %2574 = vmatprep.subr.mxu0 0.0
  %2575 = vmatpush1.msra.mxu0 %v1988
  %2576 = vmatprep.subr.mxu0 0.0
  %2577 = vmatpush1.msra.mxu0 %v1989
  %2578 = vmatprep.subr.mxu0 0.0
  %2579 = vmatpush1.msra.mxu0 %v1990
  %2580 = vmatprep.subr.mxu0 0.0
  %2581 = vmatpush1.msra.mxu0 %v1991
  %2582 = vmatprep.subr.mxu0 0.0
  %2583 = vmatpush1.msra.mxu0 %v1992
  %2584 = vmatprep.subr.mxu0 0.0
  %2585 = vmatpush1.msra.mxu0 %v1993
  %2586 = vmatprep.subr.mxu0 0.0
  %2587 = vmatpush1.msra.mxu0 %v1994
  %2588 = vmatprep.subr.mxu0 0.0
  %2589 = vmatpush1.msra.mxu0 %v1995
  %2590 = vmatprep.subr.mxu0 0.0
  %2591 = vmatpush1.msra.mxu0 %v1996
  %2592 = vmatprep.subr.mxu0 0.0
  %2593 = vmatpush1.msra.mxu0 %v1997
  %2594 = vmatprep.subr.mxu0 0.0
  %2595 = vmatpush1.msra.mxu0 %v1998
  %2596 = vmatprep.subr.mxu0 0.0
  %2597 = vmatpush1.msra.mxu0 %v1999
  %2598 = vmatprep.subr.mxu0 0.0
  %2599 = vmatpush1.msra.mxu0 %v2000
  %2600 = vmatprep.subr.mxu0 0.0
  %2601 = vmatpush1.msra.mxu0 %v2001
  %2602 = vmatprep.subr.mxu0 0.0
  %2603 = vmatpush1.msra.mxu0 %v2002
  %2604 = vmatprep.subr.mxu0 0.0
  %2605 = vmatpush1.msra.mxu0 %v2003
  %2606 = vmatprep.subr.mxu0 0.0
  %2607 = vmatpush1.msra.mxu0 %v2004
  %2608 = vmatprep.subr.mxu0 0.0
  %2609 = vmatpush1.msra.mxu0 %v2005
  %2610 = vmatprep.subr.mxu0 0.0
  %2611 = vmatpush1.msra.mxu0 %v2006
  %2612 = vmatprep.subr.mxu0 0.0
  %2613 = vmatpush1.msra.mxu0 %v2007
  %2614 = vmatprep.subr.mxu0 0.0
  %2615 = vmatpush1.msra.mxu0 %v2008
  %2616 = vmatprep.subr.mxu0 0.0
  %2617 = vmatpush1.msra.mxu0 %v2009
  %2618 = vmatprep.subr.mxu0 0.0
  %2619 = vmatpush1.msra.mxu0 %v2010
  %2620 = vmatprep.mubr.f32.mxu0 %v2014
  %2621 = vmatmul.mubr.f32.gmra.mrb[0].mxu0 %v2013
  %v2622 = vpop.f32.mrb[0].mxu0
  %v2623 = vadd.f32 %v2398, %v2622
  %v2624 = vpop.f32.mrb[0].mxu0
  %2625 = vmatprep.mubr.f32.mxu0 %v2018
  %2626 = vmatmul.mubr.f32.gmra.mrb[0].mxu0 %v2017
  %v2627 = vpop.f32.mrb[0].mxu0
  %v2628 = vadd.f32 %v2403, %v2627
  %v2629 = vpop.f32.mrb[0].mxu0
  %2630 = vmatprep.mubr.f32.mxu0 %v2022
  %2631 = vmatmul.mubr.f32.gmra.mrb[0].mxu0 %v2021
  %v2632 = vpop.f32.mrb[0].mxu0
  %v2633 = vadd.f32 %v2408, %v2632
  %v2634 = vpop.f32.mrb[0].mxu0
  %2635 = vmatprep.mubr.f32.mxu0 %v2026
  %2636 = vmatmul.mubr.f32.gmra.mrb[0].mxu0 %v2025
  %v2637 = vpop.f32.mrb[0].mxu0
  %v2638 = vadd.f32 %v2413, %v2637
  %v2639 = vpop.f32.mrb[0].mxu0
  %2640 = vmatprep.mubr.f32.mxu0 %v2030
  %2641 = vmatmul.mubr.f32.gmra.mrb[0].mxu0 %v2029
  %v2642 = vpop.f32.mrb[0].mxu0
  %v2643 = vadd.f32 %v2418, %v2642
  %v2644 = vpop.f32.mrb[0].mxu0
  %2645 = vmatprep.mubr.f32.mxu0 %v2034
  %2646 = vmatmul.mubr.f32.gmra.mrb[0].mxu0 %v2033
  %v2647 = vpop.f32.mrb[0].mxu0
  %v2648 = vadd.f32 %v2423, %v2647
  %v2649 = vpop.f32.mrb[0].mxu0
  %2650 = vmatprep.mubr.f32.mxu0 %v2038
  %2651 = vmatmul.mubr.f32.gmra.mrb[0].mxu0 %v2037
  %v2652 = vpop.f32.mrb[0].mxu0
  %v2653 = vadd.f32 %v2428, %v2652
  %v2654 = vpop.f32.mrb[0].mxu0
  %2655 = vmatprep.mubr.f32.mxu0 %v2042
  %2656 = vmatmul.mubr.f32.gmra.mrb[0].mxu0 %v2041
  %v2657 = vpop.f32.mrb[0].mxu0
  %v2658 = vadd.f32 %v2433, %v2657
  %v2659 = vpop.f32.mrb[0].mxu0
  %2660 = vmatprep.mubr.f32.mxu0 %v2046
  %2661 = vmatmul.mubr.f32.gmra.mrb[0].mxu0 %v2045
  %v2662 = vpop.f32.mrb[0].mxu0
  %v2663 = vadd.f32 %v2438, %v2662
  %v2664 = vpop.f32.mrb[0].mxu0
  %2665 = vmatprep.mubr.f32.mxu0 %v2050
  %2666 = vmatmul.mubr.f32.gmra.mrb[0].mxu0 %v2049
  %v2667 = vpop.f32.mrb[0].mxu0
  %v2668 = vadd.f32 %v2443, %v2667
  %v2669 = vpop.f32.mrb[0].mxu0
  %2670 = vmatprep.mubr.f32.mxu0 %v2054
  %2671 = vmatmul.mubr.f32.gmra.mrb[0].mxu0 %v2053
  %v2672 = vpop.f32.mrb[0].mxu0
  %v2673 = vadd.f32 %v2448, %v2672
  %v2674 = vpop.f32.mrb[0].mxu0
  %2675 = vmatprep.mubr.f32.mxu0 %v2058
  %2676 = vmatmul.mubr.f32.gmra.mrb[0].mxu0 %v2057
  %v2677 = vpop.f32.mrb[0].mxu0
  %v2678 = vadd.f32 %v2453, %v2677
  %v2679 = vpop.f32.mrb[0].mxu0
  %2680 = vmatprep.mubr.f32.mxu0 %v2062
  %2681 = vmatmul.mubr.f32.gmra.mrb[0].mxu0 %v2061
  %v2682 = vpop.f32.mrb[0].mxu0
  %v2683 = vadd.f32 %v2458, %v2682
  %v2684 = vpop.f32.mrb[0].mxu0
  %2685 = vmatprep.mubr.f32.mxu0 %v2066
  %2686 = vmatmul.mubr.f32.gmra.mrb[0].mxu0 %v2065
  %v2687 = vpop.f32.mrb[0].mxu0
  %v2688 = vadd.f32 %v2463, %v2687
  %v2689 = vpop.f32.mrb[0].mxu0
  %2690 = vmatprep.mubr.f32.mxu0 %v2070
  %2691 = vmatmul.mubr.f32.gmra.mrb[0].mxu0 %v2069
  %v2692 = vpop.f32.mrb[0].mxu0
  %v2693 = vadd.f32 %v2468, %v2692
  %v2694 = vpop.f32.mrb[0].mxu0
  %2695 = vmatprep.mubr.f32.mxu0 %v2074
  %2696 = vmatmul.mubr.f32.gmra.mrb[0].mxu0 %v2073
  %v2697 = vpop.f32.mrb[0].mxu0
  %v2698 = vadd.f32 %v2473, %v2697
  %v2699 = vpop.f32.mrb[0].mxu0
  %2700 = vmatprep.mubr.f32.mxu0 %v2078
  %2701 = vmatmul.mubr.f32.gmra.mrb[0].mxu0 %v2077
  %v2702 = vpop.f32.mrb[0].mxu0
  %v2703 = vadd.f32 %v2478, %v2702
  %v2704 = vpop.f32.mrb[0].mxu0
  %2705 = vmatprep.mubr.f32.mxu0 %v2082
  %2706 = vmatmul.mubr.f32.gmra.mrb[0].mxu0 %v2081
  %v2707 = vpop.f32.mrb[0].mxu0
  %v2708 = vadd.f32 %v2483, %v2707
  %v2709 = vpop.f32.mrb[0].mxu0
  %2710 = vmatprep.mubr.f32.mxu0 %v2086
  %2711 = vmatmul.mubr.f32.gmra.mrb[0].mxu0 %v2085
  %v2712 = vpop.f32.mrb[0].mxu0
  %v2713 = vadd.f32 %v2488, %v2712
  %v2714 = vpop.f32.mrb[0].mxu0
  %2715 = vmatprep.mubr.f32.mxu0 %v2090
  %2716 = vmatmul.mubr.f32.gmra.mrb[0].mxu0 %v2089
  %v2717 = vpop.f32.mrb[0].mxu0
  %v2718 = vadd.f32 %v2493, %v2717
  %v2719 = vpop.f32.mrb[0].mxu0
  %2720 = vmatprep.mubr.f32.mxu0 %v2094
  %2721 = vmatmul.mubr.f32.gmra.mrb[0].mxu0 %v2093
  %v2722 = vpop.f32.mrb[0].mxu0
  %v2723 = vadd.f32 %v2498, %v2722
  %v2724 = vpop.f32.mrb[0].mxu0
  %2725 = vmatprep.mubr.f32.mxu0 %v2098
  %2726 = vmatmul.mubr.f32.gmra.mrb[0].mxu0 %v2097
  %v2727 = vpop.f32.mrb[0].mxu0
  %v2728 = vadd.f32 %v2503, %v2727
  %v2729 = vpop.f32.mrb[0].mxu0
  %2730 = vmatprep.mubr.f32.mxu0 %v2102
  %2731 = vmatmul.mubr.f32.gmra.mrb[0].mxu0 %v2101
  %v2732 = vpop.f32.mrb[0].mxu0
  %v2733 = vadd.f32 %v2508, %v2732
  %v2734 = vpop.f32.mrb[0].mxu0
  %2735 = vmatprep.mubr.f32.mxu0 %v2106
  %2736 = vmatmul.mubr.f32.gmra.mrb[0].mxu0 %v2105
  %v2737 = vpop.f32.mrb[0].mxu0
  %v2738 = vadd.f32 %v2513, %v2737
  %v2739 = vpop.f32.mrb[0].mxu0
  %2740 = vmatprep.mubr.f32.mxu0 %v2110
  %2741 = vmatmul.mubr.f32.gmra.mrb[0].mxu0 %v2109
  %v2742 = vpop.f32.mrb[0].mxu0
  %v2743 = vadd.f32 %v2518, %v2742
  %v2744 = vpop.f32.mrb[0].mxu0
  %2745 = vmatprep.mubr.f32.mxu0 %v2114
  %2746 = vmatmul.mubr.f32.gmra.mrb[0].mxu0 %v2113
  %v2747 = vpop.f32.mrb[0].mxu0
  %v2748 = vadd.f32 %v2523, %v2747
  %v2749 = vpop.f32.mrb[0].mxu0
  %2750 = vmatprep.mubr.f32.mxu0 %v2118
  %2751 = vmatmul.mubr.f32.gmra.mrb[0].mxu0 %v2117
  %v2752 = vpop.f32.mrb[0].mxu0
  %v2753 = vadd.f32 %v2528, %v2752
  %v2754 = vpop.f32.mrb[0].mxu0
  %2755 = vmatprep.mubr.f32.mxu0 %v2122
  %2756 = vmatmul.mubr.f32.gmra.mrb[0].mxu0 %v2121
  %v2757 = vpop.f32.mrb[0].mxu0
  %v2758 = vadd.f32 %v2533, %v2757
  %v2759 = vpop.f32.mrb[0].mxu0
  %2760 = vmatprep.mubr.f32.mxu0 %v2126
  %2761 = vmatmul.mubr.f32.gmra.mrb[0].mxu0 %v2125
  %v2762 = vpop.f32.mrb[0].mxu0
  %v2763 = vadd.f32 %v2538, %v2762
  %v2764 = vpop.f32.mrb[0].mxu0
  %2765 = vmatprep.mubr.f32.mxu0 %v2130
  %2766 = vmatmul.mubr.f32.gmra.mrb[0].mxu0 %v2129
  %v2767 = vpop.f32.mrb[0].mxu0
  %v2768 = vadd.f32 %v2543, %v2767
  %v2769 = vpop.f32.mrb[0].mxu0
  %2770 = vmatprep.mubr.f32.mxu0 %v2134
  %2771 = vmatmul.mubr.f32.gmra.mrb[0].mxu0 %v2133
  %v2772 = vpop.f32.mrb[0].mxu0
  %v2773 = vadd.f32 %v2548, %v2772
  %v2774 = vpop.f32.mrb[0].mxu0
  %2775 = vmatprep.mubr.f32.mxu0 %v2138
  %2776 = vmatmul.mubr.f32.gmra.mrb[0].mxu0 %v2137
  %v2777 = vpop.f32.mrb[0].mxu0
  %v2778 = vadd.f32 %v2553, %v2777
  %v2779 = vpop.f32.mrb[0].mxu0
  %2780 = vdwg.mxu0
  %v2781 = vmax.f32 %v2623, 0.0
  %v2782 = vmax.f32 %v2628, 0.0
  %v2783 = vmax.f32 %v2633, 0.0
  %v2784 = vmax.f32 %v2638, 0.0
  %v2785 = vmax.f32 %v2643, 0.0
  %v2786 = vmax.f32 %v2648, 0.0
  %v2787 = vmax.f32 %v2653, 0.0
  %v2788 = vmax.f32 %v2658, 0.0
  %v2789 = vmax.f32 %v2663, 0.0
  %v2790 = vmax.f32 %v2668, 0.0
  %v2791 = vmax.f32 %v2673, 0.0
  %v2792 = vmax.f32 %v2678, 0.0
  %v2793 = vmax.f32 %v2683, 0.0
  %v2794 = vmax.f32 %v2688, 0.0
  %v2795 = vmax.f32 %v2693, 0.0
  %v2796 = vmax.f32 %v2698, 0.0
  %v2797 = vmax.f32 %v2703, 0.0
  %v2798 = vmax.f32 %v2708, 0.0
  %v2799 = vmax.f32 %v2713, 0.0
  %v2800 = vmax.f32 %v2718, 0.0
  %v2801 = vmax.f32 %v2723, 0.0
  %v2802 = vmax.f32 %v2728, 0.0
  %v2803 = vmax.f32 %v2733, 0.0
  %v2804 = vmax.f32 %v2738, 0.0
  %v2805 = vmax.f32 %v2743, 0.0
  %v2806 = vmax.f32 %v2748, 0.0
  %v2807 = vmax.f32 %v2753, 0.0
  %v2808 = vmax.f32 %v2758, 0.0
  %v2809 = vmax.f32 %v2763, 0.0
  %v2810 = vmax.f32 %v2768, 0.0
  %v2811 = vmax.f32 %v2773, 0.0
  %v2812 = vmax.f32 %v2778, 0.0
  %2813 = vst.msk [vmem:[%s11] sm:$0xff] %vm1722, %v2781
  %2814 = vst.msk [vmem:[%s11 + $0x8] sm:$0xff] %vm1722, %v2782
  %2815 = vst.msk [vmem:[%s11 + $0x10] sm:$0xff] %vm1722, %v2783
  %2816 = vst.msk [vmem:[%s11 + $0x18] sm:$0xff] %vm1722, %v2784
  %2817 = vst.msk [vmem:[%s11 + $0x20] sm:$0xff] %vm1722, %v2785
  %2818 = vst.msk [vmem:[%s11 + $0x28] sm:$0xff] %vm1722, %v2786
  %2819 = vst.msk [vmem:[%s11 + $0x30] sm:$0xff] %vm1722, %v2787
  %2820 = vst.msk [vmem:[%s11 + $0x38] sm:$0xff] %vm1722, %v2788
  %2821 = vst.msk [vmem:[%s11 + $0x40] sm:$0xff] %vm1722, %v2789
  %2822 = vst.msk [vmem:[%s11 + $0x48] sm:$0xff] %vm1722, %v2790
  %2823 = vst.msk [vmem:[%s11 + $0x50] sm:$0xff] %vm1722, %v2791
  %2824 = vst.msk [vmem:[%s11 + $0x58] sm:$0xff] %vm1722, %v2792
  %2825 = vst.msk [vmem:[%s11 + $0x60] sm:$0xff] %vm1722, %v2793
  %2826 = vst.msk [vmem:[%s11 + $0x68] sm:$0xff] %vm1722, %v2794
  %2827 = vst.msk [vmem:[%s11 + $0x70] sm:$0xff] %vm1722, %v2795
  %2828 = vst.msk [vmem:[%s11 + $0x78] sm:$0xff] %vm1722, %v2796
  %2829 = vst.msk [vmem:[%s11 + $0x80] sm:$0xff] %vm1722, %v2797
  %2830 = vst.msk [vmem:[%s11 + $0x88] sm:$0xff] %vm1722, %v2798
  %2831 = vst.msk [vmem:[%s11 + $0x90] sm:$0xff] %vm1722, %v2799
  %2832 = vst.msk [vmem:[%s11 + $0x98] sm:$0xff] %vm1722, %v2800
  %2833 = vst.msk [vmem:[%s11 + $0xa0] sm:$0xff] %vm1722, %v2801
  %2834 = vst.msk [vmem:[%s11 + $0xa8] sm:$0xff] %vm1722, %v2802
  %2835 = vst.msk [vmem:[%s11 + $0xb0] sm:$0xff] %vm1722, %v2803
  %2836 = vst.msk [vmem:[%s11 + $0xb8] sm:$0xff] %vm1722, %v2804
  %2837 = vst.msk [vmem:[%s11 + $0xc0] sm:$0xff] %vm1722, %v2805
  %2838 = vst.msk [vmem:[%s11 + $0xc8] sm:$0xff] %vm1722, %v2806
  %2839 = vst.msk [vmem:[%s11 + $0xd0] sm:$0xff] %vm1722, %v2807
  %2840 = vst.msk [vmem:[%s11 + $0xd8] sm:$0xff] %vm1722, %v2808
  %2841 = vst.msk [vmem:[%s11 + $0xe0] sm:$0xff] %vm1722, %v2809
  %2842 = vst.msk [vmem:[%s11 + $0xe8] sm:$0xff] %vm1722, %v2810
  %2843 = vst.msk [vmem:[%s11 + $0xf0] sm:$0xff] %vm1722, %v2811
  %2844 = vst.msk [vmem:[%s11 + $0xf8] sm:$0xff] %vm1722, %v2812
  // Predicated region
  $region46: #{encoder_forward.1} parent=0 // pred_check
    _
  $region47: #{encoder_forward.1} parent=0 // pred_check_branch
    %2846 = sbr.rel (0) target = $region49
  $region48: #{encoder_forward.1} parent=0 // pred_region
    _
  $region49: #{encoder_forward.1} parent=0 // pred_fallthru
    _
  // Predicated region
  $region50: #{encoder_forward.1} parent=0 // pred_check
    _
  $region51: #{encoder_forward.1} parent=0 // pred_check_branch
    %2848 = sbr.rel (0) target = $region53
  $region52: #{encoder_forward.1} parent=0 // pred_region
    _
  $region53: #{encoder_forward.1} parent=0 // pred_fallthru
    _

</llo_original>
